<compile_context>
chip_gen: v5e
topology: v5e:2x2
jax: 0.10.0
libtpu: 0.0.40
codegen_flags: <defaults>
</compile_context>

<pallas_src>
import functools

import jax
import jax.numpy as jnp
from jax.experimental import pallas as pl
from jax.experimental.pallas import tpu as pltpu


# ---------------------------------------------------------------------------
# Pallas kernel: fused (bf16 x bf16 -> f32) GEMM + bias + LeakyReLU
# ---------------------------------------------------------------------------
def _gemm_bias_act_kernel(a_ref, b_ref, bias_ref, o_ref, acc_ref, *,
                          apply_act, negative_slope):
    k = pl.program_id(2)

    @pl.when(k == 0)
    def _():
        acc_ref[...] = jnp.zeros_like(acc_ref)

    acc_ref[...] += jnp.dot(a_ref[...], b_ref[...],
                            preferred_element_type=jnp.float32)

    @pl.when(k == pl.num_programs(2) - 1)
    def _():
        acc = acc_ref[...] + bias_ref[...]
        if apply_act:
            acc = jnp.where(acc >= 0.0, acc, negative_slope * acc)
        o_ref[...] = acc.astype(o_ref.dtype)


def _round_up(x, m):
    return ((x + m - 1) // m) * m


def _pick_tile_m(m):
    """Returns (tm, padded_M). tm is a multiple of 8, <= 512, dividing padded_M."""
    mp = _round_up(m, 8)
    if mp <= 512:
        return mp, mp
    for tm in (512, 256, 128):
        if mp % tm == 0:
            return tm, mp
    return 512, _round_up(m, 512)


def _pick_tile(dim, cap):
    """Tile for K/N: either the full dim, or a 128-multiple divisor <= cap."""
    if dim <= cap:
        return dim
    for t in (cap, cap // 2, 512, 256, 128):
        if t >= 128 and t <= cap and dim % t == 0:
            return t
    return dim


def gemm_bias_act(a, b, bias, *, apply_act, negative_slope=0.01,
                  out_dtype=jnp.bfloat16):
    """a: (M, K), b: (K, N), bias: (N,) -> (M, N) in out_dtype.

    A/B are cast to bf16 for the MXU; accumulation is f32 in VMEM scratch.
    """
    m, k = a.shape
    k2, n = b.shape
    assert k == k2

    tm, mp = _pick_tile_m(m)
    tk = _pick_tile(k, 1024)
    tn = _pick_tile(n, 512)

    a = a.astype(jnp.bfloat16)
    b = b.astype(jnp.bfloat16)
    if mp != m:
        a = jnp.pad(a, ((0, mp - m), (0, 0)))
    bias2d = bias.reshape(1, n).astype(jnp.float32)

    grid = (mp // tm, n // tn, k // tk)

    kernel = functools.partial(
        _gemm_bias_act_kernel, apply_act=apply_act, negative_slope=negative_slope
    )

    out_itemsize = jnp.dtype(out_dtype).itemsize
    cost = pl.CostEstimate(
        flops=int(2 * mp * k * n),
        transcendentals=0,
        bytes_accessed=int(mp * k * 2 + k * n * 2 + n * 4 + mp * n * out_itemsize),
    )

    out = pl.pallas_call(
        kernel,
        out_shape=jax.ShapeDtypeStruct((mp, n), out_dtype),
        grid_spec=pltpu.PrefetchScalarGridSpec(
            num_scalar_prefetch=0,
            grid=grid,
            in_specs=[
                pl.BlockSpec((tm, tk), lambda i, j, kk: (i, kk)),
                pl.BlockSpec((tk, tn), lambda i, j, kk: (kk, j)),
                pl.BlockSpec((1, tn), lambda i, j, kk: (0, j)),
            ],
            out_specs=pl.BlockSpec((tm, tn), lambda i, j, kk: (i, j)),
            scratch_shapes=[pltpu.VMEM((tm, tn), jnp.float32)],
        ),
        compiler_params=pltpu.CompilerParams(
            dimension_semantics=("parallel", "parallel", "arbitrary"),
            vmem_limit_bytes=32 * 1024 * 1024,
        ),
        cost_estimate=cost,
    )(a, b, bias2d)

    if mp != m:
        out = out[:m]
    return out


# ---------------------------------------------------------------------------
# Glue: NHWC im2col, spectral norm, conv layer
# ---------------------------------------------------------------------------
def im2col_nhwc(x, kh, kw, stride, pad):
    """x: (N, H, W, C) -> patches (N*Ho*Wo, kh*kw*C), column order (ki, kj, c)."""
    n, h, w, c = x.shape
    xp = jnp.pad(x, ((0, 0), (pad, pad), (pad, pad), (0, 0)))
    ho = (h + 2 * pad - kh) // stride + 1
    wo = (w + 2 * pad - kw) // stride + 1
    cols = []
    for i in range(kh):
        for j in range(kw):
            cols.append(xp[:, i:i + stride * ho:stride, j:j + stride * wo:stride, :])
    patches = jnp.concatenate(cols, axis=-1)               # (N, Ho, Wo, kh*kw*C)
    return patches.reshape(n * ho * wo, kh * kw * c), ho, wo


def spectral_normalize(w, u):
    """One power-iteration spectral norm (deterministic u), applied in f32."""
    cout = w.shape[0]
    w_mat = w.reshape(cout, -1)
    eps = 1e-12
    v = w_mat.T @ u
    v = v / (jnp.linalg.norm(v) + eps)
    u_new = w_mat @ v
    u_new = u_new / (jnp.linalg.norm(u_new) + eps)
    sigma = u_new @ (w_mat @ v)
    return w / sigma


def conv2d_layer(x_nhwc, w, b, u, *, stride, pad, apply_act,
                 out_dtype=jnp.bfloat16, use_sn=True):
    """x_nhwc: (N, H, W, Cin); w: (Cout, Cin, kh, kw) OIHW; b: (Cout,) or None."""
    if use_sn:
        w = spectral_normalize(w, u)
    cout, cin, kh, kw = w.shape
    n = x_nhwc.shape[0]
    patches, ho, wo = im2col_nhwc(x_nhwc, kh, kw, stride, pad)     # (M, kh*kw*Cin)
    # Match patch column order (ki, kj, c): OIHW -> (kh, kw, Cin, Cout) -> 2D
    w2d = jnp.transpose(w, (2, 3, 1, 0)).reshape(kh * kw * cin, cout)
    bias = b if b is not None else jnp.zeros((cout,), jnp.float32)
    out = gemm_bias_act(patches, w2d, bias, apply_act=apply_act,
                        out_dtype=out_dtype)                       # (M, Cout)
    return out.reshape(n, ho, wo, cout)                            # stays NHWC


# ---------------------------------------------------------------------------
# Discriminator (PatchGAN): parameter construction + forward
# ---------------------------------------------------------------------------
def init_discriminator_params(key, input_channel=3, conv_dim=64, num_layers=3):
    params = []
    keys = jax.random.split(key, 2 * (num_layers + 2))
    ki = 0

    def make_conv(cin, cout, bias=True):
        nonlocal ki
        w = 0.05 * jax.random.normal(keys[ki], (cout, cin, 4, 4), jnp.float32)
        u = jax.random.normal(keys[ki + 1], (cout,), jnp.float32)
        u = u / (jnp.linalg.norm(u) + 1e-12)
        b = 0.01 * jnp.arange(cout, dtype=jnp.float32) if bias else None
        ki += 2
        return {"w": w, "b": b, "u": u}

    curr = conv_dim
    params.append(make_conv(input_channel, conv_dim))             # stride 2
    for _ in range(1, num_layers):
        params.append(make_conv(curr, curr * 2))                  # stride 2
        curr *= 2
    params.append(make_conv(curr, curr * 2))                      # stride 1
    curr *= 2
    params.append(make_conv(curr, 1, bias=False))                 # conv1, stride 1, no bias
    return params


def discriminator_forward(params, x_nchw, num_layers=3):
    # NCHW -> NHWC once; compute in bf16 (f32 accumulation inside the kernel).
    h = jnp.transpose(x_nchw, (0, 2, 3, 1)).astype(jnp.bfloat16)
    # main: num_layers stride-2 convs + one stride-1 conv, all LeakyReLU(0.01)
    for i in range(num_layers):
        p = params[i]
        h = conv2d_layer(h, p["w"], p["b"], p["u"], stride=2, pad=1, apply_act=True)
    p = params[num_layers]
    h = conv2d_layer(h, p["w"], p["b"], p["u"], stride=1, pad=1, apply_act=True)
    # conv1: no bias, no activation, f32 output
    p = params[num_layers + 1]
    out = conv2d_layer(h, p["w"], None, p["u"], stride=1, pad=1,
                       apply_act=False, out_dtype=jnp.float32)
    return jnp.transpose(out, (0, 3, 1, 2))                       # back to NCHW


if __name__ == "__main__":
    key = jax.random.PRNGKey(0)
    k_x, k_p = jax.random.split(key)

    # Small shapes: batch=2, input_channel=3, conv_dim=8, spatial=32
    # 32 -> 16 -> 8 -> 4 -> (s1) 3 -> conv1 -> 2   => output (2, 1, 2, 2)
    batch, in_ch, conv_dim, spatial = 2, 3, 8, 32
    x = jax.random.normal(k_x, (batch, in_ch, spatial, spatial), jnp.float32)

    params = init_discriminator_params(k_p, input_channel=in_ch,
                                       conv_dim=conv_dim, num_layers=3)

    fwd = jax.jit(functools.partial(discriminator_forward, num_layers=3))
    out = fwd(params, x)
    out = jax.block_until_ready(out)

    assert out.shape == (batch, 1, 2, 2), out.shape
    assert out.dtype == jnp.float32
    assert jnp.all(jnp.isfinite(out))
    print("KERNEL_OK")
</pallas_src>

<mosaic_0001>
module attributes {stable_mosaic.version = 11 : i64} {
  func.func @_gemm_bias_act_kernel(%arg0: i32, %arg1: i32, %arg2: i32, %arg3: memref<512x48xbf16, #tpu.memory_space<vmem>>, %arg4: memref<48x8xbf16, #tpu.memory_space<vmem>>, %arg5: memref<1x8xf32, #tpu.memory_space<vmem>>, %arg6: memref<512x8xbf16, #tpu.memory_space<vmem>>, %arg7: memref<512x8xf32, #tpu.memory_space<vmem>>) attributes {dimension_semantics = [#tpu.dimension_semantics<parallel>, #tpu.dimension_semantics<parallel>, #tpu.dimension_semantics<arbitrary>], iteration_bounds = array<i64: 1, 1, 1>, scalar_prefetch = 0 : i64, scratch_operands = 1 : i64, tpu.core_type = #tpu.core_type<tc>, window_params = [{transform_indices = @transform_0, window_bounds = array<i64: 512, 48>}, {transform_indices = @transform_1, window_bounds = array<i64: 48, 8>}, {transform_indices = @transform_2, window_bounds = array<i64: 1, 8>}, {transform_indices = @transform_3, window_bounds = array<i64: 512, 8>}]} {
    %c0_i32 = arith.constant 0 : i32
    %0 = arith.cmpi eq, %arg2, %c0_i32 : i32
    %1 = arith.extui %0 : i1 to i32
    %c0_i32_0 = arith.constant 0 : i32
    %2 = arith.cmpi ne, %1, %c0_i32_0 : i32
    scf.if %2 {
      %cst_10 = arith.constant 0.000000e+00 : f32
      %12 = vector.broadcast %cst_10 : f32 to vector<512x8xf32>
      %c0_11 = arith.constant 0 : index
      %c0_12 = arith.constant 0 : index
      %13 = vector.load %arg7[%c0_11, %c0_12] : memref<512x8xf32, #tpu.memory_space<vmem>>, vector<512x8xf32>
      tpu.vector_store %arg7[%c0_11, %c0_12], %12 {strides = array<i32>} : memref<512x8xf32, #tpu.memory_space<vmem>>, vector<512x8xf32>,
    } else {
    }
    %c0 = arith.constant 0 : index
    %c0_1 = arith.constant 0 : index
    %3 = vector.load %arg7[%c0, %c0_1] : memref<512x8xf32, #tpu.memory_space<vmem>>, vector<512x8xf32>
    %c0_2 = arith.constant 0 : index
    %c0_3 = arith.constant 0 : index
    %4 = vector.load %arg3[%c0_2, %c0_3] : memref<512x48xbf16, #tpu.memory_space<vmem>>, vector<512x48xbf16>
    %c0_4 = arith.constant 0 : index
    %c0_5 = arith.constant 0 : index
    %5 = vector.load %arg4[%c0_4, %c0_5] : memref<48x8xbf16, #tpu.memory_space<vmem>>, vector<48x8xbf16>
    %cst = arith.constant dense<0.000000e+00> : vector<512x8xf32>
    %6 = tpu.matmul %4, %5, %cst {dimension_numbers = #tpu.dot_dimension_numbers<[1], [0], [0], [1], [0, 0, 1, 1], [], []>} : vector<512x48xbf16>, vector<48x8xbf16>, vector<512x8xf32> -> vector<512x8xf32>
    %7 = arith.addf %3, %6 : vector<512x8xf32>
    %c0_6 = arith.constant 0 : index
    %c0_7 = arith.constant 0 : index
    %8 = vector.load %arg7[%c0_6, %c0_7] : memref<512x8xf32, #tpu.memory_space<vmem>>, vector<512x8xf32>
    tpu.vector_store %arg7[%c0_6, %c0_7], %7 {strides = array<i32>} : memref<512x8xf32, #tpu.memory_space<vmem>>, vector<512x8xf32>,
    %c0_i32_8 = arith.constant 0 : i32
    %9 = arith.cmpi eq, %arg2, %c0_i32_8 : i32
    %10 = arith.extui %9 : i1 to i32
    %c0_i32_9 = arith.constant 0 : i32
    %11 = arith.cmpi ne, %10, %c0_i32_9 : i32
    scf.if %11 {
      %c0_10 = arith.constant 0 : index
      %c0_11 = arith.constant 0 : index
      %12 = vector.load %arg7[%c0_10, %c0_11] : memref<512x8xf32, #tpu.memory_space<vmem>>, vector<512x8xf32>
      %c0_12 = arith.constant 0 : index
      %c0_13 = arith.constant 0 : index
      %13 = vector.load %arg5[%c0_12, %c0_13] : memref<1x8xf32, #tpu.memory_space<vmem>>, vector<1x8xf32>
      %14 = vector.broadcast %13 : vector<1x8xf32> to vector<512x8xf32>
      %15 = arith.addf %12, %14 : vector<512x8xf32>
      %cst_14 = arith.constant 0.000000e+00 : f32
      %16 = vector.broadcast %cst_14 : f32 to vector<512x8xf32>
      %17 = arith.cmpf oge, %15, %16 : vector<512x8xf32>
      %cst_15 = arith.constant 0.00999999977 : f32
      %18 = vector.broadcast %cst_15 : f32 to vector<512x8xf32>
      %19 = arith.mulf %18, %15 : vector<512x8xf32>
      %20 = arith.select %17, %15, %19 : vector<512x8xi1>, vector<512x8xf32>
      %21 = arith.truncf %20 : vector<512x8xf32> to vector<512x8xbf16>
      %c0_16 = arith.constant 0 : index
      %c0_17 = arith.constant 0 : index
      %22 = vector.load %arg6[%c0_16, %c0_17] : memref<512x8xbf16, #tpu.memory_space<vmem>>, vector<512x8xbf16>
      tpu.vector_store %arg6[%c0_16, %c0_17], %21 {strides = array<i32>} : memref<512x8xbf16, #tpu.memory_space<vmem>>, vector<512x8xbf16>,
    } else {
    }
    return
  }
  func.func @transform_0(%arg0: i32, %arg1: i32, %arg2: i32) -> (i32, i32) {
    %c0_i32 = arith.constant 0 : i32
    return %arg0, %arg2 : i32, i32
  }
  func.func @transform_1(%arg0: i32, %arg1: i32, %arg2: i32) -> (i32, i32) {
    %c0_i32 = arith.constant 0 : i32
    return %arg2, %arg1 : i32, i32
  }
  func.func @transform_2(%arg0: i32, %arg1: i32, %arg2: i32) -> (i32, i32) {
    %c0_i32 = arith.constant 0 : i32
    %c0_i32_0 = arith.constant 0 : i32
    return %c0_i32, %arg1 : i32, i32
  }
  func.func @transform_3(%arg0: i32, %arg1: i32, %arg2: i32) -> (i32, i32) {
    %c0_i32 = arith.constant 0 : i32
    return %arg0, %arg1 : i32, i32
  }
}

module attributes {stable_mosaic.version = 11 : i64} {
  func.func @_gemm_bias_act_kernel(%arg0: i32, %arg1: i32, %arg2: i32, %arg3: memref<128x128xbf16, #tpu.memory_space<vmem>>, %arg4: memref<128x16xbf16, #tpu.memory_space<vmem>>, %arg5: memref<1x16xf32, #tpu.memory_space<vmem>>, %arg6: memref<128x16xbf16, #tpu.memory_space<vmem>>, %arg7: memref<128x16xf32, #tpu.memory_space<vmem>>) attributes {dimension_semantics = [#tpu.dimension_semantics<parallel>, #tpu.dimension_semantics<parallel>, #tpu.dimension_semantics<arbitrary>], iteration_bounds = array<i64: 1, 1, 1>, scalar_prefetch = 0 : i64, scratch_operands = 1 : i64, tpu.core_type = #tpu.core_type<tc>, window_params = [{transform_indices = @transform_0, window_bounds = array<i64: 128, 128>}, {transform_indices = @transform_1, window_bounds = array<i64: 128, 16>}, {transform_indices = @transform_2, window_bounds = array<i64: 1, 16>}, {transform_indices = @transform_3, window_bounds = array<i64: 128, 16>}]} {
    %c0_i32 = arith.constant 0 : i32
    %0 = arith.cmpi eq, %arg2, %c0_i32 : i32
    %1 = arith.extui %0 : i1 to i32
    %c0_i32_0 = arith.constant 0 : i32
    %2 = arith.cmpi ne, %1, %c0_i32_0 : i32
    scf.if %2 {
      %cst_10 = arith.constant 0.000000e+00 : f32
      %12 = vector.broadcast %cst_10 : f32 to vector<128x16xf32>
      %c0_11 = arith.constant 0 : index
      %c0_12 = arith.constant 0 : index
      %13 = vector.load %arg7[%c0_11, %c0_12] : memref<128x16xf32, #tpu.memory_space<vmem>>, vector<128x16xf32>
      tpu.vector_store %arg7[%c0_11, %c0_12], %12 {strides = array<i32>} : memref<128x16xf32, #tpu.memory_space<vmem>>, vector<128x16xf32>,
    } else {
    }
    %c0 = arith.constant 0 : index
    %c0_1 = arith.constant 0 : index
    %3 = vector.load %arg7[%c0, %c0_1] : memref<128x16xf32, #tpu.memory_space<vmem>>, vector<128x16xf32>
    %c0_2 = arith.constant 0 : index
    %c0_3 = arith.constant 0 : index
    %4 = vector.load %arg3[%c0_2, %c0_3] : memref<128x128xbf16, #tpu.memory_space<vmem>>, vector<128x128xbf16>
    %c0_4 = arith.constant 0 : index
    %c0_5 = arith.constant 0 : index
    %5 = vector.load %arg4[%c0_4, %c0_5] : memref<128x16xbf16, #tpu.memory_space<vmem>>, vector<128x16xbf16>
    %cst = arith.constant dense<0.000000e+00> : vector<128x16xf32>
    %6 = tpu.matmul %4, %5, %cst {dimension_numbers = #tpu.dot_dimension_numbers<[1], [0], [0], [1], [0, 0, 1, 1], [], []>} : vector<128x128xbf16>, vector<128x16xbf16>, vector<128x16xf32> -> vector<128x16xf32>
    %7 = arith.addf %3, %6 : vector<128x16xf32>
    %c0_6 = arith.constant 0 : index
    %c0_7 = arith.constant 0 : index
    %8 = vector.load %arg7[%c0_6, %c0_7] : memref<128x16xf32, #tpu.memory_space<vmem>>, vector<128x16xf32>
    tpu.vector_store %arg7[%c0_6, %c0_7], %7 {strides = array<i32>} : memref<128x16xf32, #tpu.memory_space<vmem>>, vector<128x16xf32>,
    %c0_i32_8 = arith.constant 0 : i32
    %9 = arith.cmpi eq, %arg2, %c0_i32_8 : i32
    %10 = arith.extui %9 : i1 to i32
    %c0_i32_9 = arith.constant 0 : i32
    %11 = arith.cmpi ne, %10, %c0_i32_9 : i32
    scf.if %11 {
      %c0_10 = arith.constant 0 : index
      %c0_11 = arith.constant 0 : index
      %12 = vector.load %arg7[%c0_10, %c0_11] : memref<128x16xf32, #tpu.memory_space<vmem>>, vector<128x16xf32>
      %c0_12 = arith.constant 0 : index
      %c0_13 = arith.constant 0 : index
      %13 = vector.load %arg5[%c0_12, %c0_13] : memref<1x16xf32, #tpu.memory_space<vmem>>, vector<1x16xf32>
      %14 = vector.broadcast %13 : vector<1x16xf32> to vector<128x16xf32>
      %15 = arith.addf %12, %14 : vector<128x16xf32>
      %cst_14 = arith.constant 0.000000e+00 : f32
      %16 = vector.broadcast %cst_14 : f32 to vector<128x16xf32>
      %17 = arith.cmpf oge, %15, %16 : vector<128x16xf32>
      %cst_15 = arith.constant 0.00999999977 : f32
      %18 = vector.broadcast %cst_15 : f32 to vector<128x16xf32>
      %19 = arith.mulf %18, %15 : vector<128x16xf32>
      %20 = arith.select %17, %15, %19 : vector<128x16xi1>, vector<128x16xf32>
      %21 = arith.truncf %20 : vector<128x16xf32> to vector<128x16xbf16>
      %c0_16 = arith.constant 0 : index
      %c0_17 = arith.constant 0 : index
      %22 = vector.load %arg6[%c0_16, %c0_17] : memref<128x16xbf16, #tpu.memory_space<vmem>>, vector<128x16xbf16>
      tpu.vector_store %arg6[%c0_16, %c0_17], %21 {strides = array<i32>} : memref<128x16xbf16, #tpu.memory_space<vmem>>, vector<128x16xbf16>,
    } else {
    }
    return
  }
  func.func @transform_0(%arg0: i32, %arg1: i32, %arg2: i32) -> (i32, i32) {
    %c0_i32 = arith.constant 0 : i32
    return %arg0, %arg2 : i32, i32
  }
  func.func @transform_1(%arg0: i32, %arg1: i32, %arg2: i32) -> (i32, i32) {
    %c0_i32 = arith.constant 0 : i32
    return %arg2, %arg1 : i32, i32
  }
  func.func @transform_2(%arg0: i32, %arg1: i32, %arg2: i32) -> (i32, i32) {
    %c0_i32 = arith.constant 0 : i32
    %c0_i32_0 = arith.constant 0 : i32
    return %c0_i32, %arg1 : i32, i32
  }
  func.func @transform_3(%arg0: i32, %arg1: i32, %arg2: i32) -> (i32, i32) {
    %c0_i32 = arith.constant 0 : i32
    return %arg0, %arg1 : i32, i32
  }
}

module attributes {stable_mosaic.version = 11 : i64} {
  func.func @_gemm_bias_act_kernel(%arg0: i32, %arg1: i32, %arg2: i32, %arg3: memref<32x256xbf16, #tpu.memory_space<vmem>>, %arg4: memref<256x32xbf16, #tpu.memory_space<vmem>>, %arg5: memref<1x32xf32, #tpu.memory_space<vmem>>, %arg6: memref<32x32xbf16, #tpu.memory_space<vmem>>, %arg7: memref<32x32xf32, #tpu.memory_space<vmem>>) attributes {dimension_semantics = [#tpu.dimension_semantics<parallel>, #tpu.dimension_semantics<parallel>, #tpu.dimension_semantics<arbitrary>], iteration_bounds = array<i64: 1, 1, 1>, scalar_prefetch = 0 : i64, scratch_operands = 1 : i64, tpu.core_type = #tpu.core_type<tc>, window_params = [{transform_indices = @transform_0, window_bounds = array<i64: 32, 256>}, {transform_indices = @transform_1, window_bounds = array<i64: 256, 32>}, {transform_indices = @transform_2, window_bounds = array<i64: 1, 32>}, {transform_indices = @transform_3, window_bounds = array<i64: 32, 32>}]} {
    %c0_i32 = arith.constant 0 : i32
    %0 = arith.cmpi eq, %arg2, %c0_i32 : i32
    %1 = arith.extui %0 : i1 to i32
    %c0_i32_0 = arith.constant 0 : i32
    %2 = arith.cmpi ne, %1, %c0_i32_0 : i32
    scf.if %2 {
      %cst_10 = arith.constant 0.000000e+00 : f32
      %12 = vector.broadcast %cst_10 : f32 to vector<32x32xf32>
      %c0_11 = arith.constant 0 : index
      %c0_12 = arith.constant 0 : index
      %13 = vector.load %arg7[%c0_11, %c0_12] : memref<32x32xf32, #tpu.memory_space<vmem>>, vector<32x32xf32>
      tpu.vector_store %arg7[%c0_11, %c0_12], %12 {strides = array<i32>} : memref<32x32xf32, #tpu.memory_space<vmem>>, vector<32x32xf32>,
    } else {
    }
    %c0 = arith.constant 0 : index
    %c0_1 = arith.constant 0 : index
    %3 = vector.load %arg7[%c0, %c0_1] : memref<32x32xf32, #tpu.memory_space<vmem>>, vector<32x32xf32>
    %c0_2 = arith.constant 0 : index
    %c0_3 = arith.constant 0 : index
    %4 = vector.load %arg3[%c0_2, %c0_3] : memref<32x256xbf16, #tpu.memory_space<vmem>>, vector<32x256xbf16>
    %c0_4 = arith.constant 0 : index
    %c0_5 = arith.constant 0 : index
    %5 = vector.load %arg4[%c0_4, %c0_5] : memref<256x32xbf16, #tpu.memory_space<vmem>>, vector<256x32xbf16>
    %cst = arith.constant dense<0.000000e+00> : vector<32x32xf32>
    %6 = tpu.matmul %4, %5, %cst {dimension_numbers = #tpu.dot_dimension_numbers<[1], [0], [0], [1], [0, 0, 1, 1], [], []>} : vector<32x256xbf16>, vector<256x32xbf16>, vector<32x32xf32> -> vector<32x32xf32>
    %7 = arith.addf %3, %6 : vector<32x32xf32>
    %c0_6 = arith.constant 0 : index
    %c0_7 = arith.constant 0 : index
    %8 = vector.load %arg7[%c0_6, %c0_7] : memref<32x32xf32, #tpu.memory_space<vmem>>, vector<32x32xf32>
    tpu.vector_store %arg7[%c0_6, %c0_7], %7 {strides = array<i32>} : memref<32x32xf32, #tpu.memory_space<vmem>>, vector<32x32xf32>,
    %c0_i32_8 = arith.constant 0 : i32
    %9 = arith.cmpi eq, %arg2, %c0_i32_8 : i32
    %10 = arith.extui %9 : i1 to i32
    %c0_i32_9 = arith.constant 0 : i32
    %11 = arith.cmpi ne, %10, %c0_i32_9 : i32
    scf.if %11 {
      %c0_10 = arith.constant 0 : index
      %c0_11 = arith.constant 0 : index
      %12 = vector.load %arg7[%c0_10, %c0_11] : memref<32x32xf32, #tpu.memory_space<vmem>>, vector<32x32xf32>
      %c0_12 = arith.constant 0 : index
      %c0_13 = arith.constant 0 : index
      %13 = vector.load %arg5[%c0_12, %c0_13] : memref<1x32xf32, #tpu.memory_space<vmem>>, vector<1x32xf32>
      %14 = vector.broadcast %13 : vector<1x32xf32> to vector<32x32xf32>
      %15 = arith.addf %12, %14 : vector<32x32xf32>
      %cst_14 = arith.constant 0.000000e+00 : f32
      %16 = vector.broadcast %cst_14 : f32 to vector<32x32xf32>
      %17 = arith.cmpf oge, %15, %16 : vector<32x32xf32>
      %cst_15 = arith.constant 0.00999999977 : f32
      %18 = vector.broadcast %cst_15 : f32 to vector<32x32xf32>
      %19 = arith.mulf %18, %15 : vector<32x32xf32>
      %20 = arith.select %17, %15, %19 : vector<32x32xi1>, vector<32x32xf32>
      %21 = arith.truncf %20 : vector<32x32xf32> to vector<32x32xbf16>
      %c0_16 = arith.constant 0 : index
      %c0_17 = arith.constant 0 : index
      %22 = vector.load %arg6[%c0_16, %c0_17] : memref<32x32xbf16, #tpu.memory_space<vmem>>, vector<32x32xbf16>
      tpu.vector_store %arg6[%c0_16, %c0_17], %21 {strides = array<i32>} : memref<32x32xbf16, #tpu.memory_space<vmem>>, vector<32x32xbf16>,
    } else {
    }
    return
  }
  func.func @transform_0(%arg0: i32, %arg1: i32, %arg2: i32) -> (i32, i32) {
    %c0_i32 = arith.constant 0 : i32
    return %arg0, %arg2 : i32, i32
  }
  func.func @transform_1(%arg0: i32, %arg1: i32, %arg2: i32) -> (i32, i32) {
    %c0_i32 = arith.constant 0 : i32
    return %arg2, %arg1 : i32, i32
  }
  func.func @transform_2(%arg0: i32, %arg1: i32, %arg2: i32) -> (i32, i32) {
    %c0_i32 = arith.constant 0 : i32
    %c0_i32_0 = arith.constant 0 : i32
    return %c0_i32, %arg1 : i32, i32
  }
  func.func @transform_3(%arg0: i32, %arg1: i32, %arg2: i32) -> (i32, i32) {
    %c0_i32 = arith.constant 0 : i32
    return %arg0, %arg1 : i32, i32
  }
}

module attributes {stable_mosaic.version = 11 : i64} {
  func.func @_gemm_bias_act_kernel(%arg0: i32, %arg1: i32, %arg2: i32, %arg3: memref<24x512xbf16, #tpu.memory_space<vmem>>, %arg4: memref<512x64xbf16, #tpu.memory_space<vmem>>, %arg5: memref<1x64xf32, #tpu.memory_space<vmem>>, %arg6: memref<24x64xbf16, #tpu.memory_space<vmem>>, %arg7: memref<24x64xf32, #tpu.memory_space<vmem>>) attributes {dimension_semantics = [#tpu.dimension_semantics<parallel>, #tpu.dimension_semantics<parallel>, #tpu.dimension_semantics<arbitrary>], iteration_bounds = array<i64: 1, 1, 1>, scalar_prefetch = 0 : i64, scratch_operands = 1 : i64, tpu.core_type = #tpu.core_type<tc>, window_params = [{transform_indices = @transform_0, window_bounds = array<i64: 24, 512>}, {transform_indices = @transform_1, window_bounds = array<i64: 512, 64>}, {transform_indices = @transform_2, window_bounds = array<i64: 1, 64>}, {transform_indices = @transform_3, window_bounds = array<i64: 24, 64>}]} {
    %c0_i32 = arith.constant 0 : i32
    %0 = arith.cmpi eq, %arg2, %c0_i32 : i32
    %1 = arith.extui %0 : i1 to i32
    %c0_i32_0 = arith.constant 0 : i32
    %2 = arith.cmpi ne, %1, %c0_i32_0 : i32
    scf.if %2 {
      %cst_10 = arith.constant 0.000000e+00 : f32
      %12 = vector.broadcast %cst_10 : f32 to vector<24x64xf32>
      %c0_11 = arith.constant 0 : index
      %c0_12 = arith.constant 0 : index
      %13 = vector.load %arg7[%c0_11, %c0_12] : memref<24x64xf32, #tpu.memory_space<vmem>>, vector<24x64xf32>
      tpu.vector_store %arg7[%c0_11, %c0_12], %12 {strides = array<i32>} : memref<24x64xf32, #tpu.memory_space<vmem>>, vector<24x64xf32>,
    } else {
    }
    %c0 = arith.constant 0 : index
    %c0_1 = arith.constant 0 : index
    %3 = vector.load %arg7[%c0, %c0_1] : memref<24x64xf32, #tpu.memory_space<vmem>>, vector<24x64xf32>
    %c0_2 = arith.constant 0 : index
    %c0_3 = arith.constant 0 : index
    %4 = vector.load %arg3[%c0_2, %c0_3] : memref<24x512xbf16, #tpu.memory_space<vmem>>, vector<24x512xbf16>
    %c0_4 = arith.constant 0 : index
    %c0_5 = arith.constant 0 : index
    %5 = vector.load %arg4[%c0_4, %c0_5] : memref<512x64xbf16, #tpu.memory_space<vmem>>, vector<512x64xbf16>
    %cst = arith.constant dense<0.000000e+00> : vector<24x64xf32>
    %6 = tpu.matmul %4, %5, %cst {dimension_numbers = #tpu.dot_dimension_numbers<[1], [0], [0], [1], [0, 0, 1, 1], [], []>} : vector<24x512xbf16>, vector<512x64xbf16>, vector<24x64xf32> -> vector<24x64xf32>
    %7 = arith.addf %3, %6 : vector<24x64xf32>
    %c0_6 = arith.constant 0 : index
    %c0_7 = arith.constant 0 : index
    %8 = vector.load %arg7[%c0_6, %c0_7] : memref<24x64xf32, #tpu.memory_space<vmem>>, vector<24x64xf32>
    tpu.vector_store %arg7[%c0_6, %c0_7], %7 {strides = array<i32>} : memref<24x64xf32, #tpu.memory_space<vmem>>, vector<24x64xf32>,
    %c0_i32_8 = arith.constant 0 : i32
    %9 = arith.cmpi eq, %arg2, %c0_i32_8 : i32
    %10 = arith.extui %9 : i1 to i32
    %c0_i32_9 = arith.constant 0 : i32
    %11 = arith.cmpi ne, %10, %c0_i32_9 : i32
    scf.if %11 {
      %c0_10 = arith.constant 0 : index
      %c0_11 = arith.constant 0 : index
      %12 = vector.load %arg7[%c0_10, %c0_11] : memref<24x64xf32, #tpu.memory_space<vmem>>, vector<24x64xf32>
      %c0_12 = arith.constant 0 : index
      %c0_13 = arith.constant 0 : index
      %13 = vector.load %arg5[%c0_12, %c0_13] : memref<1x64xf32, #tpu.memory_space<vmem>>, vector<1x64xf32>
      %14 = vector.broadcast %13 : vector<1x64xf32> to vector<24x64xf32>
      %15 = arith.addf %12, %14 : vector<24x64xf32>
      %cst_14 = arith.constant 0.000000e+00 : f32
      %16 = vector.broadcast %cst_14 : f32 to vector<24x64xf32>
      %17 = arith.cmpf oge, %15, %16 : vector<24x64xf32>
      %cst_15 = arith.constant 0.00999999977 : f32
      %18 = vector.broadcast %cst_15 : f32 to vector<24x64xf32>
      %19 = arith.mulf %18, %15 : vector<24x64xf32>
      %20 = arith.select %17, %15, %19 : vector<24x64xi1>, vector<24x64xf32>
      %21 = arith.truncf %20 : vector<24x64xf32> to vector<24x64xbf16>
      %c0_16 = arith.constant 0 : index
      %c0_17 = arith.constant 0 : index
      %22 = vector.load %arg6[%c0_16, %c0_17] : memref<24x64xbf16, #tpu.memory_space<vmem>>, vector<24x64xbf16>
      tpu.vector_store %arg6[%c0_16, %c0_17], %21 {strides = array<i32>} : memref<24x64xbf16, #tpu.memory_space<vmem>>, vector<24x64xbf16>,
    } else {
    }
    return
  }
  func.func @transform_0(%arg0: i32, %arg1: i32, %arg2: i32) -> (i32, i32) {
    %c0_i32 = arith.constant 0 : i32
    return %arg0, %arg2 : i32, i32
  }
  func.func @transform_1(%arg0: i32, %arg1: i32, %arg2: i32) -> (i32, i32) {
    %c0_i32 = arith.constant 0 : i32
    return %arg2, %arg1 : i32, i32
  }
  func.func @transform_2(%arg0: i32, %arg1: i32, %arg2: i32) -> (i32, i32) {
    %c0_i32 = arith.constant 0 : i32
    %c0_i32_0 = arith.constant 0 : i32
    return %c0_i32, %arg1 : i32, i32
  }
  func.func @transform_3(%arg0: i32, %arg1: i32, %arg2: i32) -> (i32, i32) {
    %c0_i32 = arith.constant 0 : i32
    return %arg0, %arg1 : i32, i32
  }
}

module attributes {stable_mosaic.version = 11 : i64} {
  func.func @_gemm_bias_act_kernel(%arg0: i32, %arg1: i32, %arg2: i32, %arg3: memref<8x1024xbf16, #tpu.memory_space<vmem>>, %arg4: memref<1024x1xbf16, #tpu.memory_space<vmem>>, %arg5: memref<1x1xf32, #tpu.memory_space<vmem>>, %arg6: memref<8x1xf32, #tpu.memory_space<vmem>>, %arg7: memref<8x1xf32, #tpu.memory_space<vmem>>) attributes {dimension_semantics = [#tpu.dimension_semantics<parallel>, #tpu.dimension_semantics<parallel>, #tpu.dimension_semantics<arbitrary>], iteration_bounds = array<i64: 1, 1, 1>, scalar_prefetch = 0 : i64, scratch_operands = 1 : i64, tpu.core_type = #tpu.core_type<tc>, window_params = [{transform_indices = @transform_0, window_bounds = array<i64: 8, 1024>}, {transform_indices = @transform_1, window_bounds = array<i64: 1024, 1>}, {transform_indices = @transform_2, window_bounds = array<i64: 1, 1>}, {transform_indices = @transform_3, window_bounds = array<i64: 8, 1>}]} {
    %c0_i32 = arith.constant 0 : i32
    %0 = arith.cmpi eq, %arg2, %c0_i32 : i32
    %1 = arith.extui %0 : i1 to i32
    %c0_i32_0 = arith.constant 0 : i32
    %2 = arith.cmpi ne, %1, %c0_i32_0 : i32
    scf.if %2 {
      %cst_10 = arith.constant 0.000000e+00 : f32
      %12 = vector.broadcast %cst_10 : f32 to vector<8x1xf32>
      %c0_11 = arith.constant 0 : index
      %c0_12 = arith.constant 0 : index
      %13 = vector.load %arg7[%c0_11, %c0_12] : memref<8x1xf32, #tpu.memory_space<vmem>>, vector<8x1xf32>
      tpu.vector_store %arg7[%c0_11, %c0_12], %12 {strides = array<i32>} : memref<8x1xf32, #tpu.memory_space<vmem>>, vector<8x1xf32>,
    } else {
    }
    %c0 = arith.constant 0 : index
    %c0_1 = arith.constant 0 : index
    %3 = vector.load %arg7[%c0, %c0_1] : memref<8x1xf32, #tpu.memory_space<vmem>>, vector<8x1xf32>
    %c0_2 = arith.constant 0 : index
    %c0_3 = arith.constant 0 : index
    %4 = vector.load %arg3[%c0_2, %c0_3] : memref<8x1024xbf16, #tpu.memory_space<vmem>>, vector<8x1024xbf16>
    %c0_4 = arith.constant 0 : index
    %c0_5 = arith.constant 0 : index
    %5 = vector.load %arg4[%c0_4, %c0_5] : memref<1024x1xbf16, #tpu.memory_space<vmem>>, vector<1024x1xbf16>
    %cst = arith.constant dense<0.000000e+00> : vector<8x1xf32>
    %6 = tpu.matmul %4, %5, %cst {dimension_numbers = #tpu.dot_dimension_numbers<[1], [0], [0], [1], [0, 0, 1, 1], [], []>} : vector<8x1024xbf16>, vector<1024x1xbf16>, vector<8x1xf32> -> vector<8x1xf32>
    %7 = arith.addf %3, %6 : vector<8x1xf32>
    %c0_6 = arith.constant 0 : index
    %c0_7 = arith.constant 0 : index
    %8 = vector.load %arg7[%c0_6, %c0_7] : memref<8x1xf32, #tpu.memory_space<vmem>>, vector<8x1xf32>
    tpu.vector_store %arg7[%c0_6, %c0_7], %7 {strides = array<i32>} : memref<8x1xf32, #tpu.memory_space<vmem>>, vector<8x1xf32>,
    %c0_i32_8 = arith.constant 0 : i32
    %9 = arith.cmpi eq, %arg2, %c0_i32_8 : i32
    %10 = arith.extui %9 : i1 to i32
    %c0_i32_9 = arith.constant 0 : i32
    %11 = arith.cmpi ne, %10, %c0_i32_9 : i32
    scf.if %11 {
      %c0_10 = arith.constant 0 : index
      %c0_11 = arith.constant 0 : index
      %12 = vector.load %arg7[%c0_10, %c0_11] : memref<8x1xf32, #tpu.memory_space<vmem>>, vector<8x1xf32>
      %c0_12 = arith.constant 0 : index
      %c0_13 = arith.constant 0 : index
      %13 = vector.load %arg5[%c0_12, %c0_13] : memref<1x1xf32, #tpu.memory_space<vmem>>, vector<1x1xf32>
      %14 = vector.broadcast %13 : vector<1x1xf32> to vector<8x1xf32>
      %15 = arith.addf %12, %14 : vector<8x1xf32>
      %c0_14 = arith.constant 0 : index
      %c0_15 = arith.constant 0 : index
      %16 = vector.load %arg6[%c0_14, %c0_15] : memref<8x1xf32, #tpu.memory_space<vmem>>, vector<8x1xf32>
      tpu.vector_store %arg6[%c0_14, %c0_15], %15 {strides = array<i32>} : memref<8x1xf32, #tpu.memory_space<vmem>>, vector<8x1xf32>,
    } else {
    }
    return
  }
  func.func @transform_0(%arg0: i32, %arg1: i32, %arg2: i32) -> (i32, i32) {
    %c0_i32 = arith.constant 0 : i32
    return %arg0, %arg2 : i32, i32
  }
  func.func @transform_1(%arg0: i32, %arg1: i32, %arg2: i32) -> (i32, i32) {
    %c0_i32 = arith.constant 0 : i32
    return %arg2, %arg1 : i32, i32
  }
  func.func @transform_2(%arg0: i32, %arg1: i32, %arg2: i32) -> (i32, i32) {
    %c0_i32 = arith.constant 0 : i32
    %c0_i32_0 = arith.constant 0 : i32
    return %c0_i32, %arg1 : i32, i32
  }
  func.func @transform_3(%arg0: i32, %arg1: i32, %arg2: i32) -> (i32, i32) {
    %c0_i32 = arith.constant 0 : i32
    return %arg0, %arg1 : i32, i32
  }
}

</mosaic_0001>

<llo_original>
// kernel: discriminator_forward.5
$region0: #{discriminator_forward.5}
  #allocation0 [shape = 'u32[]', space=smem, size = 0x4, offset = 0x4, fixed_abs, tag = 'smem constant byte address 0x4 - core index']
  #allocation1 [shape = 'u32[72,128]{1,0:T(1,128)}', space=vmem, size = 0x9000, scoped, tag = 'internal scratch']
  #allocation2 [shape = 'f32[512,8]{1,0:T(8,128)}', space=vmem, size = 0x40000, scoped, tag = 'scratch operand']
  %s0 = inlined_call_operand.vmem [shape: bf16[512,48], index: 0, kind: input, shape index: {}]
  %s1 = inlined_call_operand.vmem [shape: bf16[48,8], index: 1, kind: input, shape index: {}]
  %s2 = inlined_call_operand.vmem [shape: f32[1,8], index: 2, kind: input, shape index: {}]
  %s3 = inlined_call_operand.vmem [shape: bf16[512,8], index: 3, kind: output, shape index: {}]
  %s4 = sld [smem:[#allocation0]]
  $region30: #{discriminator_forward.5} parent=0
    _
  %s6 = ssub.s32 1, %s4
  %s7 = scalar_select 0, %s6, %s4
  // Predicated region
  $region2: #{discriminator_forward.5} parent=0 // pred_check
    _
  $region3: #{discriminator_forward.5} parent=0 // pred_check_branch
    %9 = sbr.rel (0) target = $region5
  $region4: #{discriminator_forward.5} parent=0 // pred_region
    _
  $region5: #{discriminator_forward.5} parent=0 // pred_fallthru
    _
  // Predicated region
  $region6: #{discriminator_forward.5} parent=0 // pred_check
    _
  $region7: #{discriminator_forward.5} parent=0 // pred_check_branch
    %11 = sbr.rel (0) target = $region9
  $region8: #{discriminator_forward.5} parent=0 // pred_region
    _
  $region9: #{discriminator_forward.5} parent=0 // pred_fallthru
    _
  // Predicated region
  $region10: #{discriminator_forward.5} parent=0 // pred_check
    _
  $region11: #{discriminator_forward.5} parent=0 // pred_check_branch
    %13 = sbr.rel (0) target = $region13
  $region12: #{discriminator_forward.5} parent=0 // pred_region
    _
  $region13: #{discriminator_forward.5} parent=0 // pred_fallthru
    _
  %p15 = scmp.eq.s32.totalorder 0, 0
  // Predicated region
  $region14: #{discriminator_forward.5} parent=0 // pred_check
    %p16 = pneg %p15
  $region15: #{discriminator_forward.5} parent=0 // pred_check_branch
    %18 = sbr.rel (%p16) target = $region17
  $region16: #{discriminator_forward.5} parent=0 // pred_region
    %vm19 = vcmask 64512
    %20 = vst.msk [vmem:[#allocation2] sm:$0xff] %vm19, 0.0
    %21 = vst.msk [vmem:[#allocation2 + $0x8] sm:$0xff] %vm19, 0.0
    %22 = vst.msk [vmem:[#allocation2 + $0x10] sm:$0xff] %vm19, 0.0
    %23 = vst.msk [vmem:[#allocation2 + $0x18] sm:$0xff] %vm19, 0.0
    %24 = vst.msk [vmem:[#allocation2 + $0x20] sm:$0xff] %vm19, 0.0
    %25 = vst.msk [vmem:[#allocation2 + $0x28] sm:$0xff] %vm19, 0.0
    %26 = vst.msk [vmem:[#allocation2 + $0x30] sm:$0xff] %vm19, 0.0
    %27 = vst.msk [vmem:[#allocation2 + $0x38] sm:$0xff] %vm19, 0.0
    %28 = vst.msk [vmem:[#allocation2 + $0x40] sm:$0xff] %vm19, 0.0
    %29 = vst.msk [vmem:[#allocation2 + $0x48] sm:$0xff] %vm19, 0.0
    %30 = vst.msk [vmem:[#allocation2 + $0x50] sm:$0xff] %vm19, 0.0
    %31 = vst.msk [vmem:[#allocation2 + $0x58] sm:$0xff] %vm19, 0.0
    %32 = vst.msk [vmem:[#allocation2 + $0x60] sm:$0xff] %vm19, 0.0
    %33 = vst.msk [vmem:[#allocation2 + $0x68] sm:$0xff] %vm19, 0.0
    %34 = vst.msk [vmem:[#allocation2 + $0x70] sm:$0xff] %vm19, 0.0
    %35 = vst.msk [vmem:[#allocation2 + $0x78] sm:$0xff] %vm19, 0.0
    %36 = vst.msk [vmem:[#allocation2 + $0x80] sm:$0xff] %vm19, 0.0
    %37 = vst.msk [vmem:[#allocation2 + $0x88] sm:$0xff] %vm19, 0.0
    %38 = vst.msk [vmem:[#allocation2 + $0x90] sm:$0xff] %vm19, 0.0
    %39 = vst.msk [vmem:[#allocation2 + $0x98] sm:$0xff] %vm19, 0.0
    %40 = vst.msk [vmem:[#allocation2 + $0xa0] sm:$0xff] %vm19, 0.0
    %41 = vst.msk [vmem:[#allocation2 + $0xa8] sm:$0xff] %vm19, 0.0
    %42 = vst.msk [vmem:[#allocation2 + $0xb0] sm:$0xff] %vm19, 0.0
    %43 = vst.msk [vmem:[#allocation2 + $0xb8] sm:$0xff] %vm19, 0.0
    %44 = vst.msk [vmem:[#allocation2 + $0xc0] sm:$0xff] %vm19, 0.0
    %45 = vst.msk [vmem:[#allocation2 + $0xc8] sm:$0xff] %vm19, 0.0
    %46 = vst.msk [vmem:[#allocation2 + $0xd0] sm:$0xff] %vm19, 0.0
    %47 = vst.msk [vmem:[#allocation2 + $0xd8] sm:$0xff] %vm19, 0.0
    %48 = vst.msk [vmem:[#allocation2 + $0xe0] sm:$0xff] %vm19, 0.0
    %49 = vst.msk [vmem:[#allocation2 + $0xe8] sm:$0xff] %vm19, 0.0
    %50 = vst.msk [vmem:[#allocation2 + $0xf0] sm:$0xff] %vm19, 0.0
    %51 = vst.msk [vmem:[#allocation2 + $0xf8] sm:$0xff] %vm19, 0.0
    %52 = vst.msk [vmem:[#allocation2 + $0x100] sm:$0xff] %vm19, 0.0
    %53 = vst.msk [vmem:[#allocation2 + $0x108] sm:$0xff] %vm19, 0.0
    %54 = vst.msk [vmem:[#allocation2 + $0x110] sm:$0xff] %vm19, 0.0
    %55 = vst.msk [vmem:[#allocation2 + $0x118] sm:$0xff] %vm19, 0.0
    %56 = vst.msk [vmem:[#allocation2 + $0x120] sm:$0xff] %vm19, 0.0
    %57 = vst.msk [vmem:[#allocation2 + $0x128] sm:$0xff] %vm19, 0.0
    %58 = vst.msk [vmem:[#allocation2 + $0x130] sm:$0xff] %vm19, 0.0
    %59 = vst.msk [vmem:[#allocation2 + $0x138] sm:$0xff] %vm19, 0.0
    %60 = vst.msk [vmem:[#allocation2 + $0x140] sm:$0xff] %vm19, 0.0
    %61 = vst.msk [vmem:[#allocation2 + $0x148] sm:$0xff] %vm19, 0.0
    %62 = vst.msk [vmem:[#allocation2 + $0x150] sm:$0xff] %vm19, 0.0
    %63 = vst.msk [vmem:[#allocation2 + $0x158] sm:$0xff] %vm19, 0.0
    %64 = vst.msk [vmem:[#allocation2 + $0x160] sm:$0xff] %vm19, 0.0
    %65 = vst.msk [vmem:[#allocation2 + $0x168] sm:$0xff] %vm19, 0.0
    %66 = vst.msk [vmem:[#allocation2 + $0x170] sm:$0xff] %vm19, 0.0
    %67 = vst.msk [vmem:[#allocation2 + $0x178] sm:$0xff] %vm19, 0.0
    %68 = vst.msk [vmem:[#allocation2 + $0x180] sm:$0xff] %vm19, 0.0
    %69 = vst.msk [vmem:[#allocation2 + $0x188] sm:$0xff] %vm19, 0.0
    %70 = vst.msk [vmem:[#allocation2 + $0x190] sm:$0xff] %vm19, 0.0
    %71 = vst.msk [vmem:[#allocation2 + $0x198] sm:$0xff] %vm19, 0.0
    %72 = vst.msk [vmem:[#allocation2 + $0x1a0] sm:$0xff] %vm19, 0.0
    %73 = vst.msk [vmem:[#allocation2 + $0x1a8] sm:$0xff] %vm19, 0.0
    %74 = vst.msk [vmem:[#allocation2 + $0x1b0] sm:$0xff] %vm19, 0.0
    %75 = vst.msk [vmem:[#allocation2 + $0x1b8] sm:$0xff] %vm19, 0.0
    %76 = vst.msk [vmem:[#allocation2 + $0x1c0] sm:$0xff] %vm19, 0.0
    %77 = vst.msk [vmem:[#allocation2 + $0x1c8] sm:$0xff] %vm19, 0.0
    %78 = vst.msk [vmem:[#allocation2 + $0x1d0] sm:$0xff] %vm19, 0.0
    %79 = vst.msk [vmem:[#allocation2 + $0x1d8] sm:$0xff] %vm19, 0.0
    %80 = vst.msk [vmem:[#allocation2 + $0x1e0] sm:$0xff] %vm19, 0.0
    %81 = vst.msk [vmem:[#allocation2 + $0x1e8] sm:$0xff] %vm19, 0.0
    %82 = vst.msk [vmem:[#allocation2 + $0x1f0] sm:$0xff] %vm19, 0.0
    %83 = vst.msk [vmem:[#allocation2 + $0x1f8] sm:$0xff] %vm19, 0.0
  $region17: #{discriminator_forward.5} parent=0 // pred_fallthru
    _
  %v84 = vld [vmem:[#allocation2] sm:$0xff]
  %v85 = vld [vmem:[#allocation2 + $0x8] sm:$0xff]
  %v86 = vld [vmem:[#allocation2 + $0x10] sm:$0xff]
  %v87 = vld [vmem:[#allocation2 + $0x18] sm:$0xff]
  %v88 = vld [vmem:[#allocation2 + $0x20] sm:$0xff]
  %v89 = vld [vmem:[#allocation2 + $0x28] sm:$0xff]
  %v90 = vld [vmem:[#allocation2 + $0x30] sm:$0xff]
  %v91 = vld [vmem:[#allocation2 + $0x38] sm:$0xff]
  %v92 = vld [vmem:[#allocation2 + $0x40] sm:$0xff]
  %v93 = vld [vmem:[#allocation2 + $0x48] sm:$0xff]
  %v94 = vld [vmem:[#allocation2 + $0x50] sm:$0xff]
  %v95 = vld [vmem:[#allocation2 + $0x58] sm:$0xff]
  %v96 = vld [vmem:[#allocation2 + $0x60] sm:$0xff]
  %v97 = vld [vmem:[#allocation2 + $0x68] sm:$0xff]
  %v98 = vld [vmem:[#allocation2 + $0x70] sm:$0xff]
  %v99 = vld [vmem:[#allocation2 + $0x78] sm:$0xff]
  %v100 = vld [vmem:[#allocation2 + $0x80] sm:$0xff]
  %v101 = vld [vmem:[#allocation2 + $0x88] sm:$0xff]
  %v102 = vld [vmem:[#allocation2 + $0x90] sm:$0xff]
  %v103 = vld [vmem:[#allocation2 + $0x98] sm:$0xff]
  %v104 = vld [vmem:[#allocation2 + $0xa0] sm:$0xff]
  %v105 = vld [vmem:[#allocation2 + $0xa8] sm:$0xff]
  %v106 = vld [vmem:[#allocation2 + $0xb0] sm:$0xff]
  %v107 = vld [vmem:[#allocation2 + $0xb8] sm:$0xff]
  %v108 = vld [vmem:[#allocation2 + $0xc0] sm:$0xff]
  %v109 = vld [vmem:[#allocation2 + $0xc8] sm:$0xff]
  %v110 = vld [vmem:[#allocation2 + $0xd0] sm:$0xff]
  %v111 = vld [vmem:[#allocation2 + $0xd8] sm:$0xff]
  %v112 = vld [vmem:[#allocation2 + $0xe0] sm:$0xff]
  %v113 = vld [vmem:[#allocation2 + $0xe8] sm:$0xff]
  %v114 = vld [vmem:[#allocation2 + $0xf0] sm:$0xff]
  %v115 = vld [vmem:[#allocation2 + $0xf8] sm:$0xff]
  %v116 = vld [vmem:[#allocation2 + $0x100] sm:$0xff]
  %v117 = vld [vmem:[#allocation2 + $0x108] sm:$0xff]
  %v118 = vld [vmem:[#allocation2 + $0x110] sm:$0xff]
  %v119 = vld [vmem:[#allocation2 + $0x118] sm:$0xff]
  %v120 = vld [vmem:[#allocation2 + $0x120] sm:$0xff]
  %v121 = vld [vmem:[#allocation2 + $0x128] sm:$0xff]
  %v122 = vld [vmem:[#allocation2 + $0x130] sm:$0xff]
  %v123 = vld [vmem:[#allocation2 + $0x138] sm:$0xff]
  %v124 = vld [vmem:[#allocation2 + $0x140] sm:$0xff]
  %v125 = vld [vmem:[#allocation2 + $0x148] sm:$0xff]
  %v126 = vld [vmem:[#allocation2 + $0x150] sm:$0xff]
  %v127 = vld [vmem:[#allocation2 + $0x158] sm:$0xff]
  %v128 = vld [vmem:[#allocation2 + $0x160] sm:$0xff]
  %v129 = vld [vmem:[#allocation2 + $0x168] sm:$0xff]
  %v130 = vld [vmem:[#allocation2 + $0x170] sm:$0xff]
  %v131 = vld [vmem:[#allocation2 + $0x178] sm:$0xff]
  %v132 = vld [vmem:[#allocation2 + $0x180] sm:$0xff]
  %v133 = vld [vmem:[#allocation2 + $0x188] sm:$0xff]
  %v134 = vld [vmem:[#allocation2 + $0x190] sm:$0xff]
  %v135 = vld [vmem:[#allocation2 + $0x198] sm:$0xff]
  %v136 = vld [vmem:[#allocation2 + $0x1a0] sm:$0xff]
  %v137 = vld [vmem:[#allocation2 + $0x1a8] sm:$0xff]
  %v138 = vld [vmem:[#allocation2 + $0x1b0] sm:$0xff]
  %v139 = vld [vmem:[#allocation2 + $0x1b8] sm:$0xff]
  %v140 = vld [vmem:[#allocation2 + $0x1c0] sm:$0xff]
  %v141 = vld [vmem:[#allocation2 + $0x1c8] sm:$0xff]
  %v142 = vld [vmem:[#allocation2 + $0x1d0] sm:$0xff]
  %v143 = vld [vmem:[#allocation2 + $0x1d8] sm:$0xff]
  %v144 = vld [vmem:[#allocation2 + $0x1e0] sm:$0xff]
  %v145 = vld [vmem:[#allocation2 + $0x1e8] sm:$0xff]
  %v146 = vld [vmem:[#allocation2 + $0x1f0] sm:$0xff]
  %v147 = vld [vmem:[#allocation2 + $0x1f8] sm:$0xff]
  %v148 = vld [vmem:[%s0] sm:$0xf]
  %v149 = vld [vmem:[%s0 + $0x4] sm:$0xf]
  %v150 = vld [vmem:[%s0 + $0x8] sm:$0xf]
  %v151 = vld [vmem:[%s0 + $0xc] sm:$0xf]
  %v152 = vld [vmem:[%s0 + $0x10] sm:$0xf]
  %v153 = vld [vmem:[%s0 + $0x14] sm:$0xf]
  %v154 = vld [vmem:[%s0 + $0x18] sm:$0xf]
  %v155 = vld [vmem:[%s0 + $0x1c] sm:$0xf]
  %v156 = vld [vmem:[%s0 + $0x20] sm:$0xf]
  %v157 = vld [vmem:[%s0 + $0x24] sm:$0xf]
  %v158 = vld [vmem:[%s0 + $0x28] sm:$0xf]
  %v159 = vld [vmem:[%s0 + $0x2c] sm:$0xf]
  %v160 = vld [vmem:[%s0 + $0x30] sm:$0xf]
  %v161 = vld [vmem:[%s0 + $0x34] sm:$0xf]
  %v162 = vld [vmem:[%s0 + $0x38] sm:$0xf]
  %v163 = vld [vmem:[%s0 + $0x3c] sm:$0xf]
  %v164 = vld [vmem:[%s0 + $0x40] sm:$0xf]
  %v165 = vld [vmem:[%s0 + $0x44] sm:$0xf]
  %v166 = vld [vmem:[%s0 + $0x48] sm:$0xf]
  %v167 = vld [vmem:[%s0 + $0x4c] sm:$0xf]
  %v168 = vld [vmem:[%s0 + $0x50] sm:$0xf]
  %v169 = vld [vmem:[%s0 + $0x54] sm:$0xf]
  %v170 = vld [vmem:[%s0 + $0x58] sm:$0xf]
  %v171 = vld [vmem:[%s0 + $0x5c] sm:$0xf]
  %v172 = vld [vmem:[%s0 + $0x60] sm:$0xf]
  %v173 = vld [vmem:[%s0 + $0x64] sm:$0xf]
  %v174 = vld [vmem:[%s0 + $0x68] sm:$0xf]
  %v175 = vld [vmem:[%s0 + $0x6c] sm:$0xf]
  %v176 = vld [vmem:[%s0 + $0x70] sm:$0xf]
  %v177 = vld [vmem:[%s0 + $0x74] sm:$0xf]
  %v178 = vld [vmem:[%s0 + $0x78] sm:$0xf]
  %v179 = vld [vmem:[%s0 + $0x7c] sm:$0xf]
  %v180 = vld [vmem:[%s0 + $0x80] sm:$0xf]
  %v181 = vld [vmem:[%s0 + $0x84] sm:$0xf]
  %v182 = vld [vmem:[%s0 + $0x88] sm:$0xf]
  %v183 = vld [vmem:[%s0 + $0x8c] sm:$0xf]
  %v184 = vld [vmem:[%s0 + $0x90] sm:$0xf]
  %v185 = vld [vmem:[%s0 + $0x94] sm:$0xf]
  %v186 = vld [vmem:[%s0 + $0x98] sm:$0xf]
  %v187 = vld [vmem:[%s0 + $0x9c] sm:$0xf]
  %v188 = vld [vmem:[%s0 + $0xa0] sm:$0xf]
  %v189 = vld [vmem:[%s0 + $0xa4] sm:$0xf]
  %v190 = vld [vmem:[%s0 + $0xa8] sm:$0xf]
  %v191 = vld [vmem:[%s0 + $0xac] sm:$0xf]
  %v192 = vld [vmem:[%s0 + $0xb0] sm:$0xf]
  %v193 = vld [vmem:[%s0 + $0xb4] sm:$0xf]
  %v194 = vld [vmem:[%s0 + $0xb8] sm:$0xf]
  %v195 = vld [vmem:[%s0 + $0xbc] sm:$0xf]
  %v196 = vld [vmem:[%s0 + $0xc0] sm:$0xf]
  %v197 = vld [vmem:[%s0 + $0xc4] sm:$0xf]
  %v198 = vld [vmem:[%s0 + $0xc8] sm:$0xf]
  %v199 = vld [vmem:[%s0 + $0xcc] sm:$0xf]
  %v200 = vld [vmem:[%s0 + $0xd0] sm:$0xf]
  %v201 = vld [vmem:[%s0 + $0xd4] sm:$0xf]
  %v202 = vld [vmem:[%s0 + $0xd8] sm:$0xf]
  %v203 = vld [vmem:[%s0 + $0xdc] sm:$0xf]
  %v204 = vld [vmem:[%s0 + $0xe0] sm:$0xf]
  %v205 = vld [vmem:[%s0 + $0xe4] sm:$0xf]
  %v206 = vld [vmem:[%s0 + $0xe8] sm:$0xf]
  %v207 = vld [vmem:[%s0 + $0xec] sm:$0xf]
  %v208 = vld [vmem:[%s0 + $0xf0] sm:$0xf]
  %v209 = vld [vmem:[%s0 + $0xf4] sm:$0xf]
  %v210 = vld [vmem:[%s0 + $0xf8] sm:$0xf]
  %v211 = vld [vmem:[%s0 + $0xfc] sm:$0xf]
  %v212 = vld [vmem:[%s1] sm:$0xf]
  %v213 = vld [vmem:[%s1 + $0x4] sm:$0xf]
  %v214 = vld [vmem:[%s1 + $0x8] sm:$0xf]
  %v215 = vld [vmem:[%s1 + $0xc] sm:$0xf]
  %v216 = vld [vmem:[%s1 + $0x10] sm:$0xf]
  %v217 = vld [vmem:[%s1 + $0x14] sm:$0xf]
  %v282 = vunpack.c.l.b16 %v148
  %v283 = vunpack.c.l.b16 %v149
  %v284 = vunpack.c.l.b16 %v150
  %v285 = vunpack.c.l.b16 %v151
  %v286 = vunpack.c.l.b16 %v152
  %v287 = vunpack.c.l.b16 %v153
  %v288 = vunpack.c.l.b16 %v154
  %v289 = vunpack.c.l.b16 %v155
  %v290 = vunpack.c.l.b16 %v156
  %v291 = vunpack.c.l.b16 %v157
  %v292 = vunpack.c.l.b16 %v158
  %v293 = vunpack.c.l.b16 %v159
  %v294 = vunpack.c.l.b16 %v160
  %v295 = vunpack.c.l.b16 %v161
  %v296 = vunpack.c.l.b16 %v162
  %v297 = vunpack.c.l.b16 %v163
  %v298 = vunpack.c.l.b16 %v164
  %v299 = vunpack.c.l.b16 %v165
  %v300 = vunpack.c.l.b16 %v166
  %v301 = vunpack.c.l.b16 %v167
  %v302 = vunpack.c.l.b16 %v168
  %v303 = vunpack.c.l.b16 %v169
  %v304 = vunpack.c.l.b16 %v170
  %v305 = vunpack.c.l.b16 %v171
  %v306 = vunpack.c.l.b16 %v172
  %v307 = vunpack.c.l.b16 %v173
  %v308 = vunpack.c.l.b16 %v174
  %v309 = vunpack.c.l.b16 %v175
  %v310 = vunpack.c.l.b16 %v176
  %v311 = vunpack.c.l.b16 %v177
  %v312 = vunpack.c.l.b16 %v178
  %v313 = vunpack.c.l.b16 %v179
  %v314 = vunpack.c.l.b16 %v180
  %v315 = vunpack.c.l.b16 %v181
  %v316 = vunpack.c.l.b16 %v182
  %v317 = vunpack.c.l.b16 %v183
  %v318 = vunpack.c.l.b16 %v184
  %v319 = vunpack.c.l.b16 %v185
  %v320 = vunpack.c.l.b16 %v186
  %v321 = vunpack.c.l.b16 %v187
  %v322 = vunpack.c.l.b16 %v188
  %v323 = vunpack.c.l.b16 %v189
  %v324 = vunpack.c.l.b16 %v190
  %v325 = vunpack.c.l.b16 %v191
  %v326 = vunpack.c.l.b16 %v192
  %v327 = vunpack.c.l.b16 %v193
  %v328 = vunpack.c.l.b16 %v194
  %v329 = vunpack.c.l.b16 %v195
  %v330 = vunpack.c.l.b16 %v196
  %v331 = vunpack.c.l.b16 %v197
  %v332 = vunpack.c.l.b16 %v198
  %v333 = vunpack.c.l.b16 %v199
  %v334 = vunpack.c.l.b16 %v200
  %v335 = vunpack.c.l.b16 %v201
  %v336 = vunpack.c.l.b16 %v202
  %v337 = vunpack.c.l.b16 %v203
  %v338 = vunpack.c.l.b16 %v204
  %v339 = vunpack.c.l.b16 %v205
  %v340 = vunpack.c.l.b16 %v206
  %v341 = vunpack.c.l.b16 %v207
  %v342 = vunpack.c.l.b16 %v208
  %v343 = vunpack.c.l.b16 %v209
  %v344 = vunpack.c.l.b16 %v210
  %v345 = vunpack.c.l.b16 %v211
  %v346 = vpack.c.b16 %v283, %v282
  %v347 = vpack.c.b16 %v285, %v284
  %v348 = vpack.c.b16 %v287, %v286
  %v349 = vpack.c.b16 %v289, %v288
  %v350 = vpack.c.b16 %v291, %v290
  %v351 = vpack.c.b16 %v293, %v292
  %v352 = vpack.c.b16 %v295, %v294
  %v353 = vpack.c.b16 %v297, %v296
  %v354 = vpack.c.b16 %v299, %v298
  %v355 = vpack.c.b16 %v301, %v300
  %v356 = vpack.c.b16 %v303, %v302
  %v357 = vpack.c.b16 %v305, %v304
  %v358 = vpack.c.b16 %v307, %v306
  %v359 = vpack.c.b16 %v309, %v308
  %v360 = vpack.c.b16 %v311, %v310
  %v361 = vpack.c.b16 %v313, %v312
  %v362 = vpack.c.b16 %v315, %v314
  %v363 = vpack.c.b16 %v317, %v316
  %v364 = vpack.c.b16 %v319, %v318
  %v365 = vpack.c.b16 %v321, %v320
  %v366 = vpack.c.b16 %v323, %v322
  %v367 = vpack.c.b16 %v325, %v324
  %v368 = vpack.c.b16 %v327, %v326
  %v369 = vpack.c.b16 %v329, %v328
  %v370 = vpack.c.b16 %v331, %v330
  %v371 = vpack.c.b16 %v333, %v332
  %v372 = vpack.c.b16 %v335, %v334
  %v373 = vpack.c.b16 %v337, %v336
  %v374 = vpack.c.b16 %v339, %v338
  %v375 = vpack.c.b16 %v341, %v340
  %v376 = vpack.c.b16 %v343, %v342
  %v377 = vpack.c.b16 %v345, %v344
  %v384 = vunpack.c.l.b16 %v212
  %v385 = vunpack.c.l.b16 %v213
  %v386 = vunpack.c.l.b16 %v214
  %v387 = vunpack.c.l.b16 %v215
  %v388 = vunpack.c.l.b16 %v216
  %v389 = vunpack.c.l.b16 %v217
  %v390 = vpack.c.b16 %v385, %v384
  %v391 = vpack.c.b16 %v387, %v386
  %v392 = vpack.c.b16 %v389, %v388
  %vm396 = vcmask 392192
  %v398 = vsel %vm396, %v346, 0
  %v401 = vsel %vm396, %v347, 0
  %v404 = vsel %vm396, %v348, 0
  %v407 = vsel %vm396, %v349, 0
  %v410 = vsel %vm396, %v350, 0
  %v413 = vsel %vm396, %v351, 0
  %v416 = vsel %vm396, %v352, 0
  %v419 = vsel %vm396, %v353, 0
  %v422 = vsel %vm396, %v354, 0
  %v425 = vsel %vm396, %v355, 0
  %v428 = vsel %vm396, %v356, 0
  %v431 = vsel %vm396, %v357, 0
  %v434 = vsel %vm396, %v358, 0
  %v437 = vsel %vm396, %v359, 0
  %v440 = vsel %vm396, %v360, 0
  %v443 = vsel %vm396, %v361, 0
  %v446 = vsel %vm396, %v362, 0
  %v449 = vsel %vm396, %v363, 0
  %v452 = vsel %vm396, %v364, 0
  %v455 = vsel %vm396, %v365, 0
  %v458 = vsel %vm396, %v366, 0
  %v461 = vsel %vm396, %v367, 0
  %v464 = vsel %vm396, %v368, 0
  %v467 = vsel %vm396, %v369, 0
  %v470 = vsel %vm396, %v370, 0
  %v473 = vsel %vm396, %v371, 0
  %v476 = vsel %vm396, %v372, 0
  %v479 = vsel %vm396, %v373, 0
  %v482 = vsel %vm396, %v374, 0
  %v485 = vsel %vm396, %v375, 0
  %v488 = vsel %vm396, %v376, 0
  %v491 = vsel %vm396, %v377, 0
  %493 = vmatpush.bf16.msra.mxu0 0
  %494 = vmatpush.bf16.msra.mxu0 0
  %495 = vmatpush.bf16.msra.mxu0 0
  %496 = vmatpush.bf16.msra.mxu0 0
  %497 = vmatpush.bf16.msra.mxu0 0
  %498 = vmatpush.bf16.msra.mxu0 %v392
  %499 = vmatpush.bf16.msra.mxu0 %v391
  %500 = vmatpush.bf16.msra.mxu0 %v390
  %501 = vmatmul.bf16.gmra.mxu0 %v398
  %v502 = vpop.f32.mrf.mxu0
  %v503 = vadd.f32 0.0, %v502
  %v504 = vpop.f32.mrf.mxu0
  %v505 = vadd.f32 0.0, %v504
  %506 = vmatmul.bf16.gmra.mxu0 %v401
  %v507 = vpop.f32.mrf.mxu0
  %v508 = vadd.f32 0.0, %v507
  %v509 = vpop.f32.mrf.mxu0
  %v510 = vadd.f32 0.0, %v509
  %511 = vmatmul.bf16.gmra.mxu0 %v404
  %v512 = vpop.f32.mrf.mxu0
  %v513 = vadd.f32 0.0, %v512
  %v514 = vpop.f32.mrf.mxu0
  %v515 = vadd.f32 0.0, %v514
  %516 = vmatmul.bf16.gmra.mxu0 %v407
  %v517 = vpop.f32.mrf.mxu0
  %v518 = vadd.f32 0.0, %v517
  %v519 = vpop.f32.mrf.mxu0
  %v520 = vadd.f32 0.0, %v519
  %521 = vmatmul.bf16.gmra.mxu0 %v410
  %v522 = vpop.f32.mrf.mxu0
  %v523 = vadd.f32 0.0, %v522
  %v524 = vpop.f32.mrf.mxu0
  %v525 = vadd.f32 0.0, %v524
  %526 = vmatmul.bf16.gmra.mxu0 %v413
  %v527 = vpop.f32.mrf.mxu0
  %v528 = vadd.f32 0.0, %v527
  %v529 = vpop.f32.mrf.mxu0
  %v530 = vadd.f32 0.0, %v529
  %531 = vmatmul.bf16.gmra.mxu0 %v416
  %v532 = vpop.f32.mrf.mxu0
  %v533 = vadd.f32 0.0, %v532
  %v534 = vpop.f32.mrf.mxu0
  %v535 = vadd.f32 0.0, %v534
  %536 = vmatmul.bf16.gmra.mxu0 %v419
  %v537 = vpop.f32.mrf.mxu0
  %v538 = vadd.f32 0.0, %v537
  %v539 = vpop.f32.mrf.mxu0
  %v540 = vadd.f32 0.0, %v539
  %541 = vmatmul.bf16.gmra.mxu0 %v422
  %v542 = vpop.f32.mrf.mxu0
  %v543 = vadd.f32 0.0, %v542
  %v544 = vpop.f32.mrf.mxu0
  %v545 = vadd.f32 0.0, %v544
  %546 = vmatmul.bf16.gmra.mxu0 %v425
  %v547 = vpop.f32.mrf.mxu0
  %v548 = vadd.f32 0.0, %v547
  %v549 = vpop.f32.mrf.mxu0
  %v550 = vadd.f32 0.0, %v549
  %551 = vmatmul.bf16.gmra.mxu0 %v428
  %v552 = vpop.f32.mrf.mxu0
  %v553 = vadd.f32 0.0, %v552
  %v554 = vpop.f32.mrf.mxu0
  %v555 = vadd.f32 0.0, %v554
  %556 = vmatmul.bf16.gmra.mxu0 %v431
  %v557 = vpop.f32.mrf.mxu0
  %v558 = vadd.f32 0.0, %v557
  %v559 = vpop.f32.mrf.mxu0
  %v560 = vadd.f32 0.0, %v559
  %561 = vmatmul.bf16.gmra.mxu0 %v434
  %v562 = vpop.f32.mrf.mxu0
  %v563 = vadd.f32 0.0, %v562
  %v564 = vpop.f32.mrf.mxu0
  %v565 = vadd.f32 0.0, %v564
  %566 = vmatmul.bf16.gmra.mxu0 %v437
  %v567 = vpop.f32.mrf.mxu0
  %v568 = vadd.f32 0.0, %v567
  %v569 = vpop.f32.mrf.mxu0
  %v570 = vadd.f32 0.0, %v569
  %571 = vmatmul.bf16.gmra.mxu0 %v440
  %v572 = vpop.f32.mrf.mxu0
  %v573 = vadd.f32 0.0, %v572
  %v574 = vpop.f32.mrf.mxu0
  %v575 = vadd.f32 0.0, %v574
  %576 = vmatmul.bf16.gmra.mxu0 %v443
  %v577 = vpop.f32.mrf.mxu0
  %v578 = vadd.f32 0.0, %v577
  %v579 = vpop.f32.mrf.mxu0
  %v580 = vadd.f32 0.0, %v579
  %581 = vmatmul.bf16.gmra.mxu0 %v446
  %v582 = vpop.f32.mrf.mxu0
  %v583 = vadd.f32 0.0, %v582
  %v584 = vpop.f32.mrf.mxu0
  %v585 = vadd.f32 0.0, %v584
  %586 = vmatmul.bf16.gmra.mxu0 %v449
  %v587 = vpop.f32.mrf.mxu0
  %v588 = vadd.f32 0.0, %v587
  %v589 = vpop.f32.mrf.mxu0
  %v590 = vadd.f32 0.0, %v589
  %591 = vmatmul.bf16.gmra.mxu0 %v452
  %v592 = vpop.f32.mrf.mxu0
  %v593 = vadd.f32 0.0, %v592
  %v594 = vpop.f32.mrf.mxu0
  %v595 = vadd.f32 0.0, %v594
  %596 = vmatmul.bf16.gmra.mxu0 %v455
  %v597 = vpop.f32.mrf.mxu0
  %v598 = vadd.f32 0.0, %v597
  %v599 = vpop.f32.mrf.mxu0
  %v600 = vadd.f32 0.0, %v599
  %601 = vmatmul.bf16.gmra.mxu0 %v458
  %v602 = vpop.f32.mrf.mxu0
  %v603 = vadd.f32 0.0, %v602
  %v604 = vpop.f32.mrf.mxu0
  %v605 = vadd.f32 0.0, %v604
  %606 = vmatmul.bf16.gmra.mxu0 %v461
  %v607 = vpop.f32.mrf.mxu0
  %v608 = vadd.f32 0.0, %v607
  %v609 = vpop.f32.mrf.mxu0
  %v610 = vadd.f32 0.0, %v609
  %611 = vmatmul.bf16.gmra.mxu0 %v464
  %v612 = vpop.f32.mrf.mxu0
  %v613 = vadd.f32 0.0, %v612
  %v614 = vpop.f32.mrf.mxu0
  %v615 = vadd.f32 0.0, %v614
  %616 = vmatmul.bf16.gmra.mxu0 %v467
  %v617 = vpop.f32.mrf.mxu0
  %v618 = vadd.f32 0.0, %v617
  %v619 = vpop.f32.mrf.mxu0
  %v620 = vadd.f32 0.0, %v619
  %621 = vmatmul.bf16.gmra.mxu0 %v470
  %v622 = vpop.f32.mrf.mxu0
  %v623 = vadd.f32 0.0, %v622
  %v624 = vpop.f32.mrf.mxu0
  %v625 = vadd.f32 0.0, %v624
  %626 = vmatmul.bf16.gmra.mxu0 %v473
  %v627 = vpop.f32.mrf.mxu0
  %v628 = vadd.f32 0.0, %v627
  %v629 = vpop.f32.mrf.mxu0
  %v630 = vadd.f32 0.0, %v629
  %631 = vmatmul.bf16.gmra.mxu0 %v476
  %v632 = vpop.f32.mrf.mxu0
  %v633 = vadd.f32 0.0, %v632
  %v634 = vpop.f32.mrf.mxu0
  %v635 = vadd.f32 0.0, %v634
  %636 = vmatmul.bf16.gmra.mxu0 %v479
  %v637 = vpop.f32.mrf.mxu0
  %v638 = vadd.f32 0.0, %v637
  %v639 = vpop.f32.mrf.mxu0
  %v640 = vadd.f32 0.0, %v639
  %641 = vmatmul.bf16.gmra.mxu0 %v482
  %v642 = vpop.f32.mrf.mxu0
  %v643 = vadd.f32 0.0, %v642
  %v644 = vpop.f32.mrf.mxu0
  %v645 = vadd.f32 0.0, %v644
  %646 = vmatmul.bf16.gmra.mxu0 %v485
  %v647 = vpop.f32.mrf.mxu0
  %v648 = vadd.f32 0.0, %v647
  %v649 = vpop.f32.mrf.mxu0
  %v650 = vadd.f32 0.0, %v649
  %651 = vmatmul.bf16.gmra.mxu0 %v488
  %v652 = vpop.f32.mrf.mxu0
  %v653 = vadd.f32 0.0, %v652
  %v654 = vpop.f32.mrf.mxu0
  %v655 = vadd.f32 0.0, %v654
  %656 = vmatmul.bf16.gmra.mxu0 %v491
  %v657 = vpop.f32.mrf.mxu0
  %v658 = vadd.f32 0.0, %v657
  %v659 = vpop.f32.mrf.mxu0
  %v660 = vadd.f32 0.0, %v659
  %661 = vdwg.mxu0
  %v662 = vadd.f32 %v84, %v503
  %v663 = vadd.f32 %v85, %v505
  %v664 = vadd.f32 %v86, %v508
  %v665 = vadd.f32 %v87, %v510
  %v666 = vadd.f32 %v88, %v513
  %v667 = vadd.f32 %v89, %v515
  %v668 = vadd.f32 %v90, %v518
  %v669 = vadd.f32 %v91, %v520
  %v670 = vadd.f32 %v92, %v523
  %v671 = vadd.f32 %v93, %v525
  %v672 = vadd.f32 %v94, %v528
  %v673 = vadd.f32 %v95, %v530
  %v674 = vadd.f32 %v96, %v533
  %v675 = vadd.f32 %v97, %v535
  %v676 = vadd.f32 %v98, %v538
  %v677 = vadd.f32 %v99, %v540
  %v678 = vadd.f32 %v100, %v543
  %v679 = vadd.f32 %v101, %v545
  %v680 = vadd.f32 %v102, %v548
  %v681 = vadd.f32 %v103, %v550
  %v682 = vadd.f32 %v104, %v553
  %v683 = vadd.f32 %v105, %v555
  %v684 = vadd.f32 %v106, %v558
  %v685 = vadd.f32 %v107, %v560
  %v686 = vadd.f32 %v108, %v563
  %v687 = vadd.f32 %v109, %v565
  %v688 = vadd.f32 %v110, %v568
  %v689 = vadd.f32 %v111, %v570
  %v690 = vadd.f32 %v112, %v573
  %v691 = vadd.f32 %v113, %v575
  %v692 = vadd.f32 %v114, %v578
  %v693 = vadd.f32 %v115, %v580
  %v694 = vadd.f32 %v116, %v583
  %v695 = vadd.f32 %v117, %v585
  %v696 = vadd.f32 %v118, %v588
  %v697 = vadd.f32 %v119, %v590
  %v698 = vadd.f32 %v120, %v593
  %v699 = vadd.f32 %v121, %v595
  %v700 = vadd.f32 %v122, %v598
  %v701 = vadd.f32 %v123, %v600
  %v702 = vadd.f32 %v124, %v603
  %v703 = vadd.f32 %v125, %v605
  %v704 = vadd.f32 %v126, %v608
  %v705 = vadd.f32 %v127, %v610
  %v706 = vadd.f32 %v128, %v613
  %v707 = vadd.f32 %v129, %v615
  %v708 = vadd.f32 %v130, %v618
  %v709 = vadd.f32 %v131, %v620
  %v710 = vadd.f32 %v132, %v623
  %v711 = vadd.f32 %v133, %v625
  %v712 = vadd.f32 %v134, %v628
  %v713 = vadd.f32 %v135, %v630
  %v714 = vadd.f32 %v136, %v633
  %v715 = vadd.f32 %v137, %v635
  %v716 = vadd.f32 %v138, %v638
  %v717 = vadd.f32 %v139, %v640
  %v718 = vadd.f32 %v140, %v643
  %v719 = vadd.f32 %v141, %v645
  %v720 = vadd.f32 %v142, %v648
  %v721 = vadd.f32 %v143, %v650
  %v722 = vadd.f32 %v144, %v653
  %v723 = vadd.f32 %v145, %v655
  %v724 = vadd.f32 %v146, %v658
  %v725 = vadd.f32 %v147, %v660
  %vm726 = vcmask 64512
  %727 = vst.msk [vmem:[#allocation2] sm:$0xff] %vm726, %v662
  %728 = vst.msk [vmem:[#allocation2 + $0x8] sm:$0xff] %vm726, %v663
  %729 = vst.msk [vmem:[#allocation2 + $0x10] sm:$0xff] %vm726, %v664
  %730 = vst.msk [vmem:[#allocation2 + $0x18] sm:$0xff] %vm726, %v665
  %731 = vst.msk [vmem:[#allocation2 + $0x20] sm:$0xff] %vm726, %v666
  %732 = vst.msk [vmem:[#allocation2 + $0x28] sm:$0xff] %vm726, %v667
  %733 = vst.msk [vmem:[#allocation2 + $0x30] sm:$0xff] %vm726, %v668
  %734 = vst.msk [vmem:[#allocation2 + $0x38] sm:$0xff] %vm726, %v669
  %735 = vst.msk [vmem:[#allocation2 + $0x40] sm:$0xff] %vm726, %v670
  %736 = vst.msk [vmem:[#allocation2 + $0x48] sm:$0xff] %vm726, %v671
  %737 = vst.msk [vmem:[#allocation2 + $0x50] sm:$0xff] %vm726, %v672
  %738 = vst.msk [vmem:[#allocation2 + $0x58] sm:$0xff] %vm726, %v673
  %739 = vst.msk [vmem:[#allocation2 + $0x60] sm:$0xff] %vm726, %v674
  %740 = vst.msk [vmem:[#allocation2 + $0x68] sm:$0xff] %vm726, %v675
  %741 = vst.msk [vmem:[#allocation2 + $0x70] sm:$0xff] %vm726, %v676
  %742 = vst.msk [vmem:[#allocation2 + $0x78] sm:$0xff] %vm726, %v677
  %743 = vst.msk [vmem:[#allocation2 + $0x80] sm:$0xff] %vm726, %v678
  %744 = vst.msk [vmem:[#allocation2 + $0x88] sm:$0xff] %vm726, %v679
  %745 = vst.msk [vmem:[#allocation2 + $0x90] sm:$0xff] %vm726, %v680
  %746 = vst.msk [vmem:[#allocation2 + $0x98] sm:$0xff] %vm726, %v681
  %747 = vst.msk [vmem:[#allocation2 + $0xa0] sm:$0xff] %vm726, %v682
  %748 = vst.msk [vmem:[#allocation2 + $0xa8] sm:$0xff] %vm726, %v683
  %749 = vst.msk [vmem:[#allocation2 + $0xb0] sm:$0xff] %vm726, %v684
  %750 = vst.msk [vmem:[#allocation2 + $0xb8] sm:$0xff] %vm726, %v685
  %751 = vst.msk [vmem:[#allocation2 + $0xc0] sm:$0xff] %vm726, %v686
  %752 = vst.msk [vmem:[#allocation2 + $0xc8] sm:$0xff] %vm726, %v687
  %753 = vst.msk [vmem:[#allocation2 + $0xd0] sm:$0xff] %vm726, %v688
  %754 = vst.msk [vmem:[#allocation2 + $0xd8] sm:$0xff] %vm726, %v689
  %755 = vst.msk [vmem:[#allocation2 + $0xe0] sm:$0xff] %vm726, %v690
  %756 = vst.msk [vmem:[#allocation2 + $0xe8] sm:$0xff] %vm726, %v691
  %757 = vst.msk [vmem:[#allocation2 + $0xf0] sm:$0xff] %vm726, %v692
  %758 = vst.msk [vmem:[#allocation2 + $0xf8] sm:$0xff] %vm726, %v693
  %759 = vst.msk [vmem:[#allocation2 + $0x100] sm:$0xff] %vm726, %v694
  %760 = vst.msk [vmem:[#allocation2 + $0x108] sm:$0xff] %vm726, %v695
  %761 = vst.msk [vmem:[#allocation2 + $0x110] sm:$0xff] %vm726, %v696
  %762 = vst.msk [vmem:[#allocation2 + $0x118] sm:$0xff] %vm726, %v697
  %763 = vst.msk [vmem:[#allocation2 + $0x120] sm:$0xff] %vm726, %v698
  %764 = vst.msk [vmem:[#allocation2 + $0x128] sm:$0xff] %vm726, %v699
  %765 = vst.msk [vmem:[#allocation2 + $0x130] sm:$0xff] %vm726, %v700
  %766 = vst.msk [vmem:[#allocation2 + $0x138] sm:$0xff] %vm726, %v701
  %767 = vst.msk [vmem:[#allocation2 + $0x140] sm:$0xff] %vm726, %v702
  %768 = vst.msk [vmem:[#allocation2 + $0x148] sm:$0xff] %vm726, %v703
  %769 = vst.msk [vmem:[#allocation2 + $0x150] sm:$0xff] %vm726, %v704
  %770 = vst.msk [vmem:[#allocation2 + $0x158] sm:$0xff] %vm726, %v705
  %771 = vst.msk [vmem:[#allocation2 + $0x160] sm:$0xff] %vm726, %v706
  %772 = vst.msk [vmem:[#allocation2 + $0x168] sm:$0xff] %vm726, %v707
  %773 = vst.msk [vmem:[#allocation2 + $0x170] sm:$0xff] %vm726, %v708
  %774 = vst.msk [vmem:[#allocation2 + $0x178] sm:$0xff] %vm726, %v709
  %775 = vst.msk [vmem:[#allocation2 + $0x180] sm:$0xff] %vm726, %v710
  %776 = vst.msk [vmem:[#allocation2 + $0x188] sm:$0xff] %vm726, %v711
  %777 = vst.msk [vmem:[#allocation2 + $0x190] sm:$0xff] %vm726, %v712
  %778 = vst.msk [vmem:[#allocation2 + $0x198] sm:$0xff] %vm726, %v713
  %779 = vst.msk [vmem:[#allocation2 + $0x1a0] sm:$0xff] %vm726, %v714
  %780 = vst.msk [vmem:[#allocation2 + $0x1a8] sm:$0xff] %vm726, %v715
  %781 = vst.msk [vmem:[#allocation2 + $0x1b0] sm:$0xff] %vm726, %v716
  %782 = vst.msk [vmem:[#allocation2 + $0x1b8] sm:$0xff] %vm726, %v717
  %783 = vst.msk [vmem:[#allocation2 + $0x1c0] sm:$0xff] %vm726, %v718
  %784 = vst.msk [vmem:[#allocation2 + $0x1c8] sm:$0xff] %vm726, %v719
  %785 = vst.msk [vmem:[#allocation2 + $0x1d0] sm:$0xff] %vm726, %v720
  %786 = vst.msk [vmem:[#allocation2 + $0x1d8] sm:$0xff] %vm726, %v721
  %787 = vst.msk [vmem:[#allocation2 + $0x1e0] sm:$0xff] %vm726, %v722
  %788 = vst.msk [vmem:[#allocation2 + $0x1e8] sm:$0xff] %vm726, %v723
  %789 = vst.msk [vmem:[#allocation2 + $0x1f0] sm:$0xff] %vm726, %v724
  %790 = vst.msk [vmem:[#allocation2 + $0x1f8] sm:$0xff] %vm726, %v725
  // Predicated region
  $region18: #{discriminator_forward.5} parent=0 // pred_check
    %p791 = pneg %p15
  $region19: #{discriminator_forward.5} parent=0 // pred_check_branch
    %793 = sbr.rel (%p791) target = $region21
  $region20: #{discriminator_forward.5} parent=0 // pred_region
    %v794 = vld [vmem:[#allocation2] sm:$0xff]
    %v795 = vld [vmem:[#allocation2 + $0x8] sm:$0xff]
    %v796 = vld [vmem:[#allocation2 + $0x10] sm:$0xff]
    %v797 = vld [vmem:[#allocation2 + $0x18] sm:$0xff]
    %v798 = vld [vmem:[#allocation2 + $0x20] sm:$0xff]
    %v799 = vld [vmem:[#allocation2 + $0x28] sm:$0xff]
    %v800 = vld [vmem:[#allocation2 + $0x30] sm:$0xff]
    %v801 = vld [vmem:[#allocation2 + $0x38] sm:$0xff]
    %v802 = vld [vmem:[#allocation2 + $0x40] sm:$0xff]
    %v803 = vld [vmem:[#allocation2 + $0x48] sm:$0xff]
    %v804 = vld [vmem:[#allocation2 + $0x50] sm:$0xff]
    %v805 = vld [vmem:[#allocation2 + $0x58] sm:$0xff]
    %v806 = vld [vmem:[#allocation2 + $0x60] sm:$0xff]
    %v807 = vld [vmem:[#allocation2 + $0x68] sm:$0xff]
    %v808 = vld [vmem:[#allocation2 + $0x70] sm:$0xff]
    %v809 = vld [vmem:[#allocation2 + $0x78] sm:$0xff]
    %v810 = vld [vmem:[#allocation2 + $0x80] sm:$0xff]
    %v811 = vld [vmem:[#allocation2 + $0x88] sm:$0xff]
    %v812 = vld [vmem:[#allocation2 + $0x90] sm:$0xff]
    %v813 = vld [vmem:[#allocation2 + $0x98] sm:$0xff]
    %v814 = vld [vmem:[#allocation2 + $0xa0] sm:$0xff]
    %v815 = vld [vmem:[#allocation2 + $0xa8] sm:$0xff]
    %v816 = vld [vmem:[#allocation2 + $0xb0] sm:$0xff]
    %v817 = vld [vmem:[#allocation2 + $0xb8] sm:$0xff]
    %v818 = vld [vmem:[#allocation2 + $0xc0] sm:$0xff]
    %v819 = vld [vmem:[#allocation2 + $0xc8] sm:$0xff]
    %v820 = vld [vmem:[#allocation2 + $0xd0] sm:$0xff]
    %v821 = vld [vmem:[#allocation2 + $0xd8] sm:$0xff]
    %v822 = vld [vmem:[#allocation2 + $0xe0] sm:$0xff]
    %v823 = vld [vmem:[#allocation2 + $0xe8] sm:$0xff]
    %v824 = vld [vmem:[#allocation2 + $0xf0] sm:$0xff]
    %v825 = vld [vmem:[#allocation2 + $0xf8] sm:$0xff]
    %v826 = vld [vmem:[#allocation2 + $0x100] sm:$0xff]
    %v827 = vld [vmem:[#allocation2 + $0x108] sm:$0xff]
    %v828 = vld [vmem:[#allocation2 + $0x110] sm:$0xff]
    %v829 = vld [vmem:[#allocation2 + $0x118] sm:$0xff]
    %v830 = vld [vmem:[#allocation2 + $0x120] sm:$0xff]
    %v831 = vld [vmem:[#allocation2 + $0x128] sm:$0xff]
    %v832 = vld [vmem:[#allocation2 + $0x130] sm:$0xff]
    %v833 = vld [vmem:[#allocation2 + $0x138] sm:$0xff]
    %v834 = vld [vmem:[#allocation2 + $0x140] sm:$0xff]
    %v835 = vld [vmem:[#allocation2 + $0x148] sm:$0xff]
    %v836 = vld [vmem:[#allocation2 + $0x150] sm:$0xff]
    %v837 = vld [vmem:[#allocation2 + $0x158] sm:$0xff]
    %v838 = vld [vmem:[#allocation2 + $0x160] sm:$0xff]
    %v839 = vld [vmem:[#allocation2 + $0x168] sm:$0xff]
    %v840 = vld [vmem:[#allocation2 + $0x170] sm:$0xff]
    %v841 = vld [vmem:[#allocation2 + $0x178] sm:$0xff]
    %v842 = vld [vmem:[#allocation2 + $0x180] sm:$0xff]
    %v843 = vld [vmem:[#allocation2 + $0x188] sm:$0xff]
    %v844 = vld [vmem:[#allocation2 + $0x190] sm:$0xff]
    %v845 = vld [vmem:[#allocation2 + $0x198] sm:$0xff]
    %v846 = vld [vmem:[#allocation2 + $0x1a0] sm:$0xff]
    %v847 = vld [vmem:[#allocation2 + $0x1a8] sm:$0xff]
    %v848 = vld [vmem:[#allocation2 + $0x1b0] sm:$0xff]
    %v849 = vld [vmem:[#allocation2 + $0x1b8] sm:$0xff]
    %v850 = vld [vmem:[#allocation2 + $0x1c0] sm:$0xff]
    %v851 = vld [vmem:[#allocation2 + $0x1c8] sm:$0xff]
    %v852 = vld [vmem:[#allocation2 + $0x1d0] sm:$0xff]
    %v853 = vld [vmem:[#allocation2 + $0x1d8] sm:$0xff]
    %v854 = vld [vmem:[#allocation2 + $0x1e0] sm:$0xff]
    %v855 = vld [vmem:[#allocation2 + $0x1e8] sm:$0xff]
    %v856 = vld [vmem:[#allocation2 + $0x1f0] sm:$0xff]
    %v857 = vld [vmem:[#allocation2 + $0x1f8] sm:$0xff]
    %v858 = vld [vmem:[%s2] sm:$0x1]
    %v860 = vperm.slane %v858, 0
    %v862 = vadd.f32 %v794, %v860
    %v863 = vadd.f32 %v795, %v860
    %v864 = vadd.f32 %v796, %v860
    %v865 = vadd.f32 %v797, %v860
    %v866 = vadd.f32 %v798, %v860
    %v867 = vadd.f32 %v799, %v860
    %v868 = vadd.f32 %v800, %v860
    %v869 = vadd.f32 %v801, %v860
    %v870 = vadd.f32 %v802, %v860
    %v871 = vadd.f32 %v803, %v860
    %v872 = vadd.f32 %v804, %v860
    %v873 = vadd.f32 %v805, %v860
    %v874 = vadd.f32 %v806, %v860
    %v875 = vadd.f32 %v807, %v860
    %v876 = vadd.f32 %v808, %v860
    %v877 = vadd.f32 %v809, %v860
    %v878 = vadd.f32 %v810, %v860
    %v879 = vadd.f32 %v811, %v860
    %v880 = vadd.f32 %v812, %v860
    %v881 = vadd.f32 %v813, %v860
    %v882 = vadd.f32 %v814, %v860
    %v883 = vadd.f32 %v815, %v860
    %v884 = vadd.f32 %v816, %v860
    %v885 = vadd.f32 %v817, %v860
    %v886 = vadd.f32 %v818, %v860
    %v887 = vadd.f32 %v819, %v860
    %v888 = vadd.f32 %v820, %v860
    %v889 = vadd.f32 %v821, %v860
    %v890 = vadd.f32 %v822, %v860
    %v891 = vadd.f32 %v823, %v860
    %v892 = vadd.f32 %v824, %v860
    %v893 = vadd.f32 %v825, %v860
    %v894 = vadd.f32 %v826, %v860
    %v895 = vadd.f32 %v827, %v860
    %v896 = vadd.f32 %v828, %v860
    %v897 = vadd.f32 %v829, %v860
    %v898 = vadd.f32 %v830, %v860
    %v899 = vadd.f32 %v831, %v860
    %v900 = vadd.f32 %v832, %v860
    %v901 = vadd.f32 %v833, %v860
    %v902 = vadd.f32 %v834, %v860
    %v903 = vadd.f32 %v835, %v860
    %v904 = vadd.f32 %v836, %v860
    %v905 = vadd.f32 %v837, %v860
    %v906 = vadd.f32 %v838, %v860
    %v907 = vadd.f32 %v839, %v860
    %v908 = vadd.f32 %v840, %v860
    %v909 = vadd.f32 %v841, %v860
    %v910 = vadd.f32 %v842, %v860
    %v911 = vadd.f32 %v843, %v860
    %v912 = vadd.f32 %v844, %v860
    %v913 = vadd.f32 %v845, %v860
    %v914 = vadd.f32 %v846, %v860
    %v915 = vadd.f32 %v847, %v860
    %v916 = vadd.f32 %v848, %v860
    %v917 = vadd.f32 %v849, %v860
    %v918 = vadd.f32 %v850, %v860
    %v919 = vadd.f32 %v851, %v860
    %v920 = vadd.f32 %v852, %v860
    %v921 = vadd.f32 %v853, %v860
    %v922 = vadd.f32 %v854, %v860
    %v923 = vadd.f32 %v855, %v860
    %v924 = vadd.f32 %v856, %v860
    %v925 = vadd.f32 %v857, %v860
    %vm926 = vcmp.ge.f32.partialorder %v862, 0.0
    %vm927 = vcmp.ge.f32.partialorder %v863, 0.0
    %vm928 = vcmp.ge.f32.partialorder %v864, 0.0
    %vm929 = vcmp.ge.f32.partialorder %v865, 0.0
    %vm930 = vcmp.ge.f32.partialorder %v866, 0.0
    %vm931 = vcmp.ge.f32.partialorder %v867, 0.0
    %vm932 = vcmp.ge.f32.partialorder %v868, 0.0
    %vm933 = vcmp.ge.f32.partialorder %v869, 0.0
    %vm934 = vcmp.ge.f32.partialorder %v870, 0.0
    %vm935 = vcmp.ge.f32.partialorder %v871, 0.0
    %vm936 = vcmp.ge.f32.partialorder %v872, 0.0
    %vm937 = vcmp.ge.f32.partialorder %v873, 0.0
    %vm938 = vcmp.ge.f32.partialorder %v874, 0.0
    %vm939 = vcmp.ge.f32.partialorder %v875, 0.0
    %vm940 = vcmp.ge.f32.partialorder %v876, 0.0
    %vm941 = vcmp.ge.f32.partialorder %v877, 0.0
    %vm942 = vcmp.ge.f32.partialorder %v878, 0.0
    %vm943 = vcmp.ge.f32.partialorder %v879, 0.0
    %vm944 = vcmp.ge.f32.partialorder %v880, 0.0
    %vm945 = vcmp.ge.f32.partialorder %v881, 0.0
    %vm946 = vcmp.ge.f32.partialorder %v882, 0.0
    %vm947 = vcmp.ge.f32.partialorder %v883, 0.0
    %vm948 = vcmp.ge.f32.partialorder %v884, 0.0
    %vm949 = vcmp.ge.f32.partialorder %v885, 0.0
    %vm950 = vcmp.ge.f32.partialorder %v886, 0.0
    %vm951 = vcmp.ge.f32.partialorder %v887, 0.0
    %vm952 = vcmp.ge.f32.partialorder %v888, 0.0
    %vm953 = vcmp.ge.f32.partialorder %v889, 0.0
    %vm954 = vcmp.ge.f32.partialorder %v890, 0.0
    %vm955 = vcmp.ge.f32.partialorder %v891, 0.0
    %vm956 = vcmp.ge.f32.partialorder %v892, 0.0
    %vm957 = vcmp.ge.f32.partialorder %v893, 0.0
    %vm958 = vcmp.ge.f32.partialorder %v894, 0.0
    %vm959 = vcmp.ge.f32.partialorder %v895, 0.0
    %vm960 = vcmp.ge.f32.partialorder %v896, 0.0
    %vm961 = vcmp.ge.f32.partialorder %v897, 0.0
    %vm962 = vcmp.ge.f32.partialorder %v898, 0.0
    %vm963 = vcmp.ge.f32.partialorder %v899, 0.0
    %vm964 = vcmp.ge.f32.partialorder %v900, 0.0
    %vm965 = vcmp.ge.f32.partialorder %v901, 0.0
    %vm966 = vcmp.ge.f32.partialorder %v902, 0.0
    %vm967 = vcmp.ge.f32.partialorder %v903, 0.0
    %vm968 = vcmp.ge.f32.partialorder %v904, 0.0
    %vm969 = vcmp.ge.f32.partialorder %v905, 0.0
    %vm970 = vcmp.ge.f32.partialorder %v906, 0.0
    %vm971 = vcmp.ge.f32.partialorder %v907, 0.0
    %vm972 = vcmp.ge.f32.partialorder %v908, 0.0
    %vm973 = vcmp.ge.f32.partialorder %v909, 0.0
    %vm974 = vcmp.ge.f32.partialorder %v910, 0.0
    %vm975 = vcmp.ge.f32.partialorder %v911, 0.0
    %vm976 = vcmp.ge.f32.partialorder %v912, 0.0
    %vm977 = vcmp.ge.f32.partialorder %v913, 0.0
    %vm978 = vcmp.ge.f32.partialorder %v914, 0.0
    %vm979 = vcmp.ge.f32.partialorder %v915, 0.0
    %vm980 = vcmp.ge.f32.partialorder %v916, 0.0
    %vm981 = vcmp.ge.f32.partialorder %v917, 0.0
    %vm982 = vcmp.ge.f32.partialorder %v918, 0.0
    %vm983 = vcmp.ge.f32.partialorder %v919, 0.0
    %vm984 = vcmp.ge.f32.partialorder %v920, 0.0
    %vm985 = vcmp.ge.f32.partialorder %v921, 0.0
    %vm986 = vcmp.ge.f32.partialorder %v922, 0.0
    %vm987 = vcmp.ge.f32.partialorder %v923, 0.0
    %vm988 = vcmp.ge.f32.partialorder %v924, 0.0
    %vm989 = vcmp.ge.f32.partialorder %v925, 0.0
    %v990 = vmul.f32 %v862, 0.01
    %v991 = vmul.f32 %v863, 0.01
    %v992 = vmul.f32 %v864, 0.01
    %v993 = vmul.f32 %v865, 0.01
    %v994 = vmul.f32 %v866, 0.01
    %v995 = vmul.f32 %v867, 0.01
    %v996 = vmul.f32 %v868, 0.01
    %v997 = vmul.f32 %v869, 0.01
    %v998 = vmul.f32 %v870, 0.01
    %v999 = vmul.f32 %v871, 0.01
    %v1000 = vmul.f32 %v872, 0.01
    %v1001 = vmul.f32 %v873, 0.01
    %v1002 = vmul.f32 %v874, 0.01
    %v1003 = vmul.f32 %v875, 0.01
    %v1004 = vmul.f32 %v876, 0.01
    %v1005 = vmul.f32 %v877, 0.01
    %v1006 = vmul.f32 %v878, 0.01
    %v1007 = vmul.f32 %v879, 0.01
    %v1008 = vmul.f32 %v880, 0.01
    %v1009 = vmul.f32 %v881, 0.01
    %v1010 = vmul.f32 %v882, 0.01
    %v1011 = vmul.f32 %v883, 0.01
    %v1012 = vmul.f32 %v884, 0.01
    %v1013 = vmul.f32 %v885, 0.01
    %v1014 = vmul.f32 %v886, 0.01
    %v1015 = vmul.f32 %v887, 0.01
    %v1016 = vmul.f32 %v888, 0.01
    %v1017 = vmul.f32 %v889, 0.01
    %v1018 = vmul.f32 %v890, 0.01
    %v1019 = vmul.f32 %v891, 0.01
    %v1020 = vmul.f32 %v892, 0.01
    %v1021 = vmul.f32 %v893, 0.01
    %v1022 = vmul.f32 %v894, 0.01
    %v1023 = vmul.f32 %v895, 0.01
    %v1024 = vmul.f32 %v896, 0.01
    %v1025 = vmul.f32 %v897, 0.01
    %v1026 = vmul.f32 %v898, 0.01
    %v1027 = vmul.f32 %v899, 0.01
    %v1028 = vmul.f32 %v900, 0.01
    %v1029 = vmul.f32 %v901, 0.01
    %v1030 = vmul.f32 %v902, 0.01
    %v1031 = vmul.f32 %v903, 0.01
    %v1032 = vmul.f32 %v904, 0.01
    %v1033 = vmul.f32 %v905, 0.01
    %v1034 = vmul.f32 %v906, 0.01
    %v1035 = vmul.f32 %v907, 0.01
    %v1036 = vmul.f32 %v908, 0.01
    %v1037 = vmul.f32 %v909, 0.01
    %v1038 = vmul.f32 %v910, 0.01
    %v1039 = vmul.f32 %v911, 0.01
    %v1040 = vmul.f32 %v912, 0.01
    %v1041 = vmul.f32 %v913, 0.01
    %v1042 = vmul.f32 %v914, 0.01
    %v1043 = vmul.f32 %v915, 0.01
    %v1044 = vmul.f32 %v916, 0.01
    %v1045 = vmul.f32 %v917, 0.01
    %v1046 = vmul.f32 %v918, 0.01
    %v1047 = vmul.f32 %v919, 0.01
    %v1048 = vmul.f32 %v920, 0.01
    %v1049 = vmul.f32 %v921, 0.01
    %v1050 = vmul.f32 %v922, 0.01
    %v1051 = vmul.f32 %v923, 0.01
    %v1052 = vmul.f32 %v924, 0.01
    %v1053 = vmul.f32 %v925, 0.01
    %v1054 = vsel %vm926, %v862, %v990
    %v1055 = vsel %vm927, %v863, %v991
    %v1056 = vsel %vm928, %v864, %v992
    %v1057 = vsel %vm929, %v865, %v993
    %v1058 = vsel %vm930, %v866, %v994
    %v1059 = vsel %vm931, %v867, %v995
    %v1060 = vsel %vm932, %v868, %v996
    %v1061 = vsel %vm933, %v869, %v997
    %v1062 = vsel %vm934, %v870, %v998
    %v1063 = vsel %vm935, %v871, %v999
    %v1064 = vsel %vm936, %v872, %v1000
    %v1065 = vsel %vm937, %v873, %v1001
    %v1066 = vsel %vm938, %v874, %v1002
    %v1067 = vsel %vm939, %v875, %v1003
    %v1068 = vsel %vm940, %v876, %v1004
    %v1069 = vsel %vm941, %v877, %v1005
    %v1070 = vsel %vm942, %v878, %v1006
    %v1071 = vsel %vm943, %v879, %v1007
    %v1072 = vsel %vm944, %v880, %v1008
    %v1073 = vsel %vm945, %v881, %v1009
    %v1074 = vsel %vm946, %v882, %v1010
    %v1075 = vsel %vm947, %v883, %v1011
    %v1076 = vsel %vm948, %v884, %v1012
    %v1077 = vsel %vm949, %v885, %v1013
    %v1078 = vsel %vm950, %v886, %v1014
    %v1079 = vsel %vm951, %v887, %v1015
    %v1080 = vsel %vm952, %v888, %v1016
    %v1081 = vsel %vm953, %v889, %v1017
    %v1082 = vsel %vm954, %v890, %v1018
    %v1083 = vsel %vm955, %v891, %v1019
    %v1084 = vsel %vm956, %v892, %v1020
    %v1085 = vsel %vm957, %v893, %v1021
    %v1086 = vsel %vm958, %v894, %v1022
    %v1087 = vsel %vm959, %v895, %v1023
    %v1088 = vsel %vm960, %v896, %v1024
    %v1089 = vsel %vm961, %v897, %v1025
    %v1090 = vsel %vm962, %v898, %v1026
    %v1091 = vsel %vm963, %v899, %v1027
    %v1092 = vsel %vm964, %v900, %v1028
    %v1093 = vsel %vm965, %v901, %v1029
    %v1094 = vsel %vm966, %v902, %v1030
    %v1095 = vsel %vm967, %v903, %v1031
    %v1096 = vsel %vm968, %v904, %v1032
    %v1097 = vsel %vm969, %v905, %v1033
    %v1098 = vsel %vm970, %v906, %v1034
    %v1099 = vsel %vm971, %v907, %v1035
    %v1100 = vsel %vm972, %v908, %v1036
    %v1101 = vsel %vm973, %v909, %v1037
    %v1102 = vsel %vm974, %v910, %v1038
    %v1103 = vsel %vm975, %v911, %v1039
    %v1104 = vsel %vm976, %v912, %v1040
    %v1105 = vsel %vm977, %v913, %v1041
    %v1106 = vsel %vm978, %v914, %v1042
    %v1107 = vsel %vm979, %v915, %v1043
    %v1108 = vsel %vm980, %v916, %v1044
    %v1109 = vsel %vm981, %v917, %v1045
    %v1110 = vsel %vm982, %v918, %v1046
    %v1111 = vsel %vm983, %v919, %v1047
    %v1112 = vsel %vm984, %v920, %v1048
    %v1113 = vsel %vm985, %v921, %v1049
    %v1114 = vsel %vm986, %v922, %v1050
    %v1115 = vsel %vm987, %v923, %v1051
    %v1116 = vsel %vm988, %v924, %v1052
    %v1117 = vsel %vm989, %v925, %v1053
    %v1118 = vpack.c.bf16 %v1054, %v1054
    %v1119 = vpack.c.bf16 %v1055, %v1055
    %v1120 = vpack.c.bf16 %v1056, %v1056
    %v1121 = vpack.c.bf16 %v1057, %v1057
    %v1122 = vpack.c.bf16 %v1058, %v1058
    %v1123 = vpack.c.bf16 %v1059, %v1059
    %v1124 = vpack.c.bf16 %v1060, %v1060
    %v1125 = vpack.c.bf16 %v1061, %v1061
    %v1126 = vpack.c.bf16 %v1062, %v1062
    %v1127 = vpack.c.bf16 %v1063, %v1063
    %v1128 = vpack.c.bf16 %v1064, %v1064
    %v1129 = vpack.c.bf16 %v1065, %v1065
    %v1130 = vpack.c.bf16 %v1066, %v1066
    %v1131 = vpack.c.bf16 %v1067, %v1067
    %v1132 = vpack.c.bf16 %v1068, %v1068
    %v1133 = vpack.c.bf16 %v1069, %v1069
    %v1134 = vpack.c.bf16 %v1070, %v1070
    %v1135 = vpack.c.bf16 %v1071, %v1071
    %v1136 = vpack.c.bf16 %v1072, %v1072
    %v1137 = vpack.c.bf16 %v1073, %v1073
    %v1138 = vpack.c.bf16 %v1074, %v1074
    %v1139 = vpack.c.bf16 %v1075, %v1075
    %v1140 = vpack.c.bf16 %v1076, %v1076
    %v1141 = vpack.c.bf16 %v1077, %v1077
    %v1142 = vpack.c.bf16 %v1078, %v1078
    %v1143 = vpack.c.bf16 %v1079, %v1079
    %v1144 = vpack.c.bf16 %v1080, %v1080
    %v1145 = vpack.c.bf16 %v1081, %v1081
    %v1146 = vpack.c.bf16 %v1082, %v1082
    %v1147 = vpack.c.bf16 %v1083, %v1083
    %v1148 = vpack.c.bf16 %v1084, %v1084
    %v1149 = vpack.c.bf16 %v1085, %v1085
    %v1150 = vpack.c.bf16 %v1086, %v1086
    %v1151 = vpack.c.bf16 %v1087, %v1087
    %v1152 = vpack.c.bf16 %v1088, %v1088
    %v1153 = vpack.c.bf16 %v1089, %v1089
    %v1154 = vpack.c.bf16 %v1090, %v1090
    %v1155 = vpack.c.bf16 %v1091, %v1091
    %v1156 = vpack.c.bf16 %v1092, %v1092
    %v1157 = vpack.c.bf16 %v1093, %v1093
    %v1158 = vpack.c.bf16 %v1094, %v1094
    %v1159 = vpack.c.bf16 %v1095, %v1095
    %v1160 = vpack.c.bf16 %v1096, %v1096
    %v1161 = vpack.c.bf16 %v1097, %v1097
    %v1162 = vpack.c.bf16 %v1098, %v1098
    %v1163 = vpack.c.bf16 %v1099, %v1099
    %v1164 = vpack.c.bf16 %v1100, %v1100
    %v1165 = vpack.c.bf16 %v1101, %v1101
    %v1166 = vpack.c.bf16 %v1102, %v1102
    %v1167 = vpack.c.bf16 %v1103, %v1103
    %v1168 = vpack.c.bf16 %v1104, %v1104
    %v1169 = vpack.c.bf16 %v1105, %v1105
    %v1170 = vpack.c.bf16 %v1106, %v1106
    %v1171 = vpack.c.bf16 %v1107, %v1107
    %v1172 = vpack.c.bf16 %v1108, %v1108
    %v1173 = vpack.c.bf16 %v1109, %v1109
    %v1174 = vpack.c.bf16 %v1110, %v1110
    %v1175 = vpack.c.bf16 %v1111, %v1111
    %v1176 = vpack.c.bf16 %v1112, %v1112
    %v1177 = vpack.c.bf16 %v1113, %v1113
    %v1178 = vpack.c.bf16 %v1114, %v1114
    %v1179 = vpack.c.bf16 %v1115, %v1115
    %v1180 = vpack.c.bf16 %v1116, %v1116
    %v1181 = vpack.c.bf16 %v1117, %v1117
    %vm1182 = vcmask 60416
    %1183 = vst.msk [vmem:[%s3] sm:$0xf] %vm1182, %v1118
    %1184 = vst.msk [vmem:[%s3 + $0x4] sm:$0xf] %vm1182, %v1119
    %1185 = vst.msk [vmem:[%s3 + $0x8] sm:$0xf] %vm1182, %v1120
    %1186 = vst.msk [vmem:[%s3 + $0xc] sm:$0xf] %vm1182, %v1121
    %1187 = vst.msk [vmem:[%s3 + $0x10] sm:$0xf] %vm1182, %v1122
    %1188 = vst.msk [vmem:[%s3 + $0x14] sm:$0xf] %vm1182, %v1123
    %1189 = vst.msk [vmem:[%s3 + $0x18] sm:$0xf] %vm1182, %v1124
    %1190 = vst.msk [vmem:[%s3 + $0x1c] sm:$0xf] %vm1182, %v1125
    %1191 = vst.msk [vmem:[%s3 + $0x20] sm:$0xf] %vm1182, %v1126
    %1192 = vst.msk [vmem:[%s3 + $0x24] sm:$0xf] %vm1182, %v1127
    %1193 = vst.msk [vmem:[%s3 + $0x28] sm:$0xf] %vm1182, %v1128
    %1194 = vst.msk [vmem:[%s3 + $0x2c] sm:$0xf] %vm1182, %v1129
    %1195 = vst.msk [vmem:[%s3 + $0x30] sm:$0xf] %vm1182, %v1130
    %1196 = vst.msk [vmem:[%s3 + $0x34] sm:$0xf] %vm1182, %v1131
    %1197 = vst.msk [vmem:[%s3 + $0x38] sm:$0xf] %vm1182, %v1132
    %1198 = vst.msk [vmem:[%s3 + $0x3c] sm:$0xf] %vm1182, %v1133
    %1199 = vst.msk [vmem:[%s3 + $0x40] sm:$0xf] %vm1182, %v1134
    %1200 = vst.msk [vmem:[%s3 + $0x44] sm:$0xf] %vm1182, %v1135
    %1201 = vst.msk [vmem:[%s3 + $0x48] sm:$0xf] %vm1182, %v1136
    %1202 = vst.msk [vmem:[%s3 + $0x4c] sm:$0xf] %vm1182, %v1137
    %1203 = vst.msk [vmem:[%s3 + $0x50] sm:$0xf] %vm1182, %v1138
    %1204 = vst.msk [vmem:[%s3 + $0x54] sm:$0xf] %vm1182, %v1139
    %1205 = vst.msk [vmem:[%s3 + $0x58] sm:$0xf] %vm1182, %v1140
    %1206 = vst.msk [vmem:[%s3 + $0x5c] sm:$0xf] %vm1182, %v1141
    %1207 = vst.msk [vmem:[%s3 + $0x60] sm:$0xf] %vm1182, %v1142
    %1208 = vst.msk [vmem:[%s3 + $0x64] sm:$0xf] %vm1182, %v1143
    %1209 = vst.msk [vmem:[%s3 + $0x68] sm:$0xf] %vm1182, %v1144
    %1210 = vst.msk [vmem:[%s3 + $0x6c] sm:$0xf] %vm1182, %v1145
    %1211 = vst.msk [vmem:[%s3 + $0x70] sm:$0xf] %vm1182, %v1146
    %1212 = vst.msk [vmem:[%s3 + $0x74] sm:$0xf] %vm1182, %v1147
    %1213 = vst.msk [vmem:[%s3 + $0x78] sm:$0xf] %vm1182, %v1148
    %1214 = vst.msk [vmem:[%s3 + $0x7c] sm:$0xf] %vm1182, %v1149
    %1215 = vst.msk [vmem:[%s3 + $0x80] sm:$0xf] %vm1182, %v1150
    %1216 = vst.msk [vmem:[%s3 + $0x84] sm:$0xf] %vm1182, %v1151
    %1217 = vst.msk [vmem:[%s3 + $0x88] sm:$0xf] %vm1182, %v1152
    %1218 = vst.msk [vmem:[%s3 + $0x8c] sm:$0xf] %vm1182, %v1153
    %1219 = vst.msk [vmem:[%s3 + $0x90] sm:$0xf] %vm1182, %v1154
    %1220 = vst.msk [vmem:[%s3 + $0x94] sm:$0xf] %vm1182, %v1155
    %1221 = vst.msk [vmem:[%s3 + $0x98] sm:$0xf] %vm1182, %v1156
    %1222 = vst.msk [vmem:[%s3 + $0x9c] sm:$0xf] %vm1182, %v1157
    %1223 = vst.msk [vmem:[%s3 + $0xa0] sm:$0xf] %vm1182, %v1158
    %1224 = vst.msk [vmem:[%s3 + $0xa4] sm:$0xf] %vm1182, %v1159
    %1225 = vst.msk [vmem:[%s3 + $0xa8] sm:$0xf] %vm1182, %v1160
    %1226 = vst.msk [vmem:[%s3 + $0xac] sm:$0xf] %vm1182, %v1161
    %1227 = vst.msk [vmem:[%s3 + $0xb0] sm:$0xf] %vm1182, %v1162
    %1228 = vst.msk [vmem:[%s3 + $0xb4] sm:$0xf] %vm1182, %v1163
    %1229 = vst.msk [vmem:[%s3 + $0xb8] sm:$0xf] %vm1182, %v1164
    %1230 = vst.msk [vmem:[%s3 + $0xbc] sm:$0xf] %vm1182, %v1165
    %1231 = vst.msk [vmem:[%s3 + $0xc0] sm:$0xf] %vm1182, %v1166
    %1232 = vst.msk [vmem:[%s3 + $0xc4] sm:$0xf] %vm1182, %v1167
    %1233 = vst.msk [vmem:[%s3 + $0xc8] sm:$0xf] %vm1182, %v1168
    %1234 = vst.msk [vmem:[%s3 + $0xcc] sm:$0xf] %vm1182, %v1169
    %1235 = vst.msk [vmem:[%s3 + $0xd0] sm:$0xf] %vm1182, %v1170
    %1236 = vst.msk [vmem:[%s3 + $0xd4] sm:$0xf] %vm1182, %v1171
    %1237 = vst.msk [vmem:[%s3 + $0xd8] sm:$0xf] %vm1182, %v1172
    %1238 = vst.msk [vmem:[%s3 + $0xdc] sm:$0xf] %vm1182, %v1173
    %1239 = vst.msk [vmem:[%s3 + $0xe0] sm:$0xf] %vm1182, %v1174
    %1240 = vst.msk [vmem:[%s3 + $0xe4] sm:$0xf] %vm1182, %v1175
    %1241 = vst.msk [vmem:[%s3 + $0xe8] sm:$0xf] %vm1182, %v1176
    %1242 = vst.msk [vmem:[%s3 + $0xec] sm:$0xf] %vm1182, %v1177
    %1243 = vst.msk [vmem:[%s3 + $0xf0] sm:$0xf] %vm1182, %v1178
    %1244 = vst.msk [vmem:[%s3 + $0xf4] sm:$0xf] %vm1182, %v1179
    %1245 = vst.msk [vmem:[%s3 + $0xf8] sm:$0xf] %vm1182, %v1180
    %1246 = vst.msk [vmem:[%s3 + $0xfc] sm:$0xf] %vm1182, %v1181
  $region21: #{discriminator_forward.5} parent=0 // pred_fallthru
    _
  // Predicated region
  $region22: #{discriminator_forward.5} parent=0 // pred_check
    _
  $region23: #{discriminator_forward.5} parent=0 // pred_check_branch
    %1248 = sbr.rel (0) target = $region25
  $region24: #{discriminator_forward.5} parent=0 // pred_region
    _
  $region25: #{discriminator_forward.5} parent=0 // pred_fallthru
    _
  // Predicated region
  $region26: #{discriminator_forward.5} parent=0 // pred_check
    _
  $region27: #{discriminator_forward.5} parent=0 // pred_check_branch
    %1250 = sbr.rel (0) target = $region29
  $region28: #{discriminator_forward.5} parent=0 // pred_region
    _
  $region29: #{discriminator_forward.5} parent=0 // pred_fallthru
    _

// kernel: discriminator_forward.6
$region0: #{discriminator_forward.6}
  #allocation0 [shape = 'u32[]', space=smem, size = 0x4, offset = 0x4, fixed_abs, tag = 'smem constant byte address 0x4 - core index']
  #allocation1 [shape = 'u32[72,128]{1,0:T(1,128)}', space=vmem, size = 0x9000, scoped, tag = 'internal scratch']
  #allocation2 [shape = 'f32[128,16]{1,0:T(8,128)}', space=vmem, size = 0x10000, scoped, tag = 'scratch operand']
  %s0 = inlined_call_operand.vmem [shape: bf16[128,128], index: 0, kind: input, shape index: {}]
  %s1 = inlined_call_operand.vmem [shape: bf16[128,16], index: 1, kind: input, shape index: {}]
  %s2 = inlined_call_operand.vmem [shape: f32[1,16], index: 2, kind: input, shape index: {}]
  %s3 = inlined_call_operand.vmem [shape: bf16[128,16], index: 3, kind: output, shape index: {}]
  %s4 = sld [smem:[#allocation0]]
  $region30: #{discriminator_forward.6} parent=0
    _
  %s6 = ssub.s32 1, %s4
  %s7 = scalar_select 0, %s6, %s4
  // Predicated region
  $region2: #{discriminator_forward.6} parent=0 // pred_check
    _
  $region3: #{discriminator_forward.6} parent=0 // pred_check_branch
    %9 = sbr.rel (0) target = $region5
  $region4: #{discriminator_forward.6} parent=0 // pred_region
    _
  $region5: #{discriminator_forward.6} parent=0 // pred_fallthru
    _
  // Predicated region
  $region6: #{discriminator_forward.6} parent=0 // pred_check
    _
  $region7: #{discriminator_forward.6} parent=0 // pred_check_branch
    %11 = sbr.rel (0) target = $region9
  $region8: #{discriminator_forward.6} parent=0 // pred_region
    _
  $region9: #{discriminator_forward.6} parent=0 // pred_fallthru
    _
  // Predicated region
  $region10: #{discriminator_forward.6} parent=0 // pred_check
    _
  $region11: #{discriminator_forward.6} parent=0 // pred_check_branch
    %13 = sbr.rel (0) target = $region13
  $region12: #{discriminator_forward.6} parent=0 // pred_region
    _
  $region13: #{discriminator_forward.6} parent=0 // pred_fallthru
    _
  %p14 = scmp.eq.s32.totalorder 0, 0
  // Predicated region
  $region14: #{discriminator_forward.6} parent=0 // pred_check
    %p15 = pneg %p14
  $region15: #{discriminator_forward.6} parent=0 // pred_check_branch
    %17 = sbr.rel (%p15) target = $region17
  $region16: #{discriminator_forward.6} parent=0 // pred_region
    %vm18 = vcmask 130048
    %19 = vst.msk [vmem:[#allocation2] sm:$0xff] %vm18, 0.0
    %20 = vst.msk [vmem:[#allocation2 + $0x8] sm:$0xff] %vm18, 0.0
    %21 = vst.msk [vmem:[#allocation2 + $0x10] sm:$0xff] %vm18, 0.0
    %22 = vst.msk [vmem:[#allocation2 + $0x18] sm:$0xff] %vm18, 0.0
    %23 = vst.msk [vmem:[#allocation2 + $0x20] sm:$0xff] %vm18, 0.0
    %24 = vst.msk [vmem:[#allocation2 + $0x28] sm:$0xff] %vm18, 0.0
    %25 = vst.msk [vmem:[#allocation2 + $0x30] sm:$0xff] %vm18, 0.0
    %26 = vst.msk [vmem:[#allocation2 + $0x38] sm:$0xff] %vm18, 0.0
    %27 = vst.msk [vmem:[#allocation2 + $0x40] sm:$0xff] %vm18, 0.0
    %28 = vst.msk [vmem:[#allocation2 + $0x48] sm:$0xff] %vm18, 0.0
    %29 = vst.msk [vmem:[#allocation2 + $0x50] sm:$0xff] %vm18, 0.0
    %30 = vst.msk [vmem:[#allocation2 + $0x58] sm:$0xff] %vm18, 0.0
    %31 = vst.msk [vmem:[#allocation2 + $0x60] sm:$0xff] %vm18, 0.0
    %32 = vst.msk [vmem:[#allocation2 + $0x68] sm:$0xff] %vm18, 0.0
    %33 = vst.msk [vmem:[#allocation2 + $0x70] sm:$0xff] %vm18, 0.0
    %34 = vst.msk [vmem:[#allocation2 + $0x78] sm:$0xff] %vm18, 0.0
  $region17: #{discriminator_forward.6} parent=0 // pred_fallthru
    _
  %v35 = vld [vmem:[#allocation2] sm:$0xff]
  %v36 = vld [vmem:[#allocation2 + $0x8] sm:$0xff]
  %v37 = vld [vmem:[#allocation2 + $0x10] sm:$0xff]
  %v38 = vld [vmem:[#allocation2 + $0x18] sm:$0xff]
  %v39 = vld [vmem:[#allocation2 + $0x20] sm:$0xff]
  %v40 = vld [vmem:[#allocation2 + $0x28] sm:$0xff]
  %v41 = vld [vmem:[#allocation2 + $0x30] sm:$0xff]
  %v42 = vld [vmem:[#allocation2 + $0x38] sm:$0xff]
  %v43 = vld [vmem:[#allocation2 + $0x40] sm:$0xff]
  %v44 = vld [vmem:[#allocation2 + $0x48] sm:$0xff]
  %v45 = vld [vmem:[#allocation2 + $0x50] sm:$0xff]
  %v46 = vld [vmem:[#allocation2 + $0x58] sm:$0xff]
  %v47 = vld [vmem:[#allocation2 + $0x60] sm:$0xff]
  %v48 = vld [vmem:[#allocation2 + $0x68] sm:$0xff]
  %v49 = vld [vmem:[#allocation2 + $0x70] sm:$0xff]
  %v50 = vld [vmem:[#allocation2 + $0x78] sm:$0xff]
  %v51 = vld [vmem:[%s0] sm:$0xf]
  %v52 = vld [vmem:[%s0 + $0x4] sm:$0xf]
  %v53 = vld [vmem:[%s0 + $0x8] sm:$0xf]
  %v54 = vld [vmem:[%s0 + $0xc] sm:$0xf]
  %v55 = vld [vmem:[%s0 + $0x10] sm:$0xf]
  %v56 = vld [vmem:[%s0 + $0x14] sm:$0xf]
  %v57 = vld [vmem:[%s0 + $0x18] sm:$0xf]
  %v58 = vld [vmem:[%s0 + $0x1c] sm:$0xf]
  %v59 = vld [vmem:[%s0 + $0x20] sm:$0xf]
  %v60 = vld [vmem:[%s0 + $0x24] sm:$0xf]
  %v61 = vld [vmem:[%s0 + $0x28] sm:$0xf]
  %v62 = vld [vmem:[%s0 + $0x2c] sm:$0xf]
  %v63 = vld [vmem:[%s0 + $0x30] sm:$0xf]
  %v64 = vld [vmem:[%s0 + $0x34] sm:$0xf]
  %v65 = vld [vmem:[%s0 + $0x38] sm:$0xf]
  %v66 = vld [vmem:[%s0 + $0x3c] sm:$0xf]
  %v67 = vld [vmem:[%s1] sm:$0xf]
  %v68 = vld [vmem:[%s1 + $0x4] sm:$0xf]
  %v69 = vld [vmem:[%s1 + $0x8] sm:$0xf]
  %v70 = vld [vmem:[%s1 + $0xc] sm:$0xf]
  %v71 = vld [vmem:[%s1 + $0x10] sm:$0xf]
  %v72 = vld [vmem:[%s1 + $0x14] sm:$0xf]
  %v73 = vld [vmem:[%s1 + $0x18] sm:$0xf]
  %v74 = vld [vmem:[%s1 + $0x1c] sm:$0xf]
  %v75 = vld [vmem:[%s1 + $0x20] sm:$0xf]
  %v76 = vld [vmem:[%s1 + $0x24] sm:$0xf]
  %v77 = vld [vmem:[%s1 + $0x28] sm:$0xf]
  %v78 = vld [vmem:[%s1 + $0x2c] sm:$0xf]
  %v79 = vld [vmem:[%s1 + $0x30] sm:$0xf]
  %v80 = vld [vmem:[%s1 + $0x34] sm:$0xf]
  %v81 = vld [vmem:[%s1 + $0x38] sm:$0xf]
  %v82 = vld [vmem:[%s1 + $0x3c] sm:$0xf]
  %v99 = vunpack.c.l.b16 %v51
  %v100 = vunpack.c.l.b16 %v52
  %v101 = vunpack.c.l.b16 %v53
  %v102 = vunpack.c.l.b16 %v54
  %v103 = vunpack.c.l.b16 %v55
  %v104 = vunpack.c.l.b16 %v56
  %v105 = vunpack.c.l.b16 %v57
  %v106 = vunpack.c.l.b16 %v58
  %v107 = vunpack.c.l.b16 %v59
  %v108 = vunpack.c.l.b16 %v60
  %v109 = vunpack.c.l.b16 %v61
  %v110 = vunpack.c.l.b16 %v62
  %v111 = vunpack.c.l.b16 %v63
  %v112 = vunpack.c.l.b16 %v64
  %v113 = vunpack.c.l.b16 %v65
  %v114 = vunpack.c.l.b16 %v66
  %v115 = vpack.c.b16 %v100, %v99
  %v116 = vpack.c.b16 %v102, %v101
  %v117 = vpack.c.b16 %v104, %v103
  %v118 = vpack.c.b16 %v106, %v105
  %v119 = vpack.c.b16 %v108, %v107
  %v120 = vpack.c.b16 %v110, %v109
  %v121 = vpack.c.b16 %v112, %v111
  %v122 = vpack.c.b16 %v114, %v113
  %v147 = vunpack.c.l.b16 %v67
  %v148 = vunpack.c.l.b16 %v68
  %v149 = vunpack.c.l.b16 %v69
  %v150 = vunpack.c.l.b16 %v70
  %v151 = vunpack.c.l.b16 %v71
  %v152 = vunpack.c.l.b16 %v72
  %v153 = vunpack.c.l.b16 %v73
  %v154 = vunpack.c.l.b16 %v74
  %v155 = vunpack.c.l.b16 %v75
  %v156 = vunpack.c.l.b16 %v76
  %v157 = vunpack.c.l.b16 %v77
  %v158 = vunpack.c.l.b16 %v78
  %v159 = vunpack.c.l.b16 %v79
  %v160 = vunpack.c.l.b16 %v80
  %v161 = vunpack.c.l.b16 %v81
  %v162 = vunpack.c.l.b16 %v82
  %v163 = vpack.c.b16 %v148, %v147
  %v164 = vpack.c.b16 %v150, %v149
  %v165 = vpack.c.b16 %v152, %v151
  %v166 = vpack.c.b16 %v154, %v153
  %v167 = vpack.c.b16 %v156, %v155
  %v168 = vpack.c.b16 %v158, %v157
  %v169 = vpack.c.b16 %v160, %v159
  %v170 = vpack.c.b16 %v162, %v161
  %179 = vmatpush.bf16.msra.mxu0 %v170
  %180 = vmatpush.bf16.msra.mxu0 %v169
  %181 = vmatpush.bf16.msra.mxu0 %v168
  %182 = vmatpush.bf16.msra.mxu0 %v167
  %183 = vmatpush.bf16.msra.mxu0 %v166
  %184 = vmatpush.bf16.msra.mxu0 %v165
  %185 = vmatpush.bf16.msra.mxu0 %v164
  %186 = vmatpush.bf16.msra.mxu0 %v163
  %187 = vmatmul.bf16.gmra.mxu0 %v115
  %v188 = vpop.f32.mrf.mxu0
  %v189 = vadd.f32 0.0, %v188
  %v190 = vpop.f32.mrf.mxu0
  %v191 = vadd.f32 0.0, %v190
  %192 = vmatmul.bf16.gmra.mxu0 %v116
  %v193 = vpop.f32.mrf.mxu0
  %v194 = vadd.f32 0.0, %v193
  %v195 = vpop.f32.mrf.mxu0
  %v196 = vadd.f32 0.0, %v195
  %197 = vmatmul.bf16.gmra.mxu0 %v117
  %v198 = vpop.f32.mrf.mxu0
  %v199 = vadd.f32 0.0, %v198
  %v200 = vpop.f32.mrf.mxu0
  %v201 = vadd.f32 0.0, %v200
  %202 = vmatmul.bf16.gmra.mxu0 %v118
  %v203 = vpop.f32.mrf.mxu0
  %v204 = vadd.f32 0.0, %v203
  %v205 = vpop.f32.mrf.mxu0
  %v206 = vadd.f32 0.0, %v205
  %207 = vmatmul.bf16.gmra.mxu0 %v119
  %v208 = vpop.f32.mrf.mxu0
  %v209 = vadd.f32 0.0, %v208
  %v210 = vpop.f32.mrf.mxu0
  %v211 = vadd.f32 0.0, %v210
  %212 = vmatmul.bf16.gmra.mxu0 %v120
  %v213 = vpop.f32.mrf.mxu0
  %v214 = vadd.f32 0.0, %v213
  %v215 = vpop.f32.mrf.mxu0
  %v216 = vadd.f32 0.0, %v215
  %217 = vmatmul.bf16.gmra.mxu0 %v121
  %v218 = vpop.f32.mrf.mxu0
  %v219 = vadd.f32 0.0, %v218
  %v220 = vpop.f32.mrf.mxu0
  %v221 = vadd.f32 0.0, %v220
  %222 = vmatmul.bf16.gmra.mxu0 %v122
  %v223 = vpop.f32.mrf.mxu0
  %v224 = vadd.f32 0.0, %v223
  %v225 = vpop.f32.mrf.mxu0
  %v226 = vadd.f32 0.0, %v225
  %227 = vdwg.mxu0
  %v228 = vadd.f32 %v35, %v189
  %v229 = vadd.f32 %v36, %v191
  %v230 = vadd.f32 %v37, %v194
  %v231 = vadd.f32 %v38, %v196
  %v232 = vadd.f32 %v39, %v199
  %v233 = vadd.f32 %v40, %v201
  %v234 = vadd.f32 %v41, %v204
  %v235 = vadd.f32 %v42, %v206
  %v236 = vadd.f32 %v43, %v209
  %v237 = vadd.f32 %v44, %v211
  %v238 = vadd.f32 %v45, %v214
  %v239 = vadd.f32 %v46, %v216
  %v240 = vadd.f32 %v47, %v219
  %v241 = vadd.f32 %v48, %v221
  %v242 = vadd.f32 %v49, %v224
  %v243 = vadd.f32 %v50, %v226
  %vm244 = vcmask 130048
  %245 = vst.msk [vmem:[#allocation2] sm:$0xff] %vm244, %v228
  %246 = vst.msk [vmem:[#allocation2 + $0x8] sm:$0xff] %vm244, %v229
  %247 = vst.msk [vmem:[#allocation2 + $0x10] sm:$0xff] %vm244, %v230
  %248 = vst.msk [vmem:[#allocation2 + $0x18] sm:$0xff] %vm244, %v231
  %249 = vst.msk [vmem:[#allocation2 + $0x20] sm:$0xff] %vm244, %v232
  %250 = vst.msk [vmem:[#allocation2 + $0x28] sm:$0xff] %vm244, %v233
  %251 = vst.msk [vmem:[#allocation2 + $0x30] sm:$0xff] %vm244, %v234
  %252 = vst.msk [vmem:[#allocation2 + $0x38] sm:$0xff] %vm244, %v235
  %253 = vst.msk [vmem:[#allocation2 + $0x40] sm:$0xff] %vm244, %v236
  %254 = vst.msk [vmem:[#allocation2 + $0x48] sm:$0xff] %vm244, %v237
  %255 = vst.msk [vmem:[#allocation2 + $0x50] sm:$0xff] %vm244, %v238
  %256 = vst.msk [vmem:[#allocation2 + $0x58] sm:$0xff] %vm244, %v239
  %257 = vst.msk [vmem:[#allocation2 + $0x60] sm:$0xff] %vm244, %v240
  %258 = vst.msk [vmem:[#allocation2 + $0x68] sm:$0xff] %vm244, %v241
  %259 = vst.msk [vmem:[#allocation2 + $0x70] sm:$0xff] %vm244, %v242
  %260 = vst.msk [vmem:[#allocation2 + $0x78] sm:$0xff] %vm244, %v243
  // Predicated region
  $region18: #{discriminator_forward.6} parent=0 // pred_check
    %p261 = pneg %p14
  $region19: #{discriminator_forward.6} parent=0 // pred_check_branch
    %263 = sbr.rel (%p261) target = $region21
  $region20: #{discriminator_forward.6} parent=0 // pred_region
    %v264 = vld [vmem:[#allocation2] sm:$0xff]
    %v265 = vld [vmem:[#allocation2 + $0x8] sm:$0xff]
    %v266 = vld [vmem:[#allocation2 + $0x10] sm:$0xff]
    %v267 = vld [vmem:[#allocation2 + $0x18] sm:$0xff]
    %v268 = vld [vmem:[#allocation2 + $0x20] sm:$0xff]
    %v269 = vld [vmem:[#allocation2 + $0x28] sm:$0xff]
    %v270 = vld [vmem:[#allocation2 + $0x30] sm:$0xff]
    %v271 = vld [vmem:[#allocation2 + $0x38] sm:$0xff]
    %v272 = vld [vmem:[#allocation2 + $0x40] sm:$0xff]
    %v273 = vld [vmem:[#allocation2 + $0x48] sm:$0xff]
    %v274 = vld [vmem:[#allocation2 + $0x50] sm:$0xff]
    %v275 = vld [vmem:[#allocation2 + $0x58] sm:$0xff]
    %v276 = vld [vmem:[#allocation2 + $0x60] sm:$0xff]
    %v277 = vld [vmem:[#allocation2 + $0x68] sm:$0xff]
    %v278 = vld [vmem:[#allocation2 + $0x70] sm:$0xff]
    %v279 = vld [vmem:[#allocation2 + $0x78] sm:$0xff]
    %v280 = vld [vmem:[%s2] sm:$0x1]
    %v282 = vperm.slane %v280, 0
    %v284 = vadd.f32 %v264, %v282
    %v285 = vadd.f32 %v265, %v282
    %v286 = vadd.f32 %v266, %v282
    %v287 = vadd.f32 %v267, %v282
    %v288 = vadd.f32 %v268, %v282
    %v289 = vadd.f32 %v269, %v282
    %v290 = vadd.f32 %v270, %v282
    %v291 = vadd.f32 %v271, %v282
    %v292 = vadd.f32 %v272, %v282
    %v293 = vadd.f32 %v273, %v282
    %v294 = vadd.f32 %v274, %v282
    %v295 = vadd.f32 %v275, %v282
    %v296 = vadd.f32 %v276, %v282
    %v297 = vadd.f32 %v277, %v282
    %v298 = vadd.f32 %v278, %v282
    %v299 = vadd.f32 %v279, %v282
    %vm300 = vcmp.ge.f32.partialorder %v284, 0.0
    %vm301 = vcmp.ge.f32.partialorder %v285, 0.0
    %vm302 = vcmp.ge.f32.partialorder %v286, 0.0
    %vm303 = vcmp.ge.f32.partialorder %v287, 0.0
    %vm304 = vcmp.ge.f32.partialorder %v288, 0.0
    %vm305 = vcmp.ge.f32.partialorder %v289, 0.0
    %vm306 = vcmp.ge.f32.partialorder %v290, 0.0
    %vm307 = vcmp.ge.f32.partialorder %v291, 0.0
    %vm308 = vcmp.ge.f32.partialorder %v292, 0.0
    %vm309 = vcmp.ge.f32.partialorder %v293, 0.0
    %vm310 = vcmp.ge.f32.partialorder %v294, 0.0
    %vm311 = vcmp.ge.f32.partialorder %v295, 0.0
    %vm312 = vcmp.ge.f32.partialorder %v296, 0.0
    %vm313 = vcmp.ge.f32.partialorder %v297, 0.0
    %vm314 = vcmp.ge.f32.partialorder %v298, 0.0
    %vm315 = vcmp.ge.f32.partialorder %v299, 0.0
    %v316 = vmul.f32 %v284, 0.01
    %v317 = vmul.f32 %v285, 0.01
    %v318 = vmul.f32 %v286, 0.01
    %v319 = vmul.f32 %v287, 0.01
    %v320 = vmul.f32 %v288, 0.01
    %v321 = vmul.f32 %v289, 0.01
    %v322 = vmul.f32 %v290, 0.01
    %v323 = vmul.f32 %v291, 0.01
    %v324 = vmul.f32 %v292, 0.01
    %v325 = vmul.f32 %v293, 0.01
    %v326 = vmul.f32 %v294, 0.01
    %v327 = vmul.f32 %v295, 0.01
    %v328 = vmul.f32 %v296, 0.01
    %v329 = vmul.f32 %v297, 0.01
    %v330 = vmul.f32 %v298, 0.01
    %v331 = vmul.f32 %v299, 0.01
    %v332 = vsel %vm300, %v284, %v316
    %v333 = vsel %vm301, %v285, %v317
    %v334 = vsel %vm302, %v286, %v318
    %v335 = vsel %vm303, %v287, %v319
    %v336 = vsel %vm304, %v288, %v320
    %v337 = vsel %vm305, %v289, %v321
    %v338 = vsel %vm306, %v290, %v322
    %v339 = vsel %vm307, %v291, %v323
    %v340 = vsel %vm308, %v292, %v324
    %v341 = vsel %vm309, %v293, %v325
    %v342 = vsel %vm310, %v294, %v326
    %v343 = vsel %vm311, %v295, %v327
    %v344 = vsel %vm312, %v296, %v328
    %v345 = vsel %vm313, %v297, %v329
    %v346 = vsel %vm314, %v298, %v330
    %v347 = vsel %vm315, %v299, %v331
    %v348 = vpack.c.bf16 %v332, %v332
    %v349 = vpack.c.bf16 %v333, %v333
    %v350 = vpack.c.bf16 %v334, %v334
    %v351 = vpack.c.bf16 %v335, %v335
    %v352 = vpack.c.bf16 %v336, %v336
    %v353 = vpack.c.bf16 %v337, %v337
    %v354 = vpack.c.bf16 %v338, %v338
    %v355 = vpack.c.bf16 %v339, %v339
    %v356 = vpack.c.bf16 %v340, %v340
    %v357 = vpack.c.bf16 %v341, %v341
    %v358 = vpack.c.bf16 %v342, %v342
    %v359 = vpack.c.bf16 %v343, %v343
    %v360 = vpack.c.bf16 %v344, %v344
    %v361 = vpack.c.bf16 %v345, %v345
    %v362 = vpack.c.bf16 %v346, %v346
    %v363 = vpack.c.bf16 %v347, %v347
    %vm364 = vcmask 125952
    %365 = vst.msk [vmem:[%s3] sm:$0xf] %vm364, %v348
    %366 = vst.msk [vmem:[%s3 + $0x4] sm:$0xf] %vm364, %v349
    %367 = vst.msk [vmem:[%s3 + $0x8] sm:$0xf] %vm364, %v350
    %368 = vst.msk [vmem:[%s3 + $0xc] sm:$0xf] %vm364, %v351
    %369 = vst.msk [vmem:[%s3 + $0x10] sm:$0xf] %vm364, %v352
    %370 = vst.msk [vmem:[%s3 + $0x14] sm:$0xf] %vm364, %v353
    %371 = vst.msk [vmem:[%s3 + $0x18] sm:$0xf] %vm364, %v354
    %372 = vst.msk [vmem:[%s3 + $0x1c] sm:$0xf] %vm364, %v355
    %373 = vst.msk [vmem:[%s3 + $0x20] sm:$0xf] %vm364, %v356
    %374 = vst.msk [vmem:[%s3 + $0x24] sm:$0xf] %vm364, %v357
    %375 = vst.msk [vmem:[%s3 + $0x28] sm:$0xf] %vm364, %v358
    %376 = vst.msk [vmem:[%s3 + $0x2c] sm:$0xf] %vm364, %v359
    %377 = vst.msk [vmem:[%s3 + $0x30] sm:$0xf] %vm364, %v360
    %378 = vst.msk [vmem:[%s3 + $0x34] sm:$0xf] %vm364, %v361
    %379 = vst.msk [vmem:[%s3 + $0x38] sm:$0xf] %vm364, %v362
    %380 = vst.msk [vmem:[%s3 + $0x3c] sm:$0xf] %vm364, %v363
  $region21: #{discriminator_forward.6} parent=0 // pred_fallthru
    _
  // Predicated region
  $region22: #{discriminator_forward.6} parent=0 // pred_check
    _
  $region23: #{discriminator_forward.6} parent=0 // pred_check_branch
    %382 = sbr.rel (0) target = $region25
  $region24: #{discriminator_forward.6} parent=0 // pred_region
    _
  $region25: #{discriminator_forward.6} parent=0 // pred_fallthru
    _
  // Predicated region
  $region26: #{discriminator_forward.6} parent=0 // pred_check
    _
  $region27: #{discriminator_forward.6} parent=0 // pred_check_branch
    %384 = sbr.rel (0) target = $region29
  $region28: #{discriminator_forward.6} parent=0 // pred_region
    _
  $region29: #{discriminator_forward.6} parent=0 // pred_fallthru
    _

// kernel: discriminator_forward.7
$region0: #{discriminator_forward.7}
  #allocation0 [shape = 'u32[]', space=smem, size = 0x4, offset = 0x4, fixed_abs, tag = 'smem constant byte address 0x4 - core index']
  #allocation1 [shape = 'u32[72,128]{1,0:T(1,128)}', space=vmem, size = 0x9000, scoped, tag = 'internal scratch']
  #allocation2 [shape = 'f32[32,32]{1,0:T(8,128)}', space=vmem, size = 0x4000, scoped, tag = 'scratch operand']
  %s0 = inlined_call_operand.vmem [shape: bf16[32,256], index: 0, kind: input, shape index: {}]
  %s1 = inlined_call_operand.vmem [shape: bf16[256,32], index: 1, kind: input, shape index: {}]
  %s2 = inlined_call_operand.vmem [shape: f32[1,32], index: 2, kind: input, shape index: {}]
  %s3 = inlined_call_operand.vmem [shape: bf16[32,32], index: 3, kind: output, shape index: {}]
  %s4 = sld [smem:[#allocation0]]
  $region30: #{discriminator_forward.7} parent=0
    _
  %s6 = ssub.s32 1, %s4
  %s7 = scalar_select 0, %s6, %s4
  // Predicated region
  $region2: #{discriminator_forward.7} parent=0 // pred_check
    _
  $region3: #{discriminator_forward.7} parent=0 // pred_check_branch
    %9 = sbr.rel (0) target = $region5
  $region4: #{discriminator_forward.7} parent=0 // pred_region
    _
  $region5: #{discriminator_forward.7} parent=0 // pred_fallthru
    _
  // Predicated region
  $region6: #{discriminator_forward.7} parent=0 // pred_check
    _
  $region7: #{discriminator_forward.7} parent=0 // pred_check_branch
    %11 = sbr.rel (0) target = $region9
  $region8: #{discriminator_forward.7} parent=0 // pred_region
    _
  $region9: #{discriminator_forward.7} parent=0 // pred_fallthru
    _
  // Predicated region
  $region10: #{discriminator_forward.7} parent=0 // pred_check
    _
  $region11: #{discriminator_forward.7} parent=0 // pred_check_branch
    %13 = sbr.rel (0) target = $region13
  $region12: #{discriminator_forward.7} parent=0 // pred_region
    _
  $region13: #{discriminator_forward.7} parent=0 // pred_fallthru
    _
  %p14 = scmp.eq.s32.totalorder 0, 0
  // Predicated region
  $region14: #{discriminator_forward.7} parent=0 // pred_check
    %p15 = pneg %p14
  $region15: #{discriminator_forward.7} parent=0 // pred_check_branch
    %17 = sbr.rel (%p15) target = $region17
  $region16: #{discriminator_forward.7} parent=0 // pred_region
    %vm18 = vcmask 261120
    %19 = vst.msk [vmem:[#allocation2] sm:$0xff] %vm18, 0.0
    %20 = vst.msk [vmem:[#allocation2 + $0x8] sm:$0xff] %vm18, 0.0
    %21 = vst.msk [vmem:[#allocation2 + $0x10] sm:$0xff] %vm18, 0.0
    %22 = vst.msk [vmem:[#allocation2 + $0x18] sm:$0xff] %vm18, 0.0
  $region17: #{discriminator_forward.7} parent=0 // pred_fallthru
    _
  %v23 = vld [vmem:[#allocation2] sm:$0xff]
  %v24 = vld [vmem:[#allocation2 + $0x8] sm:$0xff]
  %v25 = vld [vmem:[#allocation2 + $0x10] sm:$0xff]
  %v26 = vld [vmem:[#allocation2 + $0x18] sm:$0xff]
  %v27 = vld [vmem:[%s0] sm:$0xff]
  %v28 = vld [vmem:[%s0 + $0x8] sm:$0xff]
  %v29 = vld [vmem:[%s0 + $0x10] sm:$0xff]
  %v30 = vld [vmem:[%s0 + $0x18] sm:$0xff]
  %v31 = vld [vmem:[%s1] sm:$0xf]
  %v32 = vld [vmem:[%s1 + $0x4] sm:$0xf]
  %v33 = vld [vmem:[%s1 + $0x8] sm:$0xf]
  %v34 = vld [vmem:[%s1 + $0xc] sm:$0xf]
  %v35 = vld [vmem:[%s1 + $0x10] sm:$0xf]
  %v36 = vld [vmem:[%s1 + $0x14] sm:$0xf]
  %v37 = vld [vmem:[%s1 + $0x18] sm:$0xf]
  %v38 = vld [vmem:[%s1 + $0x1c] sm:$0xf]
  %v39 = vld [vmem:[%s1 + $0x20] sm:$0xf]
  %v40 = vld [vmem:[%s1 + $0x24] sm:$0xf]
  %v41 = vld [vmem:[%s1 + $0x28] sm:$0xf]
  %v42 = vld [vmem:[%s1 + $0x2c] sm:$0xf]
  %v43 = vld [vmem:[%s1 + $0x30] sm:$0xf]
  %v44 = vld [vmem:[%s1 + $0x34] sm:$0xf]
  %v45 = vld [vmem:[%s1 + $0x38] sm:$0xf]
  %v46 = vld [vmem:[%s1 + $0x3c] sm:$0xf]
  %v47 = vld [vmem:[%s1 + $0x40] sm:$0xf]
  %v48 = vld [vmem:[%s1 + $0x44] sm:$0xf]
  %v49 = vld [vmem:[%s1 + $0x48] sm:$0xf]
  %v50 = vld [vmem:[%s1 + $0x4c] sm:$0xf]
  %v51 = vld [vmem:[%s1 + $0x50] sm:$0xf]
  %v52 = vld [vmem:[%s1 + $0x54] sm:$0xf]
  %v53 = vld [vmem:[%s1 + $0x58] sm:$0xf]
  %v54 = vld [vmem:[%s1 + $0x5c] sm:$0xf]
  %v55 = vld [vmem:[%s1 + $0x60] sm:$0xf]
  %v56 = vld [vmem:[%s1 + $0x64] sm:$0xf]
  %v57 = vld [vmem:[%s1 + $0x68] sm:$0xf]
  %v58 = vld [vmem:[%s1 + $0x6c] sm:$0xf]
  %v59 = vld [vmem:[%s1 + $0x70] sm:$0xf]
  %v60 = vld [vmem:[%s1 + $0x74] sm:$0xf]
  %v61 = vld [vmem:[%s1 + $0x78] sm:$0xf]
  %v62 = vld [vmem:[%s1 + $0x7c] sm:$0xf]
  %v67 = vunpack.c.l.b16 %v27
  %v68 = vunpack.c.h.b16 %v27
  %v69 = vunpack.c.l.b16 %v28
  %v70 = vunpack.c.h.b16 %v28
  %v71 = vunpack.c.l.b16 %v29
  %v72 = vunpack.c.h.b16 %v29
  %v73 = vunpack.c.l.b16 %v30
  %v74 = vunpack.c.h.b16 %v30
  %v75 = vpack.c.b16 %v69, %v67
  %v76 = vpack.c.b16 %v70, %v68
  %v77 = vpack.c.b16 %v73, %v71
  %v78 = vpack.c.b16 %v74, %v72
  %v115 = vunpack.c.l.b16 %v31
  %v116 = vunpack.c.l.b16 %v32
  %v117 = vunpack.c.l.b16 %v33
  %v118 = vunpack.c.l.b16 %v34
  %v119 = vunpack.c.l.b16 %v35
  %v120 = vunpack.c.l.b16 %v36
  %v121 = vunpack.c.l.b16 %v37
  %v122 = vunpack.c.l.b16 %v38
  %v123 = vunpack.c.l.b16 %v39
  %v124 = vunpack.c.l.b16 %v40
  %v125 = vunpack.c.l.b16 %v41
  %v126 = vunpack.c.l.b16 %v42
  %v127 = vunpack.c.l.b16 %v43
  %v128 = vunpack.c.l.b16 %v44
  %v129 = vunpack.c.l.b16 %v45
  %v130 = vunpack.c.l.b16 %v46
  %v131 = vunpack.c.l.b16 %v47
  %v132 = vunpack.c.l.b16 %v48
  %v133 = vunpack.c.l.b16 %v49
  %v134 = vunpack.c.l.b16 %v50
  %v135 = vunpack.c.l.b16 %v51
  %v136 = vunpack.c.l.b16 %v52
  %v137 = vunpack.c.l.b16 %v53
  %v138 = vunpack.c.l.b16 %v54
  %v139 = vunpack.c.l.b16 %v55
  %v140 = vunpack.c.l.b16 %v56
  %v141 = vunpack.c.l.b16 %v57
  %v142 = vunpack.c.l.b16 %v58
  %v143 = vunpack.c.l.b16 %v59
  %v144 = vunpack.c.l.b16 %v60
  %v145 = vunpack.c.l.b16 %v61
  %v146 = vunpack.c.l.b16 %v62
  %v147 = vpack.c.b16 %v116, %v115
  %v148 = vpack.c.b16 %v118, %v117
  %v149 = vpack.c.b16 %v120, %v119
  %v150 = vpack.c.b16 %v122, %v121
  %v151 = vpack.c.b16 %v124, %v123
  %v152 = vpack.c.b16 %v126, %v125
  %v153 = vpack.c.b16 %v128, %v127
  %v154 = vpack.c.b16 %v130, %v129
  %v155 = vpack.c.b16 %v132, %v131
  %v156 = vpack.c.b16 %v134, %v133
  %v157 = vpack.c.b16 %v136, %v135
  %v158 = vpack.c.b16 %v138, %v137
  %v159 = vpack.c.b16 %v140, %v139
  %v160 = vpack.c.b16 %v142, %v141
  %v161 = vpack.c.b16 %v144, %v143
  %v162 = vpack.c.b16 %v146, %v145
  %179 = vmatpush.bf16.msra.mxu0 %v154
  %180 = vmatpush.bf16.msra.mxu0 %v153
  %181 = vmatpush.bf16.msra.mxu0 %v152
  %182 = vmatpush.bf16.msra.mxu0 %v151
  %183 = vmatpush.bf16.msra.mxu0 %v150
  %184 = vmatpush.bf16.msra.mxu0 %v149
  %185 = vmatpush.bf16.msra.mxu0 %v148
  %186 = vmatpush.bf16.msra.mxu0 %v147
  %187 = vmatmul.bf16.gmra.mxu0 %v75
  %v188 = vpop.f32.mrf.mxu0
  %v189 = vadd.f32 0.0, %v188
  %v190 = vpop.f32.mrf.mxu0
  %v191 = vadd.f32 0.0, %v190
  %192 = vmatmul.bf16.gmra.mxu0 %v77
  %v193 = vpop.f32.mrf.mxu0
  %v194 = vadd.f32 0.0, %v193
  %v195 = vpop.f32.mrf.mxu0
  %v196 = vadd.f32 0.0, %v195
  %197 = vdwg.mxu0
  %198 = vmatpush.bf16.msra.mxu0 %v162
  %199 = vmatpush.bf16.msra.mxu0 %v161
  %200 = vmatpush.bf16.msra.mxu0 %v160
  %201 = vmatpush.bf16.msra.mxu0 %v159
  %202 = vmatpush.bf16.msra.mxu0 %v158
  %203 = vmatpush.bf16.msra.mxu0 %v157
  %204 = vmatpush.bf16.msra.mxu0 %v156
  %205 = vmatpush.bf16.msra.mxu0 %v155
  %206 = vmatmul.bf16.gmra.mxu0 %v76
  %v207 = vpop.f32.mrf.mxu0
  %v208 = vadd.f32 %v189, %v207
  %v209 = vpop.f32.mrf.mxu0
  %v210 = vadd.f32 %v191, %v209
  %211 = vmatmul.bf16.gmra.mxu0 %v78
  %v212 = vpop.f32.mrf.mxu0
  %v213 = vadd.f32 %v194, %v212
  %v214 = vpop.f32.mrf.mxu0
  %v215 = vadd.f32 %v196, %v214
  %216 = vdwg.mxu0
  %v217 = vadd.f32 %v23, %v208
  %v218 = vadd.f32 %v24, %v210
  %v219 = vadd.f32 %v25, %v213
  %v220 = vadd.f32 %v26, %v215
  %vm221 = vcmask 261120
  %222 = vst.msk [vmem:[#allocation2] sm:$0xff] %vm221, %v217
  %223 = vst.msk [vmem:[#allocation2 + $0x8] sm:$0xff] %vm221, %v218
  %224 = vst.msk [vmem:[#allocation2 + $0x10] sm:$0xff] %vm221, %v219
  %225 = vst.msk [vmem:[#allocation2 + $0x18] sm:$0xff] %vm221, %v220
  // Predicated region
  $region18: #{discriminator_forward.7} parent=0 // pred_check
    %p226 = pneg %p14
  $region19: #{discriminator_forward.7} parent=0 // pred_check_branch
    %228 = sbr.rel (%p226) target = $region21
  $region20: #{discriminator_forward.7} parent=0 // pred_region
    %v229 = vld [vmem:[#allocation2] sm:$0xff]
    %v230 = vld [vmem:[#allocation2 + $0x8] sm:$0xff]
    %v231 = vld [vmem:[#allocation2 + $0x10] sm:$0xff]
    %v232 = vld [vmem:[#allocation2 + $0x18] sm:$0xff]
    %v233 = vld [vmem:[%s2] sm:$0x1]
    %v235 = vperm.slane %v233, 0
    %v237 = vadd.f32 %v229, %v235
    %v238 = vadd.f32 %v230, %v235
    %v239 = vadd.f32 %v231, %v235
    %v240 = vadd.f32 %v232, %v235
    %vm241 = vcmp.ge.f32.partialorder %v237, 0.0
    %vm242 = vcmp.ge.f32.partialorder %v238, 0.0
    %vm243 = vcmp.ge.f32.partialorder %v239, 0.0
    %vm244 = vcmp.ge.f32.partialorder %v240, 0.0
    %v245 = vmul.f32 %v237, 0.01
    %v246 = vmul.f32 %v238, 0.01
    %v247 = vmul.f32 %v239, 0.01
    %v248 = vmul.f32 %v240, 0.01
    %v249 = vsel %vm241, %v237, %v245
    %v250 = vsel %vm242, %v238, %v246
    %v251 = vsel %vm243, %v239, %v247
    %v252 = vsel %vm244, %v240, %v248
    %v253 = vpack.c.bf16 %v249, %v249
    %v254 = vpack.c.bf16 %v250, %v250
    %v255 = vpack.c.bf16 %v251, %v251
    %v256 = vpack.c.bf16 %v252, %v252
    %vm257 = vcmask 257024
    %258 = vst.msk [vmem:[%s3] sm:$0xf] %vm257, %v253
    %259 = vst.msk [vmem:[%s3 + $0x4] sm:$0xf] %vm257, %v254
    %260 = vst.msk [vmem:[%s3 + $0x8] sm:$0xf] %vm257, %v255
    %261 = vst.msk [vmem:[%s3 + $0xc] sm:$0xf] %vm257, %v256
  $region21: #{discriminator_forward.7} parent=0 // pred_fallthru
    _
  // Predicated region
  $region22: #{discriminator_forward.7} parent=0 // pred_check
    _
  $region23: #{discriminator_forward.7} parent=0 // pred_check_branch
    %263 = sbr.rel (0) target = $region25
  $region24: #{discriminator_forward.7} parent=0 // pred_region
    _
  $region25: #{discriminator_forward.7} parent=0 // pred_fallthru
    _
  // Predicated region
  $region26: #{discriminator_forward.7} parent=0 // pred_check
    _
  $region27: #{discriminator_forward.7} parent=0 // pred_check_branch
    %265 = sbr.rel (0) target = $region29
  $region28: #{discriminator_forward.7} parent=0 // pred_region
    _
  $region29: #{discriminator_forward.7} parent=0 // pred_fallthru
    _

// kernel: discriminator_forward.8
$region0: #{discriminator_forward.8}
  #allocation0 [shape = 'u32[]', space=smem, size = 0x4, offset = 0x4, fixed_abs, tag = 'smem constant byte address 0x4 - core index']
  #allocation1 [shape = 'u32[72,128]{1,0:T(1,128)}', space=vmem, size = 0x9000, scoped, tag = 'internal scratch']
  #allocation2 [shape = 'f32[24,64]{1,0:T(8,128)}', space=vmem, size = 0x3000, scoped, tag = 'scratch operand']
  %s0 = inlined_call_operand.vmem [shape: bf16[24,512], index: 0, kind: input, shape index: {}]
  %s1 = inlined_call_operand.vmem [shape: bf16[512,64], index: 1, kind: input, shape index: {}]
  %s2 = inlined_call_operand.vmem [shape: f32[1,64], index: 2, kind: input, shape index: {}]
  %s3 = inlined_call_operand.vmem [shape: bf16[24,64], index: 3, kind: output, shape index: {}]
  %s4 = sld [smem:[#allocation0]]
  $region30: #{discriminator_forward.8} parent=0
    _
  %s6 = ssub.s32 1, %s4
  %s7 = scalar_select 0, %s6, %s4
  // Predicated region
  $region2: #{discriminator_forward.8} parent=0 // pred_check
    _
  $region3: #{discriminator_forward.8} parent=0 // pred_check_branch
    %9 = sbr.rel (0) target = $region5
  $region4: #{discriminator_forward.8} parent=0 // pred_region
    _
  $region5: #{discriminator_forward.8} parent=0 // pred_fallthru
    _
  // Predicated region
  $region6: #{discriminator_forward.8} parent=0 // pred_check
    _
  $region7: #{discriminator_forward.8} parent=0 // pred_check_branch
    %11 = sbr.rel (0) target = $region9
  $region8: #{discriminator_forward.8} parent=0 // pred_region
    _
  $region9: #{discriminator_forward.8} parent=0 // pred_fallthru
    _
  // Predicated region
  $region10: #{discriminator_forward.8} parent=0 // pred_check
    _
  $region11: #{discriminator_forward.8} parent=0 // pred_check_branch
    %13 = sbr.rel (0) target = $region13
  $region12: #{discriminator_forward.8} parent=0 // pred_region
    _
  $region13: #{discriminator_forward.8} parent=0 // pred_fallthru
    _
  %p14 = scmp.eq.s32.totalorder 0, 0
  // Predicated region
  $region14: #{discriminator_forward.8} parent=0 // pred_check
    %p15 = pneg %p14
  $region15: #{discriminator_forward.8} parent=0 // pred_check_branch
    %17 = sbr.rel (%p15) target = $region17
  $region16: #{discriminator_forward.8} parent=0 // pred_region
    %vm18 = vcmask 523264
    %19 = vst.msk [vmem:[#allocation2] sm:$0xff] %vm18, 0.0
    %20 = vst.msk [vmem:[#allocation2 + $0x8] sm:$0xff] %vm18, 0.0
    %21 = vst.msk [vmem:[#allocation2 + $0x10] sm:$0xff] %vm18, 0.0
  $region17: #{discriminator_forward.8} parent=0 // pred_fallthru
    _
  %v22 = vld [vmem:[#allocation2] sm:$0xff]
  %v23 = vld [vmem:[#allocation2 + $0x8] sm:$0xff]
  %v24 = vld [vmem:[#allocation2 + $0x10] sm:$0xff]
  %v25 = vld [vmem:[%s0] sm:$0xff]
  %v26 = vld [vmem:[%s0 + $0x8] sm:$0xff]
  %v27 = vld [vmem:[%s0 + $0x10] sm:$0xff]
  %v28 = vld [vmem:[%s0 + $0x18] sm:$0xff]
  %v29 = vld [vmem:[%s0 + $0x20] sm:$0xff]
  %v30 = vld [vmem:[%s0 + $0x28] sm:$0xff]
  %v31 = vld [vmem:[%s1] sm:$0xf]
  %v32 = vld [vmem:[%s1 + $0x4] sm:$0xf]
  %v33 = vld [vmem:[%s1 + $0x8] sm:$0xf]
  %v34 = vld [vmem:[%s1 + $0xc] sm:$0xf]
  %v35 = vld [vmem:[%s1 + $0x10] sm:$0xf]
  %v36 = vld [vmem:[%s1 + $0x14] sm:$0xf]
  %v37 = vld [vmem:[%s1 + $0x18] sm:$0xf]
  %v38 = vld [vmem:[%s1 + $0x1c] sm:$0xf]
  %v39 = vld [vmem:[%s1 + $0x20] sm:$0xf]
  %v40 = vld [vmem:[%s1 + $0x24] sm:$0xf]
  %v41 = vld [vmem:[%s1 + $0x28] sm:$0xf]
  %v42 = vld [vmem:[%s1 + $0x2c] sm:$0xf]
  %v43 = vld [vmem:[%s1 + $0x30] sm:$0xf]
  %v44 = vld [vmem:[%s1 + $0x34] sm:$0xf]
  %v45 = vld [vmem:[%s1 + $0x38] sm:$0xf]
  %v46 = vld [vmem:[%s1 + $0x3c] sm:$0xf]
  %v47 = vld [vmem:[%s1 + $0x40] sm:$0xf]
  %v48 = vld [vmem:[%s1 + $0x44] sm:$0xf]
  %v49 = vld [vmem:[%s1 + $0x48] sm:$0xf]
  %v50 = vld [vmem:[%s1 + $0x4c] sm:$0xf]
  %v51 = vld [vmem:[%s1 + $0x50] sm:$0xf]
  %v52 = vld [vmem:[%s1 + $0x54] sm:$0xf]
  %v53 = vld [vmem:[%s1 + $0x58] sm:$0xf]
  %v54 = vld [vmem:[%s1 + $0x5c] sm:$0xf]
  %v55 = vld [vmem:[%s1 + $0x60] sm:$0xf]
  %v56 = vld [vmem:[%s1 + $0x64] sm:$0xf]
  %v57 = vld [vmem:[%s1 + $0x68] sm:$0xf]
  %v58 = vld [vmem:[%s1 + $0x6c] sm:$0xf]
  %v59 = vld [vmem:[%s1 + $0x70] sm:$0xf]
  %v60 = vld [vmem:[%s1 + $0x74] sm:$0xf]
  %v61 = vld [vmem:[%s1 + $0x78] sm:$0xf]
  %v62 = vld [vmem:[%s1 + $0x7c] sm:$0xf]
  %v63 = vld [vmem:[%s1 + $0x80] sm:$0xf]
  %v64 = vld [vmem:[%s1 + $0x84] sm:$0xf]
  %v65 = vld [vmem:[%s1 + $0x88] sm:$0xf]
  %v66 = vld [vmem:[%s1 + $0x8c] sm:$0xf]
  %v67 = vld [vmem:[%s1 + $0x90] sm:$0xf]
  %v68 = vld [vmem:[%s1 + $0x94] sm:$0xf]
  %v69 = vld [vmem:[%s1 + $0x98] sm:$0xf]
  %v70 = vld [vmem:[%s1 + $0x9c] sm:$0xf]
  %v71 = vld [vmem:[%s1 + $0xa0] sm:$0xf]
  %v72 = vld [vmem:[%s1 + $0xa4] sm:$0xf]
  %v73 = vld [vmem:[%s1 + $0xa8] sm:$0xf]
  %v74 = vld [vmem:[%s1 + $0xac] sm:$0xf]
  %v75 = vld [vmem:[%s1 + $0xb0] sm:$0xf]
  %v76 = vld [vmem:[%s1 + $0xb4] sm:$0xf]
  %v77 = vld [vmem:[%s1 + $0xb8] sm:$0xf]
  %v78 = vld [vmem:[%s1 + $0xbc] sm:$0xf]
  %v79 = vld [vmem:[%s1 + $0xc0] sm:$0xf]
  %v80 = vld [vmem:[%s1 + $0xc4] sm:$0xf]
  %v81 = vld [vmem:[%s1 + $0xc8] sm:$0xf]
  %v82 = vld [vmem:[%s1 + $0xcc] sm:$0xf]
  %v83 = vld [vmem:[%s1 + $0xd0] sm:$0xf]
  %v84 = vld [vmem:[%s1 + $0xd4] sm:$0xf]
  %v85 = vld [vmem:[%s1 + $0xd8] sm:$0xf]
  %v86 = vld [vmem:[%s1 + $0xdc] sm:$0xf]
  %v87 = vld [vmem:[%s1 + $0xe0] sm:$0xf]
  %v88 = vld [vmem:[%s1 + $0xe4] sm:$0xf]
  %v89 = vld [vmem:[%s1 + $0xe8] sm:$0xf]
  %v90 = vld [vmem:[%s1 + $0xec] sm:$0xf]
  %v91 = vld [vmem:[%s1 + $0xf0] sm:$0xf]
  %v92 = vld [vmem:[%s1 + $0xf4] sm:$0xf]
  %v93 = vld [vmem:[%s1 + $0xf8] sm:$0xf]
  %v94 = vld [vmem:[%s1 + $0xfc] sm:$0xf]
  %v101 = vunpack.c.l.b16 %v25
  %v102 = vunpack.c.h.b16 %v25
  %v103 = vunpack.c.l.b16 %v26
  %v104 = vunpack.c.h.b16 %v26
  %v105 = vunpack.c.l.b16 %v27
  %v106 = vunpack.c.h.b16 %v27
  %v107 = vunpack.c.l.b16 %v28
  %v108 = vunpack.c.h.b16 %v28
  %v109 = vunpack.c.l.b16 %v29
  %v110 = vunpack.c.h.b16 %v29
  %v111 = vunpack.c.l.b16 %v30
  %v112 = vunpack.c.h.b16 %v30
  %v113 = vpack.c.b16 %v105, %v101
  %v114 = vpack.c.b16 %v106, %v102
  %v115 = vpack.c.b16 %v107, %v103
  %v116 = vpack.c.b16 %v108, %v104
  %v117 = vpack.c.b16 %v109, %v109
  %v118 = vpack.c.b16 %v110, %v110
  %v119 = vpack.c.b16 %v111, %v111
  %v120 = vpack.c.b16 %v112, %v112
  %v193 = vunpack.c.l.b16 %v31
  %v194 = vunpack.c.l.b16 %v32
  %v195 = vunpack.c.l.b16 %v33
  %v196 = vunpack.c.l.b16 %v34
  %v197 = vunpack.c.l.b16 %v35
  %v198 = vunpack.c.l.b16 %v36
  %v199 = vunpack.c.l.b16 %v37
  %v200 = vunpack.c.l.b16 %v38
  %v201 = vunpack.c.l.b16 %v39
  %v202 = vunpack.c.l.b16 %v40
  %v203 = vunpack.c.l.b16 %v41
  %v204 = vunpack.c.l.b16 %v42
  %v205 = vunpack.c.l.b16 %v43
  %v206 = vunpack.c.l.b16 %v44
  %v207 = vunpack.c.l.b16 %v45
  %v208 = vunpack.c.l.b16 %v46
  %v209 = vunpack.c.l.b16 %v47
  %v210 = vunpack.c.l.b16 %v48
  %v211 = vunpack.c.l.b16 %v49
  %v212 = vunpack.c.l.b16 %v50
  %v213 = vunpack.c.l.b16 %v51
  %v214 = vunpack.c.l.b16 %v52
  %v215 = vunpack.c.l.b16 %v53
  %v216 = vunpack.c.l.b16 %v54
  %v217 = vunpack.c.l.b16 %v55
  %v218 = vunpack.c.l.b16 %v56
  %v219 = vunpack.c.l.b16 %v57
  %v220 = vunpack.c.l.b16 %v58
  %v221 = vunpack.c.l.b16 %v59
  %v222 = vunpack.c.l.b16 %v60
  %v223 = vunpack.c.l.b16 %v61
  %v224 = vunpack.c.l.b16 %v62
  %v225 = vunpack.c.l.b16 %v63
  %v226 = vunpack.c.l.b16 %v64
  %v227 = vunpack.c.l.b16 %v65
  %v228 = vunpack.c.l.b16 %v66
  %v229 = vunpack.c.l.b16 %v67
  %v230 = vunpack.c.l.b16 %v68
  %v231 = vunpack.c.l.b16 %v69
  %v232 = vunpack.c.l.b16 %v70
  %v233 = vunpack.c.l.b16 %v71
  %v234 = vunpack.c.l.b16 %v72
  %v235 = vunpack.c.l.b16 %v73
  %v236 = vunpack.c.l.b16 %v74
  %v237 = vunpack.c.l.b16 %v75
  %v238 = vunpack.c.l.b16 %v76
  %v239 = vunpack.c.l.b16 %v77
  %v240 = vunpack.c.l.b16 %v78
  %v241 = vunpack.c.l.b16 %v79
  %v242 = vunpack.c.l.b16 %v80
  %v243 = vunpack.c.l.b16 %v81
  %v244 = vunpack.c.l.b16 %v82
  %v245 = vunpack.c.l.b16 %v83
  %v246 = vunpack.c.l.b16 %v84
  %v247 = vunpack.c.l.b16 %v85
  %v248 = vunpack.c.l.b16 %v86
  %v249 = vunpack.c.l.b16 %v87
  %v250 = vunpack.c.l.b16 %v88
  %v251 = vunpack.c.l.b16 %v89
  %v252 = vunpack.c.l.b16 %v90
  %v253 = vunpack.c.l.b16 %v91
  %v254 = vunpack.c.l.b16 %v92
  %v255 = vunpack.c.l.b16 %v93
  %v256 = vunpack.c.l.b16 %v94
  %v257 = vpack.c.b16 %v194, %v193
  %v258 = vpack.c.b16 %v196, %v195
  %v259 = vpack.c.b16 %v198, %v197
  %v260 = vpack.c.b16 %v200, %v199
  %v261 = vpack.c.b16 %v202, %v201
  %v262 = vpack.c.b16 %v204, %v203
  %v263 = vpack.c.b16 %v206, %v205
  %v264 = vpack.c.b16 %v208, %v207
  %v265 = vpack.c.b16 %v210, %v209
  %v266 = vpack.c.b16 %v212, %v211
  %v267 = vpack.c.b16 %v214, %v213
  %v268 = vpack.c.b16 %v216, %v215
  %v269 = vpack.c.b16 %v218, %v217
  %v270 = vpack.c.b16 %v220, %v219
  %v271 = vpack.c.b16 %v222, %v221
  %v272 = vpack.c.b16 %v224, %v223
  %v273 = vpack.c.b16 %v226, %v225
  %v274 = vpack.c.b16 %v228, %v227
  %v275 = vpack.c.b16 %v230, %v229
  %v276 = vpack.c.b16 %v232, %v231
  %v277 = vpack.c.b16 %v234, %v233
  %v278 = vpack.c.b16 %v236, %v235
  %v279 = vpack.c.b16 %v238, %v237
  %v280 = vpack.c.b16 %v240, %v239
  %v281 = vpack.c.b16 %v242, %v241
  %v282 = vpack.c.b16 %v244, %v243
  %v283 = vpack.c.b16 %v246, %v245
  %v284 = vpack.c.b16 %v248, %v247
  %v285 = vpack.c.b16 %v250, %v249
  %v286 = vpack.c.b16 %v252, %v251
  %v287 = vpack.c.b16 %v254, %v253
  %v288 = vpack.c.b16 %v256, %v255
  %321 = vmatpush.bf16.msra.mxu0 %v264
  %322 = vmatpush.bf16.msra.mxu0 %v263
  %323 = vmatpush.bf16.msra.mxu0 %v262
  %324 = vmatpush.bf16.msra.mxu0 %v261
  %325 = vmatpush.bf16.msra.mxu0 %v260
  %326 = vmatpush.bf16.msra.mxu0 %v259
  %327 = vmatpush.bf16.msra.mxu0 %v258
  %328 = vmatpush.bf16.msra.mxu0 %v257
  %329 = vmatmul.bf16.gmra.mxu0 %v113
  %v330 = vpop.f32.mrf.mxu0
  %v331 = vadd.f32 0.0, %v330
  %v332 = vpop.f32.mrf.mxu0
  %v333 = vadd.f32 0.0, %v332
  %334 = vmatmul.bf16.gmra.mxu0 %v117
  %v335 = vpop.f32.mrf.mxu0
  %v336 = vadd.f32 0.0, %v335
  %v337 = vpop.f32.mrf.mxu0
  %338 = vdwg.mxu0
  %339 = vmatpush.bf16.msra.mxu0 %v272
  %340 = vmatpush.bf16.msra.mxu0 %v271
  %341 = vmatpush.bf16.msra.mxu0 %v270
  %342 = vmatpush.bf16.msra.mxu0 %v269
  %343 = vmatpush.bf16.msra.mxu0 %v268
  %344 = vmatpush.bf16.msra.mxu0 %v267
  %345 = vmatpush.bf16.msra.mxu0 %v266
  %346 = vmatpush.bf16.msra.mxu0 %v265
  %347 = vmatmul.bf16.gmra.mxu0 %v114
  %v348 = vpop.f32.mrf.mxu0
  %v349 = vadd.f32 %v331, %v348
  %v350 = vpop.f32.mrf.mxu0
  %v351 = vadd.f32 %v333, %v350
  %352 = vmatmul.bf16.gmra.mxu0 %v118
  %v353 = vpop.f32.mrf.mxu0
  %v354 = vadd.f32 %v336, %v353
  %v355 = vpop.f32.mrf.mxu0
  %356 = vdwg.mxu0
  %357 = vmatpush.bf16.msra.mxu0 %v280
  %358 = vmatpush.bf16.msra.mxu0 %v279
  %359 = vmatpush.bf16.msra.mxu0 %v278
  %360 = vmatpush.bf16.msra.mxu0 %v277
  %361 = vmatpush.bf16.msra.mxu0 %v276
  %362 = vmatpush.bf16.msra.mxu0 %v275
  %363 = vmatpush.bf16.msra.mxu0 %v274
  %364 = vmatpush.bf16.msra.mxu0 %v273
  %365 = vmatmul.bf16.gmra.mxu0 %v115
  %v366 = vpop.f32.mrf.mxu0
  %v367 = vadd.f32 %v349, %v366
  %v368 = vpop.f32.mrf.mxu0
  %v369 = vadd.f32 %v351, %v368
  %370 = vmatmul.bf16.gmra.mxu0 %v119
  %v371 = vpop.f32.mrf.mxu0
  %v372 = vadd.f32 %v354, %v371
  %v373 = vpop.f32.mrf.mxu0
  %374 = vdwg.mxu0
  %375 = vmatpush.bf16.msra.mxu0 %v288
  %376 = vmatpush.bf16.msra.mxu0 %v287
  %377 = vmatpush.bf16.msra.mxu0 %v286
  %378 = vmatpush.bf16.msra.mxu0 %v285
  %379 = vmatpush.bf16.msra.mxu0 %v284
  %380 = vmatpush.bf16.msra.mxu0 %v283
  %381 = vmatpush.bf16.msra.mxu0 %v282
  %382 = vmatpush.bf16.msra.mxu0 %v281
  %383 = vmatmul.bf16.gmra.mxu0 %v116
  %v384 = vpop.f32.mrf.mxu0
  %v385 = vadd.f32 %v367, %v384
  %v386 = vpop.f32.mrf.mxu0
  %v387 = vadd.f32 %v369, %v386
  %388 = vmatmul.bf16.gmra.mxu0 %v120
  %v389 = vpop.f32.mrf.mxu0
  %v390 = vadd.f32 %v372, %v389
  %v391 = vpop.f32.mrf.mxu0
  %392 = vdwg.mxu0
  %v393 = vadd.f32 %v22, %v385
  %v394 = vadd.f32 %v23, %v387
  %v395 = vadd.f32 %v24, %v390
  %vm396 = vcmask 523264
  %397 = vst.msk [vmem:[#allocation2] sm:$0xff] %vm396, %v393
  %398 = vst.msk [vmem:[#allocation2 + $0x8] sm:$0xff] %vm396, %v394
  %399 = vst.msk [vmem:[#allocation2 + $0x10] sm:$0xff] %vm396, %v395
  // Predicated region
  $region18: #{discriminator_forward.8} parent=0 // pred_check
    %p400 = pneg %p14
  $region19: #{discriminator_forward.8} parent=0 // pred_check_branch
    %402 = sbr.rel (%p400) target = $region21
  $region20: #{discriminator_forward.8} parent=0 // pred_region
    %v403 = vld [vmem:[#allocation2] sm:$0xff]
    %v404 = vld [vmem:[#allocation2 + $0x8] sm:$0xff]
    %v405 = vld [vmem:[#allocation2 + $0x10] sm:$0xff]
    %v406 = vld [vmem:[%s2] sm:$0x1]
    %v408 = vperm.slane %v406, 0
    %v410 = vadd.f32 %v403, %v408
    %v411 = vadd.f32 %v404, %v408
    %v412 = vadd.f32 %v405, %v408
    %vm413 = vcmp.ge.f32.partialorder %v410, 0.0
    %vm414 = vcmp.ge.f32.partialorder %v411, 0.0
    %vm415 = vcmp.ge.f32.partialorder %v412, 0.0
    %v416 = vmul.f32 %v410, 0.01
    %v417 = vmul.f32 %v411, 0.01
    %v418 = vmul.f32 %v412, 0.01
    %v419 = vsel %vm413, %v410, %v416
    %v420 = vsel %vm414, %v411, %v417
    %v421 = vsel %vm415, %v412, %v418
    %v422 = vpack.c.bf16 %v419, %v419
    %v423 = vpack.c.bf16 %v420, %v420
    %v424 = vpack.c.bf16 %v421, %v421
    %vm425 = vcmask 519168
    %426 = vst.msk [vmem:[%s3] sm:$0xf] %vm425, %v422
    %427 = vst.msk [vmem:[%s3 + $0x4] sm:$0xf] %vm425, %v423
    %428 = vst.msk [vmem:[%s3 + $0x8] sm:$0xf] %vm425, %v424
  $region21: #{discriminator_forward.8} parent=0 // pred_fallthru
    _
  // Predicated region
  $region22: #{discriminator_forward.8} parent=0 // pred_check
    _
  $region23: #{discriminator_forward.8} parent=0 // pred_check_branch
    %430 = sbr.rel (0) target = $region25
  $region24: #{discriminator_forward.8} parent=0 // pred_region
    _
  $region25: #{discriminator_forward.8} parent=0 // pred_fallthru
    _
  // Predicated region
  $region26: #{discriminator_forward.8} parent=0 // pred_check
    _
  $region27: #{discriminator_forward.8} parent=0 // pred_check_branch
    %432 = sbr.rel (0) target = $region29
  $region28: #{discriminator_forward.8} parent=0 // pred_region
    _
  $region29: #{discriminator_forward.8} parent=0 // pred_fallthru
    _

// kernel: discriminator_forward.9
$region0: #{discriminator_forward.9}
  #allocation0 [shape = 'u32[]', space=smem, size = 0x4, offset = 0x4, fixed_abs, tag = 'smem constant byte address 0x4 - core index']
  #allocation1 [shape = 'u32[72,128]{1,0:T(1,128)}', space=vmem, size = 0x9000, scoped, tag = 'internal scratch']
  #allocation2 [shape = 'f32[8,1]{1,0:T(8,128)}', space=vmem, size = 0x1000, scoped, tag = 'scratch operand']
  #allocation3 [shape = 'f32[1,1]{1,0:T(1,128)S(1)}', space=vmem, size = 0x200, scoped, tag = 'scoped memory for discriminator_forward.9']
  %s0 = inlined_call_operand.vmem [shape: bf16[8,1024], index: 0, kind: input, shape index: {}]
  %s1 = inlined_call_operand.vmem [shape: bf16[1024,1], index: 1, kind: input, shape index: {}]
  %s2 = inlined_call_operand.<no memory space> [shape: f32[1,1], index: 2, kind: input, shape index: {}]
  %s3 = inlined_call_operand.vmem [shape: f32[8,1], index: 3, kind: output, shape index: {}]
  %s4 = sld [smem:[#allocation0]]
  $region30: #{discriminator_forward.9} parent=0
    _
  %s6 = ssub.s32 1, %s4
  %s7 = scalar_select 0, %s6, %s4
  %v8 = vstv %s2
  %9 = vst [vmem:[#allocation3] sm:$0x1] %v8
  // Predicated region
  $region2: #{discriminator_forward.9} parent=0 // pred_check
    _
  $region3: #{discriminator_forward.9} parent=0 // pred_check_branch
    %11 = sbr.rel (0) target = $region5
  $region4: #{discriminator_forward.9} parent=0 // pred_region
    _
  $region5: #{discriminator_forward.9} parent=0 // pred_fallthru
    _
  // Predicated region
  $region6: #{discriminator_forward.9} parent=0 // pred_check
    _
  $region7: #{discriminator_forward.9} parent=0 // pred_check_branch
    %13 = sbr.rel (0) target = $region9
  $region8: #{discriminator_forward.9} parent=0 // pred_region
    _
  $region9: #{discriminator_forward.9} parent=0 // pred_fallthru
    _
  // Predicated region
  $region10: #{discriminator_forward.9} parent=0 // pred_check
    _
  $region11: #{discriminator_forward.9} parent=0 // pred_check_branch
    %15 = sbr.rel (0) target = $region13
  $region12: #{discriminator_forward.9} parent=0 // pred_region
    _
  $region13: #{discriminator_forward.9} parent=0 // pred_fallthru
    _
  %p16 = scmp.eq.s32.totalorder 0, 0
  // Predicated region
  $region14: #{discriminator_forward.9} parent=0 // pred_check
    %p17 = pneg %p16
  $region15: #{discriminator_forward.9} parent=0 // pred_check_branch
    %19 = sbr.rel (%p17) target = $region17
  $region16: #{discriminator_forward.9} parent=0 // pred_region
    %vm20 = vcmask 7168
    %21 = vst.msk [vmem:[#allocation2] sm:$0xff] %vm20, 0.0
  $region17: #{discriminator_forward.9} parent=0 // pred_fallthru
    _
  %v22 = vld [vmem:[#allocation2] sm:$0xff]
  %v23 = vld [vmem:[%s0] sm:$0xff]
  %v24 = vld [vmem:[%s0 + $0x8] sm:$0xff]
  %v25 = vld [vmem:[%s0 + $0x10] sm:$0xff]
  %v26 = vld [vmem:[%s0 + $0x18] sm:$0xff]
  %v27 = vld [vmem:[%s1] sm:$0xf]
  %v28 = vld [vmem:[%s1 + $0x4] sm:$0xf]
  %v29 = vld [vmem:[%s1 + $0x8] sm:$0xf]
  %v30 = vld [vmem:[%s1 + $0xc] sm:$0xf]
  %v31 = vld [vmem:[%s1 + $0x10] sm:$0xf]
  %v32 = vld [vmem:[%s1 + $0x14] sm:$0xf]
  %v33 = vld [vmem:[%s1 + $0x18] sm:$0xf]
  %v34 = vld [vmem:[%s1 + $0x1c] sm:$0xf]
  %v35 = vld [vmem:[%s1 + $0x20] sm:$0xf]
  %v36 = vld [vmem:[%s1 + $0x24] sm:$0xf]
  %v37 = vld [vmem:[%s1 + $0x28] sm:$0xf]
  %v38 = vld [vmem:[%s1 + $0x2c] sm:$0xf]
  %v39 = vld [vmem:[%s1 + $0x30] sm:$0xf]
  %v40 = vld [vmem:[%s1 + $0x34] sm:$0xf]
  %v41 = vld [vmem:[%s1 + $0x38] sm:$0xf]
  %v42 = vld [vmem:[%s1 + $0x3c] sm:$0xf]
  %v43 = vld [vmem:[%s1 + $0x40] sm:$0xf]
  %v44 = vld [vmem:[%s1 + $0x44] sm:$0xf]
  %v45 = vld [vmem:[%s1 + $0x48] sm:$0xf]
  %v46 = vld [vmem:[%s1 + $0x4c] sm:$0xf]
  %v47 = vld [vmem:[%s1 + $0x50] sm:$0xf]
  %v48 = vld [vmem:[%s1 + $0x54] sm:$0xf]
  %v49 = vld [vmem:[%s1 + $0x58] sm:$0xf]
  %v50 = vld [vmem:[%s1 + $0x5c] sm:$0xf]
  %v51 = vld [vmem:[%s1 + $0x60] sm:$0xf]
  %v52 = vld [vmem:[%s1 + $0x64] sm:$0xf]
  %v53 = vld [vmem:[%s1 + $0x68] sm:$0xf]
  %v54 = vld [vmem:[%s1 + $0x6c] sm:$0xf]
  %v55 = vld [vmem:[%s1 + $0x70] sm:$0xf]
  %v56 = vld [vmem:[%s1 + $0x74] sm:$0xf]
  %v57 = vld [vmem:[%s1 + $0x78] sm:$0xf]
  %v58 = vld [vmem:[%s1 + $0x7c] sm:$0xf]
  %v59 = vld [vmem:[%s1 + $0x80] sm:$0xf]
  %v60 = vld [vmem:[%s1 + $0x84] sm:$0xf]
  %v61 = vld [vmem:[%s1 + $0x88] sm:$0xf]
  %v62 = vld [vmem:[%s1 + $0x8c] sm:$0xf]
  %v63 = vld [vmem:[%s1 + $0x90] sm:$0xf]
  %v64 = vld [vmem:[%s1 + $0x94] sm:$0xf]
  %v65 = vld [vmem:[%s1 + $0x98] sm:$0xf]
  %v66 = vld [vmem:[%s1 + $0x9c] sm:$0xf]
  %v67 = vld [vmem:[%s1 + $0xa0] sm:$0xf]
  %v68 = vld [vmem:[%s1 + $0xa4] sm:$0xf]
  %v69 = vld [vmem:[%s1 + $0xa8] sm:$0xf]
  %v70 = vld [vmem:[%s1 + $0xac] sm:$0xf]
  %v71 = vld [vmem:[%s1 + $0xb0] sm:$0xf]
  %v72 = vld [vmem:[%s1 + $0xb4] sm:$0xf]
  %v73 = vld [vmem:[%s1 + $0xb8] sm:$0xf]
  %v74 = vld [vmem:[%s1 + $0xbc] sm:$0xf]
  %v75 = vld [vmem:[%s1 + $0xc0] sm:$0xf]
  %v76 = vld [vmem:[%s1 + $0xc4] sm:$0xf]
  %v77 = vld [vmem:[%s1 + $0xc8] sm:$0xf]
  %v78 = vld [vmem:[%s1 + $0xcc] sm:$0xf]
  %v79 = vld [vmem:[%s1 + $0xd0] sm:$0xf]
  %v80 = vld [vmem:[%s1 + $0xd4] sm:$0xf]
  %v81 = vld [vmem:[%s1 + $0xd8] sm:$0xf]
  %v82 = vld [vmem:[%s1 + $0xdc] sm:$0xf]
  %v83 = vld [vmem:[%s1 + $0xe0] sm:$0xf]
  %v84 = vld [vmem:[%s1 + $0xe4] sm:$0xf]
  %v85 = vld [vmem:[%s1 + $0xe8] sm:$0xf]
  %v86 = vld [vmem:[%s1 + $0xec] sm:$0xf]
  %v87 = vld [vmem:[%s1 + $0xf0] sm:$0xf]
  %v88 = vld [vmem:[%s1 + $0xf4] sm:$0xf]
  %v89 = vld [vmem:[%s1 + $0xf8] sm:$0xf]
  %v90 = vld [vmem:[%s1 + $0xfc] sm:$0xf]
  %v91 = vld [vmem:[%s1 + $0x100] sm:$0xf]
  %v92 = vld [vmem:[%s1 + $0x104] sm:$0xf]
  %v93 = vld [vmem:[%s1 + $0x108] sm:$0xf]
  %v94 = vld [vmem:[%s1 + $0x10c] sm:$0xf]
  %v95 = vld [vmem:[%s1 + $0x110] sm:$0xf]
  %v96 = vld [vmem:[%s1 + $0x114] sm:$0xf]
  %v97 = vld [vmem:[%s1 + $0x118] sm:$0xf]
  %v98 = vld [vmem:[%s1 + $0x11c] sm:$0xf]
  %v99 = vld [vmem:[%s1 + $0x120] sm:$0xf]
  %v100 = vld [vmem:[%s1 + $0x124] sm:$0xf]
  %v101 = vld [vmem:[%s1 + $0x128] sm:$0xf]
  %v102 = vld [vmem:[%s1 + $0x12c] sm:$0xf]
  %v103 = vld [vmem:[%s1 + $0x130] sm:$0xf]
  %v104 = vld [vmem:[%s1 + $0x134] sm:$0xf]
  %v105 = vld [vmem:[%s1 + $0x138] sm:$0xf]
  %v106 = vld [vmem:[%s1 + $0x13c] sm:$0xf]
  %v107 = vld [vmem:[%s1 + $0x140] sm:$0xf]
  %v108 = vld [vmem:[%s1 + $0x144] sm:$0xf]
  %v109 = vld [vmem:[%s1 + $0x148] sm:$0xf]
  %v110 = vld [vmem:[%s1 + $0x14c] sm:$0xf]
  %v111 = vld [vmem:[%s1 + $0x150] sm:$0xf]
  %v112 = vld [vmem:[%s1 + $0x154] sm:$0xf]
  %v113 = vld [vmem:[%s1 + $0x158] sm:$0xf]
  %v114 = vld [vmem:[%s1 + $0x15c] sm:$0xf]
  %v115 = vld [vmem:[%s1 + $0x160] sm:$0xf]
  %v116 = vld [vmem:[%s1 + $0x164] sm:$0xf]
  %v117 = vld [vmem:[%s1 + $0x168] sm:$0xf]
  %v118 = vld [vmem:[%s1 + $0x16c] sm:$0xf]
  %v119 = vld [vmem:[%s1 + $0x170] sm:$0xf]
  %v120 = vld [vmem:[%s1 + $0x174] sm:$0xf]
  %v121 = vld [vmem:[%s1 + $0x178] sm:$0xf]
  %v122 = vld [vmem:[%s1 + $0x17c] sm:$0xf]
  %v123 = vld [vmem:[%s1 + $0x180] sm:$0xf]
  %v124 = vld [vmem:[%s1 + $0x184] sm:$0xf]
  %v125 = vld [vmem:[%s1 + $0x188] sm:$0xf]
  %v126 = vld [vmem:[%s1 + $0x18c] sm:$0xf]
  %v127 = vld [vmem:[%s1 + $0x190] sm:$0xf]
  %v128 = vld [vmem:[%s1 + $0x194] sm:$0xf]
  %v129 = vld [vmem:[%s1 + $0x198] sm:$0xf]
  %v130 = vld [vmem:[%s1 + $0x19c] sm:$0xf]
  %v131 = vld [vmem:[%s1 + $0x1a0] sm:$0xf]
  %v132 = vld [vmem:[%s1 + $0x1a4] sm:$0xf]
  %v133 = vld [vmem:[%s1 + $0x1a8] sm:$0xf]
  %v134 = vld [vmem:[%s1 + $0x1ac] sm:$0xf]
  %v135 = vld [vmem:[%s1 + $0x1b0] sm:$0xf]
  %v136 = vld [vmem:[%s1 + $0x1b4] sm:$0xf]
  %v137 = vld [vmem:[%s1 + $0x1b8] sm:$0xf]
  %v138 = vld [vmem:[%s1 + $0x1bc] sm:$0xf]
  %v139 = vld [vmem:[%s1 + $0x1c0] sm:$0xf]
  %v140 = vld [vmem:[%s1 + $0x1c4] sm:$0xf]
  %v141 = vld [vmem:[%s1 + $0x1c8] sm:$0xf]
  %v142 = vld [vmem:[%s1 + $0x1cc] sm:$0xf]
  %v143 = vld [vmem:[%s1 + $0x1d0] sm:$0xf]
  %v144 = vld [vmem:[%s1 + $0x1d4] sm:$0xf]
  %v145 = vld [vmem:[%s1 + $0x1d8] sm:$0xf]
  %v146 = vld [vmem:[%s1 + $0x1dc] sm:$0xf]
  %v147 = vld [vmem:[%s1 + $0x1e0] sm:$0xf]
  %v148 = vld [vmem:[%s1 + $0x1e4] sm:$0xf]
  %v149 = vld [vmem:[%s1 + $0x1e8] sm:$0xf]
  %v150 = vld [vmem:[%s1 + $0x1ec] sm:$0xf]
  %v151 = vld [vmem:[%s1 + $0x1f0] sm:$0xf]
  %v152 = vld [vmem:[%s1 + $0x1f4] sm:$0xf]
  %v153 = vld [vmem:[%s1 + $0x1f8] sm:$0xf]
  %v154 = vld [vmem:[%s1 + $0x1fc] sm:$0xf]
  %v159 = vunpack.c.l.b16 %v23
  %v160 = vunpack.c.h.b16 %v23
  %v161 = vunpack.c.l.b16 %v24
  %v162 = vunpack.c.h.b16 %v24
  %v163 = vunpack.c.l.b16 %v25
  %v164 = vunpack.c.h.b16 %v25
  %v165 = vunpack.c.l.b16 %v26
  %v166 = vunpack.c.h.b16 %v26
  %v167 = vpack.c.b16 %v159, %v159
  %v168 = vpack.c.b16 %v160, %v160
  %v169 = vpack.c.b16 %v161, %v161
  %v170 = vpack.c.b16 %v162, %v162
  %v171 = vpack.c.b16 %v163, %v163
  %v172 = vpack.c.b16 %v164, %v164
  %v173 = vpack.c.b16 %v165, %v165
  %v174 = vpack.c.b16 %v166, %v166
  %v311 = vunpack.c.l.b16 %v27
  %v312 = vunpack.c.l.b16 %v28
  %v313 = vunpack.c.l.b16 %v29
  %v314 = vunpack.c.l.b16 %v30
  %v315 = vunpack.c.l.b16 %v31
  %v316 = vunpack.c.l.b16 %v32
  %v317 = vunpack.c.l.b16 %v33
  %v318 = vunpack.c.l.b16 %v34
  %v319 = vunpack.c.l.b16 %v35
  %v320 = vunpack.c.l.b16 %v36
  %v321 = vunpack.c.l.b16 %v37
  %v322 = vunpack.c.l.b16 %v38
  %v323 = vunpack.c.l.b16 %v39
  %v324 = vunpack.c.l.b16 %v40
  %v325 = vunpack.c.l.b16 %v41
  %v326 = vunpack.c.l.b16 %v42
  %v327 = vunpack.c.l.b16 %v43
  %v328 = vunpack.c.l.b16 %v44
  %v329 = vunpack.c.l.b16 %v45
  %v330 = vunpack.c.l.b16 %v46
  %v331 = vunpack.c.l.b16 %v47
  %v332 = vunpack.c.l.b16 %v48
  %v333 = vunpack.c.l.b16 %v49
  %v334 = vunpack.c.l.b16 %v50
  %v335 = vunpack.c.l.b16 %v51
  %v336 = vunpack.c.l.b16 %v52
  %v337 = vunpack.c.l.b16 %v53
  %v338 = vunpack.c.l.b16 %v54
  %v339 = vunpack.c.l.b16 %v55
  %v340 = vunpack.c.l.b16 %v56
  %v341 = vunpack.c.l.b16 %v57
  %v342 = vunpack.c.l.b16 %v58
  %v343 = vunpack.c.l.b16 %v59
  %v344 = vunpack.c.l.b16 %v60
  %v345 = vunpack.c.l.b16 %v61
  %v346 = vunpack.c.l.b16 %v62
  %v347 = vunpack.c.l.b16 %v63
  %v348 = vunpack.c.l.b16 %v64
  %v349 = vunpack.c.l.b16 %v65
  %v350 = vunpack.c.l.b16 %v66
  %v351 = vunpack.c.l.b16 %v67
  %v352 = vunpack.c.l.b16 %v68
  %v353 = vunpack.c.l.b16 %v69
  %v354 = vunpack.c.l.b16 %v70
  %v355 = vunpack.c.l.b16 %v71
  %v356 = vunpack.c.l.b16 %v72
  %v357 = vunpack.c.l.b16 %v73
  %v358 = vunpack.c.l.b16 %v74
  %v359 = vunpack.c.l.b16 %v75
  %v360 = vunpack.c.l.b16 %v76
  %v361 = vunpack.c.l.b16 %v77
  %v362 = vunpack.c.l.b16 %v78
  %v363 = vunpack.c.l.b16 %v79
  %v364 = vunpack.c.l.b16 %v80
  %v365 = vunpack.c.l.b16 %v81
  %v366 = vunpack.c.l.b16 %v82
  %v367 = vunpack.c.l.b16 %v83
  %v368 = vunpack.c.l.b16 %v84
  %v369 = vunpack.c.l.b16 %v85
  %v370 = vunpack.c.l.b16 %v86
  %v371 = vunpack.c.l.b16 %v87
  %v372 = vunpack.c.l.b16 %v88
  %v373 = vunpack.c.l.b16 %v89
  %v374 = vunpack.c.l.b16 %v90
  %v375 = vunpack.c.l.b16 %v91
  %v376 = vunpack.c.l.b16 %v92
  %v377 = vunpack.c.l.b16 %v93
  %v378 = vunpack.c.l.b16 %v94
  %v379 = vunpack.c.l.b16 %v95
  %v380 = vunpack.c.l.b16 %v96
  %v381 = vunpack.c.l.b16 %v97
  %v382 = vunpack.c.l.b16 %v98
  %v383 = vunpack.c.l.b16 %v99
  %v384 = vunpack.c.l.b16 %v100
  %v385 = vunpack.c.l.b16 %v101
  %v386 = vunpack.c.l.b16 %v102
  %v387 = vunpack.c.l.b16 %v103
  %v388 = vunpack.c.l.b16 %v104
  %v389 = vunpack.c.l.b16 %v105
  %v390 = vunpack.c.l.b16 %v106
  %v391 = vunpack.c.l.b16 %v107
  %v392 = vunpack.c.l.b16 %v108
  %v393 = vunpack.c.l.b16 %v109
  %v394 = vunpack.c.l.b16 %v110
  %v395 = vunpack.c.l.b16 %v111
  %v396 = vunpack.c.l.b16 %v112
  %v397 = vunpack.c.l.b16 %v113
  %v398 = vunpack.c.l.b16 %v114
  %v399 = vunpack.c.l.b16 %v115
  %v400 = vunpack.c.l.b16 %v116
  %v401 = vunpack.c.l.b16 %v117
  %v402 = vunpack.c.l.b16 %v118
  %v403 = vunpack.c.l.b16 %v119
  %v404 = vunpack.c.l.b16 %v120
  %v405 = vunpack.c.l.b16 %v121
  %v406 = vunpack.c.l.b16 %v122
  %v407 = vunpack.c.l.b16 %v123
  %v408 = vunpack.c.l.b16 %v124
  %v409 = vunpack.c.l.b16 %v125
  %v410 = vunpack.c.l.b16 %v126
  %v411 = vunpack.c.l.b16 %v127
  %v412 = vunpack.c.l.b16 %v128
  %v413 = vunpack.c.l.b16 %v129
  %v414 = vunpack.c.l.b16 %v130
  %v415 = vunpack.c.l.b16 %v131
  %v416 = vunpack.c.l.b16 %v132
  %v417 = vunpack.c.l.b16 %v133
  %v418 = vunpack.c.l.b16 %v134
  %v419 = vunpack.c.l.b16 %v135
  %v420 = vunpack.c.l.b16 %v136
  %v421 = vunpack.c.l.b16 %v137
  %v422 = vunpack.c.l.b16 %v138
  %v423 = vunpack.c.l.b16 %v139
  %v424 = vunpack.c.l.b16 %v140
  %v425 = vunpack.c.l.b16 %v141
  %v426 = vunpack.c.l.b16 %v142
  %v427 = vunpack.c.l.b16 %v143
  %v428 = vunpack.c.l.b16 %v144
  %v429 = vunpack.c.l.b16 %v145
  %v430 = vunpack.c.l.b16 %v146
  %v431 = vunpack.c.l.b16 %v147
  %v432 = vunpack.c.l.b16 %v148
  %v433 = vunpack.c.l.b16 %v149
  %v434 = vunpack.c.l.b16 %v150
  %v435 = vunpack.c.l.b16 %v151
  %v436 = vunpack.c.l.b16 %v152
  %v437 = vunpack.c.l.b16 %v153
  %v438 = vunpack.c.l.b16 %v154
  %v439 = vpack.c.b16 %v312, %v311
  %v440 = vpack.c.b16 %v314, %v313
  %v441 = vpack.c.b16 %v316, %v315
  %v442 = vpack.c.b16 %v318, %v317
  %v443 = vpack.c.b16 %v320, %v319
  %v444 = vpack.c.b16 %v322, %v321
  %v445 = vpack.c.b16 %v324, %v323
  %v446 = vpack.c.b16 %v326, %v325
  %v447 = vpack.c.b16 %v328, %v327
  %v448 = vpack.c.b16 %v330, %v329
  %v449 = vpack.c.b16 %v332, %v331
  %v450 = vpack.c.b16 %v334, %v333
  %v451 = vpack.c.b16 %v336, %v335
  %v452 = vpack.c.b16 %v338, %v337
  %v453 = vpack.c.b16 %v340, %v339
  %v454 = vpack.c.b16 %v342, %v341
  %v455 = vpack.c.b16 %v344, %v343
  %v456 = vpack.c.b16 %v346, %v345
  %v457 = vpack.c.b16 %v348, %v347
  %v458 = vpack.c.b16 %v350, %v349
  %v459 = vpack.c.b16 %v352, %v351
  %v460 = vpack.c.b16 %v354, %v353
  %v461 = vpack.c.b16 %v356, %v355
  %v462 = vpack.c.b16 %v358, %v357
  %v463 = vpack.c.b16 %v360, %v359
  %v464 = vpack.c.b16 %v362, %v361
  %v465 = vpack.c.b16 %v364, %v363
  %v466 = vpack.c.b16 %v366, %v365
  %v467 = vpack.c.b16 %v368, %v367
  %v468 = vpack.c.b16 %v370, %v369
  %v469 = vpack.c.b16 %v372, %v371
  %v470 = vpack.c.b16 %v374, %v373
  %v471 = vpack.c.b16 %v376, %v375
  %v472 = vpack.c.b16 %v378, %v377
  %v473 = vpack.c.b16 %v380, %v379
  %v474 = vpack.c.b16 %v382, %v381
  %v475 = vpack.c.b16 %v384, %v383
  %v476 = vpack.c.b16 %v386, %v385
  %v477 = vpack.c.b16 %v388, %v387
  %v478 = vpack.c.b16 %v390, %v389
  %v479 = vpack.c.b16 %v392, %v391
  %v480 = vpack.c.b16 %v394, %v393
  %v481 = vpack.c.b16 %v396, %v395
  %v482 = vpack.c.b16 %v398, %v397
  %v483 = vpack.c.b16 %v400, %v399
  %v484 = vpack.c.b16 %v402, %v401
  %v485 = vpack.c.b16 %v404, %v403
  %v486 = vpack.c.b16 %v406, %v405
  %v487 = vpack.c.b16 %v408, %v407
  %v488 = vpack.c.b16 %v410, %v409
  %v489 = vpack.c.b16 %v412, %v411
  %v490 = vpack.c.b16 %v414, %v413
  %v491 = vpack.c.b16 %v416, %v415
  %v492 = vpack.c.b16 %v418, %v417
  %v493 = vpack.c.b16 %v420, %v419
  %v494 = vpack.c.b16 %v422, %v421
  %v495 = vpack.c.b16 %v424, %v423
  %v496 = vpack.c.b16 %v426, %v425
  %v497 = vpack.c.b16 %v428, %v427
  %v498 = vpack.c.b16 %v430, %v429
  %v499 = vpack.c.b16 %v432, %v431
  %v500 = vpack.c.b16 %v434, %v433
  %v501 = vpack.c.b16 %v436, %v435
  %v502 = vpack.c.b16 %v438, %v437
  %567 = vmatpush.bf16.msra.mxu0 %v446
  %568 = vmatpush.bf16.msra.mxu0 %v445
  %569 = vmatpush.bf16.msra.mxu0 %v444
  %570 = vmatpush.bf16.msra.mxu0 %v443
  %571 = vmatpush.bf16.msra.mxu0 %v442
  %572 = vmatpush.bf16.msra.mxu0 %v441
  %573 = vmatpush.bf16.msra.mxu0 %v440
  %574 = vmatpush.bf16.msra.mxu0 %v439
  %575 = vmatmul.bf16.gmra.mxu0 %v167
  %v576 = vpop.f32.mrf.mxu0
  %v577 = vadd.f32 0.0, %v576
  %v578 = vpop.f32.mrf.mxu0
  %579 = vdwg.mxu0
  %580 = vmatpush.bf16.msra.mxu0 %v454
  %581 = vmatpush.bf16.msra.mxu0 %v453
  %582 = vmatpush.bf16.msra.mxu0 %v452
  %583 = vmatpush.bf16.msra.mxu0 %v451
  %584 = vmatpush.bf16.msra.mxu0 %v450
  %585 = vmatpush.bf16.msra.mxu0 %v449
  %586 = vmatpush.bf16.msra.mxu0 %v448
  %587 = vmatpush.bf16.msra.mxu0 %v447
  %588 = vmatmul.bf16.gmra.mxu0 %v168
  %v589 = vpop.f32.mrf.mxu0
  %v590 = vadd.f32 %v577, %v589
  %v591 = vpop.f32.mrf.mxu0
  %592 = vdwg.mxu0
  %593 = vmatpush.bf16.msra.mxu0 %v462
  %594 = vmatpush.bf16.msra.mxu0 %v461
  %595 = vmatpush.bf16.msra.mxu0 %v460
  %596 = vmatpush.bf16.msra.mxu0 %v459
  %597 = vmatpush.bf16.msra.mxu0 %v458
  %598 = vmatpush.bf16.msra.mxu0 %v457
  %599 = vmatpush.bf16.msra.mxu0 %v456
  %600 = vmatpush.bf16.msra.mxu0 %v455
  %601 = vmatmul.bf16.gmra.mxu0 %v169
  %v602 = vpop.f32.mrf.mxu0
  %v603 = vadd.f32 %v590, %v602
  %v604 = vpop.f32.mrf.mxu0
  %605 = vdwg.mxu0
  %606 = vmatpush.bf16.msra.mxu0 %v470
  %607 = vmatpush.bf16.msra.mxu0 %v469
  %608 = vmatpush.bf16.msra.mxu0 %v468
  %609 = vmatpush.bf16.msra.mxu0 %v467
  %610 = vmatpush.bf16.msra.mxu0 %v466
  %611 = vmatpush.bf16.msra.mxu0 %v465
  %612 = vmatpush.bf16.msra.mxu0 %v464
  %613 = vmatpush.bf16.msra.mxu0 %v463
  %614 = vmatmul.bf16.gmra.mxu0 %v170
  %v615 = vpop.f32.mrf.mxu0
  %v616 = vadd.f32 %v603, %v615
  %v617 = vpop.f32.mrf.mxu0
  %618 = vdwg.mxu0
  %619 = vmatpush.bf16.msra.mxu0 %v478
  %620 = vmatpush.bf16.msra.mxu0 %v477
  %621 = vmatpush.bf16.msra.mxu0 %v476
  %622 = vmatpush.bf16.msra.mxu0 %v475
  %623 = vmatpush.bf16.msra.mxu0 %v474
  %624 = vmatpush.bf16.msra.mxu0 %v473
  %625 = vmatpush.bf16.msra.mxu0 %v472
  %626 = vmatpush.bf16.msra.mxu0 %v471
  %627 = vmatmul.bf16.gmra.mxu0 %v171
  %v628 = vpop.f32.mrf.mxu0
  %v629 = vadd.f32 %v616, %v628
  %v630 = vpop.f32.mrf.mxu0
  %631 = vdwg.mxu0
  %632 = vmatpush.bf16.msra.mxu0 %v486
  %633 = vmatpush.bf16.msra.mxu0 %v485
  %634 = vmatpush.bf16.msra.mxu0 %v484
  %635 = vmatpush.bf16.msra.mxu0 %v483
  %636 = vmatpush.bf16.msra.mxu0 %v482
  %637 = vmatpush.bf16.msra.mxu0 %v481
  %638 = vmatpush.bf16.msra.mxu0 %v480
  %639 = vmatpush.bf16.msra.mxu0 %v479
  %640 = vmatmul.bf16.gmra.mxu0 %v172
  %v641 = vpop.f32.mrf.mxu0
  %v642 = vadd.f32 %v629, %v641
  %v643 = vpop.f32.mrf.mxu0
  %644 = vdwg.mxu0
  %645 = vmatpush.bf16.msra.mxu0 %v494
  %646 = vmatpush.bf16.msra.mxu0 %v493
  %647 = vmatpush.bf16.msra.mxu0 %v492
  %648 = vmatpush.bf16.msra.mxu0 %v491
  %649 = vmatpush.bf16.msra.mxu0 %v490
  %650 = vmatpush.bf16.msra.mxu0 %v489
  %651 = vmatpush.bf16.msra.mxu0 %v488
  %652 = vmatpush.bf16.msra.mxu0 %v487
  %653 = vmatmul.bf16.gmra.mxu0 %v173
  %v654 = vpop.f32.mrf.mxu0
  %v655 = vadd.f32 %v642, %v654
  %v656 = vpop.f32.mrf.mxu0
  %657 = vdwg.mxu0
  %658 = vmatpush.bf16.msra.mxu0 %v502
  %659 = vmatpush.bf16.msra.mxu0 %v501
  %660 = vmatpush.bf16.msra.mxu0 %v500
  %661 = vmatpush.bf16.msra.mxu0 %v499
  %662 = vmatpush.bf16.msra.mxu0 %v498
  %663 = vmatpush.bf16.msra.mxu0 %v497
  %664 = vmatpush.bf16.msra.mxu0 %v496
  %665 = vmatpush.bf16.msra.mxu0 %v495
  %666 = vmatmul.bf16.gmra.mxu0 %v174
  %v667 = vpop.f32.mrf.mxu0
  %v668 = vadd.f32 %v655, %v667
  %v669 = vpop.f32.mrf.mxu0
  %670 = vdwg.mxu0
  %v671 = vadd.f32 %v22, %v668
  %vm672 = vcmask 7168
  %673 = vst.msk [vmem:[#allocation2] sm:$0xff] %vm672, %v671
  // Predicated region
  $region18: #{discriminator_forward.9} parent=0 // pred_check
    %p674 = pneg %p16
  $region19: #{discriminator_forward.9} parent=0 // pred_check_branch
    %676 = sbr.rel (%p674) target = $region21
  $region20: #{discriminator_forward.9} parent=0 // pred_region
    %v677 = vld [vmem:[#allocation2] sm:$0xff]
    %v678 = vld [vmem:[#allocation3] sm:$0x1]
    %v680 = vperm.slane %v678, 0
    %v682 = vadd.f32 %v677, %v680
    %683 = vst.msk [vmem:[%s3] sm:$0xff] %vm672, %v682
  $region21: #{discriminator_forward.9} parent=0 // pred_fallthru
    _
  // Predicated region
  $region22: #{discriminator_forward.9} parent=0 // pred_check
    _
  $region23: #{discriminator_forward.9} parent=0 // pred_check_branch
    %685 = sbr.rel (0) target = $region25
  $region24: #{discriminator_forward.9} parent=0 // pred_region
    _
  $region25: #{discriminator_forward.9} parent=0 // pred_fallthru
    _
  // Predicated region
  $region26: #{discriminator_forward.9} parent=0 // pred_check
    _
  $region27: #{discriminator_forward.9} parent=0 // pred_check_branch
    %687 = sbr.rel (0) target = $region29
  $region28: #{discriminator_forward.9} parent=0 // pred_region
    _
  $region29: #{discriminator_forward.9} parent=0 // pred_fallthru
    _

</llo_original>
